<compile_context>
chip_gen: v5e
topology: v5e:2x2
jax: 0.10.0
libtpu: 0.0.40
codegen_flags: <defaults>
</compile_context>

<pallas_src>
import functools

import jax
import jax.numpy as jnp
from jax import lax
from jax.experimental import pallas as pl
from jax.experimental.pallas import tpu as pltpu


# ----------------------------------------------------------------------------
# helpers
# ----------------------------------------------------------------------------
def _round_up(x, m):
    return (x + m - 1) // m * m


def _pad2(x, mp, np_):
    m, n = x.shape
    if m == mp and n == np_:
        return x
    return jnp.pad(x, ((0, mp - m), (0, np_ - n)))


# ----------------------------------------------------------------------------
# Tiled matmul + bias (+ optional ReLU): y = x @ w + b
# ----------------------------------------------------------------------------
def matmul_kernel(x_ref, w_ref, b_ref, o_ref, acc_ref, *, relu):
    @pl.when(pl.program_id(2) == 0)
    def _():
        acc_ref[...] = jnp.zeros_like(acc_ref)

    acc_ref[...] += jnp.dot(x_ref[...], w_ref[...],
                            preferred_element_type=jnp.float32)

    @pl.when(pl.program_id(2) == pl.num_programs(2) - 1)
    def _():
        y = acc_ref[...] + b_ref[...]
        if relu:
            y = jnp.maximum(y, 0.0)
        o_ref[...] = y.astype(o_ref.dtype)


def pallas_linear(x, w, b, relu=False, tm=512, tn=512, tk=512):
    """Tiled GEMM, bf16 operands / f32 accumulation, output f32, sliced to (M, N)."""
    M, K = x.shape
    K2, N = w.shape
    assert K == K2
    tm = min(tm, _round_up(M, 8))
    tn = min(tn, _round_up(N, 128))
    tk = min(tk, _round_up(K, 128))
    Mp, Kp, Np = _round_up(M, tm), _round_up(K, tk), _round_up(N, tn)

    xb = _pad2(x, Mp, Kp).astype(jnp.bfloat16)
    wb = _pad2(w, Kp, Np).astype(jnp.bfloat16)
    bb = _pad2(b, 1, Np).astype(jnp.float32)

    out = pl.pallas_call(
        functools.partial(matmul_kernel, relu=relu),
        out_shape=jax.ShapeDtypeStruct((Mp, Np), jnp.float32),
        grid_spec=pltpu.PrefetchScalarGridSpec(
            num_scalar_prefetch=0,
            grid=(Mp // tm, Np // tn, Kp // tk),
            in_specs=[
                pl.BlockSpec((tm, tk), lambda i, j, k: (i, k)),
                pl.BlockSpec((tk, tn), lambda i, j, k: (k, j)),
                pl.BlockSpec((1, tn), lambda i, j, k: (0, j)),
            ],
            out_specs=pl.BlockSpec((tm, tn), lambda i, j, k: (i, j)),
            scratch_shapes=[pltpu.VMEM((tm, tn), jnp.float32)],
        ),
        compiler_params=pltpu.CompilerParams(
            dimension_semantics=("parallel", "parallel", "arbitrary")),
    )(xb, wb, bb)
    return out[:M, :N]


# ----------------------------------------------------------------------------
# Fused CNN-encoder stand-in: conv GEMM + ReLU + global-average-pool + cnn.fc
# ----------------------------------------------------------------------------
def encoder_kernel(p_ref, cw_ref, cb_ref, fw_ref, fb_ref, o_ref, pool_scr, *, inv_hw):
    s = pl.program_id(0)

    @pl.when(s == 0)
    def _():
        pool_scr[...] = jnp.zeros_like(pool_scr)

    Bb, hwt, k9 = p_ref.shape
    x = p_ref[...].reshape(Bb * hwt, k9)                       # bf16 patches
    y = jnp.dot(x, cw_ref[...], preferred_element_type=jnp.float32) + cb_ref[...]
    y = jnp.maximum(y, 0.0)                                    # (Bb*hwt, Cc) f32
    pool_scr[...] += y.reshape(Bb, hwt, -1).sum(axis=1)        # (Bb, Cc)

    @pl.when(s == pl.num_programs(0) - 1)
    def _():
        pooled = pool_scr[...] * inv_hw
        feat = jnp.dot(pooled.astype(fw_ref.dtype), fw_ref[...],
                       preferred_element_type=jnp.float32) + fb_ref[...]
        o_ref[...] = feat.astype(o_ref.dtype)


def pallas_encoder(patches, conv_w, conv_b, fc_w, fc_b, hw_tile=128):
    B, HW, K9 = patches.shape
    Cc = conv_w.shape[1]
    E = fc_w.shape[1]
    hw_t = min(hw_tile, HW)
    assert HW % hw_t == 0
    n_hw = HW // hw_t
    return pl.pallas_call(
        functools.partial(encoder_kernel, inv_hw=1.0 / HW),
        out_shape=jax.ShapeDtypeStruct((B, E), jnp.float32),
        grid_spec=pltpu.PrefetchScalarGridSpec(
            num_scalar_prefetch=0,
            grid=(n_hw,),
            in_specs=[
                pl.BlockSpec((B, hw_t, K9), lambda s: (0, s, 0)),
                pl.BlockSpec((K9, Cc), lambda s: (0, 0)),
                pl.BlockSpec((1, Cc), lambda s: (0, 0)),
                pl.BlockSpec((Cc, E), lambda s: (0, 0)),
                pl.BlockSpec((1, E), lambda s: (0, 0)),
            ],
            out_specs=pl.BlockSpec((B, E), lambda s: (0, 0)),
            scratch_shapes=[pltpu.VMEM((B, Cc), jnp.float32)],
        ),
        compiler_params=pltpu.CompilerParams(dimension_semantics=("arbitrary",)),
    )(patches, conv_w, conv_b, fc_w, fc_b)


# ----------------------------------------------------------------------------
# LSTM recurrence: gates_x (precomputed X@W_ih + b) + h@W_hh per step, chunked over T
# ----------------------------------------------------------------------------
def lstm_kernel(gx_ref, whh_ref, o_ref, h_scr, c_scr, *, hidden, chunk):
    @pl.when(pl.program_id(0) == 0)
    def _():
        h_scr[...] = jnp.zeros_like(h_scr)
        c_scr[...] = jnp.zeros_like(c_scr)

    w_hh = whh_ref[...]                                        # (H, 4H) bf16, resident

    def step(s, carry):
        h, c = carry
        pre = gx_ref[s] + jnp.dot(h.astype(w_hh.dtype), w_hh,
                                  preferred_element_type=jnp.float32)   # (B, 4H)
        # PyTorch gate order: input, forget, cell(g), output.
        i = jax.nn.sigmoid(pre[:, 0 * hidden:1 * hidden])
        f = jax.nn.sigmoid(pre[:, 1 * hidden:2 * hidden])
        g = jnp.tanh(pre[:, 2 * hidden:3 * hidden])
        o = jax.nn.sigmoid(pre[:, 3 * hidden:4 * hidden])
        c_new = f * c + i * g
        h_new = o * jnp.tanh(c_new)
        o_ref[s] = h_new.astype(o_ref.dtype)
        return h_new, c_new

    h_f, c_f = lax.fori_loop(0, chunk, step, (h_scr[...], c_scr[...]), unroll=True)
    h_scr[...] = h_f
    c_scr[...] = c_f


def pallas_lstm(gates_x_tm, w_hh, hidden, chunk=8):
    """gates_x_tm: (T, Bp, 4H) f32; returns h sequence (T, Bp, H) f32, time-major."""
    T, Bp, G4 = gates_x_tm.shape
    Tc = min(chunk, T)
    Tp = _round_up(T, Tc)
    if Tp != T:
        gates_x_tm = jnp.pad(gates_x_tm, ((0, Tp - T), (0, 0), (0, 0)))
    out = pl.pallas_call(
        functools.partial(lstm_kernel, hidden=hidden, chunk=Tc),
        out_shape=jax.ShapeDtypeStruct((Tp, Bp, hidden), jnp.float32),
        grid_spec=pltpu.PrefetchScalarGridSpec(
            num_scalar_prefetch=0,
            grid=(Tp // Tc,),
            in_specs=[
                pl.BlockSpec((Tc, Bp, G4), lambda c: (c, 0, 0)),   # precomputed gates
                pl.BlockSpec((hidden, G4), lambda c: (0, 0)),      # W_hh (resident)
            ],
            out_specs=pl.BlockSpec((Tc, Bp, hidden), lambda c: (c, 0, 0)),
            scratch_shapes=[pltpu.VMEM((Bp, hidden), jnp.float32),   # h
                            pltpu.VMEM((Bp, hidden), jnp.float32)],  # c
        ),
        compiler_params=pltpu.CompilerParams(dimension_semantics=("arbitrary",)),
    )(gates_x_tm, w_hh.astype(jnp.bfloat16))
    return out[:T]


# ----------------------------------------------------------------------------
# Glue (im2col / gathers / forward pass)
# ----------------------------------------------------------------------------
def im2col_3x3(x_nhwc):
    """3x3, stride 1, padding 1 patches -> (B, H*W, 9*Cin)."""
    B, H, W, C = x_nhwc.shape
    xp = jnp.pad(x_nhwc, ((0, 0), (1, 1), (1, 1), (0, 0)))
    patches = [xp[:, dy:dy + H, dx:dx + W, :] for dy in range(3) for dx in range(3)]
    patches = jnp.concatenate(patches, axis=-1)                 # (B, H, W, 9C)
    return patches.reshape(B, H * W, 9 * C)


def captioning_forward(params, images_nchw, captions):
    B = images_nchw.shape[0]
    T = captions.shape[1]
    E = params["embed"].shape[1]
    Hd = params["w_hh"].shape[0]
    V = params["fc_w"].shape[1]

    # --- CNN encoder stand-in: fused conv+ReLU+GAP+cnn.fc, one kernel ---
    x_nhwc = jnp.transpose(images_nchw, (0, 2, 3, 1)).astype(jnp.bfloat16)
    patches = im2col_3x3(x_nhwc)                                        # (B, HW, 9*Cin)
    features = pallas_encoder(patches, params["conv_w"], params["conv_b"],
                              params["cnn_fc_w"], params["cnn_fc_b"])   # (B, E) f32

    # --- embedding gather directly in time-major layout (no transposes later) ---
    emb_tm = params["embed"][captions.T]                                # (T, B, E)

    # inputs = cat(features.unsqueeze(1), embeddings[:, :-1]) -> time-major (T, B, E)
    inputs_tm = jnp.concatenate([features[None], emb_tm[:-1]], axis=0)

    # pad batch (sublane) dim to a multiple of 8 for the recurrence
    Bp = max(8, _round_up(B, 8))
    if Bp != B:
        inputs_tm = jnp.pad(inputs_tm, ((0, 0), (0, Bp - B), (0, 0)))

    # --- hoisted input projection: one GEMM over all timesteps, all 4 gates ---
    gates_x = pallas_linear(inputs_tm.reshape(T * Bp, E),
                            params["w_ih"], params["lstm_b"])           # (T*Bp, 4H)
    gates_x = gates_x.reshape(T, Bp, 4 * Hd)

    # --- recurrence: only h @ W_hh + gate nonlinearities per step ---
    h_tm = pallas_lstm(gates_x, params["w_hh"], Hd)                     # (T, Bp, H)

    # --- vocab projection (transpose the small H-wide tensor, not the V-wide one) ---
    lstm_out = jnp.transpose(h_tm[:, :B, :], (1, 0, 2))                 # (B, T, H)
    logits = pallas_linear(lstm_out.reshape(B * T, Hd),
                           params["fc_w"], params["fc_b"])              # (B*T, V)
    return logits.reshape(B, T, V)


def init_params(key, *, vocab_size, embed_size, hidden_size, cin, conv_ch):
    ks = jax.random.split(key, 10)
    s = 0.05
    f32 = jnp.float32
    bf16 = jnp.bfloat16
    return {
        # encoder stand-in (3x3 conv as GEMM over im2col patches)
        "conv_w":   (s * jax.random.normal(ks[0], (9 * cin, conv_ch), f32)).astype(bf16),
        "conv_b":   s * jax.random.normal(ks[1], (1, conv_ch), f32),
        "cnn_fc_w": (s * jax.random.normal(ks[2], (conv_ch, embed_size), f32)).astype(bf16),
        "cnn_fc_b": s * jax.random.normal(ks[3], (1, embed_size), f32),
        "embed":    s * jax.random.normal(ks[4], (vocab_size, embed_size), f32),
        # fused-gate LSTM weights, columns ordered [i | f | g | o] (PyTorch order)
        "w_ih":     s * jax.random.normal(ks[5], (embed_size, 4 * hidden_size), f32),
        "w_hh":     s * jax.random.normal(ks[6], (hidden_size, 4 * hidden_size), f32),
        "lstm_b":   s * jax.random.normal(ks[7], (1, 4 * hidden_size), f32),  # b_ih + b_hh
        "fc_w":     s * jax.random.normal(ks[8], (hidden_size, vocab_size), f32),
        "fc_b":     s * jax.random.normal(ks[9], (1, vocab_size), f32),
    }


if __name__ == "__main__":
    # small but lane/sublane-friendly shapes (embed/hidden/vocab/conv_ch multiples of 128)
    B, Cin, Hs, Ws = 2, 3, 16, 16
    T = 8
    vocab_size, embed_size, hidden_size, conv_ch = 256, 128, 128, 128

    key = jax.random.PRNGKey(0)
    k_img, k_cap, k_par = jax.random.split(key, 3)

    images = jax.random.normal(k_img, (B, Cin, Hs, Ws), jnp.float32)       # NCHW
    captions = jax.random.randint(k_cap, (B, T), 0, vocab_size, jnp.int32)
    params = init_params(k_par, vocab_size=vocab_size, embed_size=embed_size,
                         hidden_size=hidden_size, cin=Cin, conv_ch=conv_ch)

    fwd = jax.jit(captioning_forward)
    out = fwd(params, images, captions)
    out = jax.block_until_ready(out)
    assert out.shape == (B, T, vocab_size), out.shape
    assert bool(jnp.all(jnp.isfinite(out)))
    print("KERNEL_OK")
</pallas_src>

<mosaic_0001>
module attributes {stable_mosaic.version = 11 : i64} {
  func.func @encoder_kernel(%arg0: i32, %arg1: memref<2x128x27xbf16, #tpu.memory_space<vmem>>, %arg2: memref<27x128xbf16, #tpu.memory_space<vmem>>, %arg3: memref<1x128xf32, #tpu.memory_space<vmem>>, %arg4: memref<128x128xbf16, #tpu.memory_space<vmem>>, %arg5: memref<1x128xf32, #tpu.memory_space<vmem>>, %arg6: memref<2x128xf32, #tpu.memory_space<vmem>>, %arg7: memref<2x128xf32, #tpu.memory_space<vmem>>) attributes {dimension_semantics = [#tpu.dimension_semantics<arbitrary>], iteration_bounds = array<i64: 2>, scalar_prefetch = 0 : i64, scratch_operands = 1 : i64, tpu.core_type = #tpu.core_type<tc>, window_params = [{transform_indices = @transform_0, window_bounds = array<i64: 2, 128, 27>}, {pipeline_mode = #tpu.pipeline_mode<synchronous>, transform_indices = @transform_1, window_bounds = array<i64: 27, 128>}, {pipeline_mode = #tpu.pipeline_mode<synchronous>, transform_indices = @transform_2, window_bounds = array<i64: 1, 128>}, {pipeline_mode = #tpu.pipeline_mode<synchronous>, transform_indices = @transform_3, window_bounds = array<i64: 128, 128>}, {pipeline_mode = #tpu.pipeline_mode<synchronous>, transform_indices = @transform_4, window_bounds = array<i64: 1, 128>}, {pipeline_mode = #tpu.pipeline_mode<synchronous>, transform_indices = @transform_5, window_bounds = array<i64: 2, 128>}]} {
    %c0_i32 = arith.constant 0 : i32
    %0 = arith.cmpi eq, %arg0, %c0_i32 : i32
    %1 = arith.extui %0 : i1 to i32
    %c0_i32_0 = arith.constant 0 : i32
    %2 = arith.cmpi ne, %1, %c0_i32_0 : i32
    scf.if %2 {
      %cst_14 = arith.constant 0.000000e+00 : f32
      %20 = vector.broadcast %cst_14 : f32 to vector<2x128xf32>
      %c0_15 = arith.constant 0 : index
      %c0_16 = arith.constant 0 : index
      %21 = vector.load %arg7[%c0_15, %c0_16] : memref<2x128xf32, #tpu.memory_space<vmem>>, vector<2x128xf32>
      tpu.vector_store %arg7[%c0_15, %c0_16], %20 {strides = array<i32>} : memref<2x128xf32, #tpu.memory_space<vmem>>, vector<2x128xf32>,
    } else {
    }
    %c0 = arith.constant 0 : index
    %c0_1 = arith.constant 0 : index
    %c0_2 = arith.constant 0 : index
    %3 = vector.load %arg1[%c0, %c0_1, %c0_2] : memref<2x128x27xbf16, #tpu.memory_space<vmem>>, vector<2x128x27xbf16>
    %4 = vector.shape_cast %3 : vector<2x128x27xbf16> to vector<256x27xbf16>
    %c0_3 = arith.constant 0 : index
    %c0_4 = arith.constant 0 : index
    %5 = vector.load %arg2[%c0_3, %c0_4] : memref<27x128xbf16, #tpu.memory_space<vmem>>, vector<27x128xbf16>
    %cst = arith.constant dense<0.000000e+00> : vector<256x128xf32>
    %6 = tpu.matmul %4, %5, %cst {dimension_numbers = #tpu.dot_dimension_numbers<[1], [0], [0], [1], [0, 0, 1, 1], [], []>} : vector<256x27xbf16>, vector<27x128xbf16>, vector<256x128xf32> -> vector<256x128xf32>
    %c0_5 = arith.constant 0 : index
    %c0_6 = arith.constant 0 : index
    %7 = vector.load %arg3[%c0_5, %c0_6] : memref<1x128xf32, #tpu.memory_space<vmem>>, vector<1x128xf32>
    %8 = vector.broadcast %7 : vector<1x128xf32> to vector<256x128xf32>
    %9 = arith.addf %6, %8 : vector<256x128xf32>
    %cst_7 = arith.constant 0.000000e+00 : f32
    %10 = vector.broadcast %cst_7 : f32 to vector<256x128xf32>
    %11 = arith.maximumf %9, %10 : vector<256x128xf32>
    %c0_8 = arith.constant 0 : index
    %c0_9 = arith.constant 0 : index
    %12 = vector.load %arg7[%c0_8, %c0_9] : memref<2x128xf32, #tpu.memory_space<vmem>>, vector<2x128xf32>
    %13 = vector.shape_cast %11 : vector<256x128xf32> to vector<2x128x128xf32>
    %cst_10 = arith.constant dense<0.000000e+00> : vector<2x128xf32>
    %14 = vector.multi_reduction <add>, %13, %cst_10 [1] : vector<2x128x128xf32> to vector<2x128xf32>
    %15 = arith.addf %12, %14 : vector<2x128xf32>
    %c0_11 = arith.constant 0 : index
    %c0_12 = arith.constant 0 : index
    %16 = vector.load %arg7[%c0_11, %c0_12] : memref<2x128xf32, #tpu.memory_space<vmem>>, vector<2x128xf32>
    tpu.vector_store %arg7[%c0_11, %c0_12], %15 {strides = array<i32>} : memref<2x128xf32, #tpu.memory_space<vmem>>, vector<2x128xf32>,
    %c1_i32 = arith.constant 1 : i32
    %17 = arith.cmpi eq, %arg0, %c1_i32 : i32
    %18 = arith.extui %17 : i1 to i32
    %c0_i32_13 = arith.constant 0 : i32
    %19 = arith.cmpi ne, %18, %c0_i32_13 : i32
    scf.if %19 {
      %c0_14 = arith.constant 0 : index
      %c0_15 = arith.constant 0 : index
      %20 = vector.load %arg7[%c0_14, %c0_15] : memref<2x128xf32, #tpu.memory_space<vmem>>, vector<2x128xf32>
      %cst_16 = arith.constant 3.906250e-03 : f32
      %21 = vector.broadcast %cst_16 : f32 to vector<2x128xf32>
      %22 = arith.mulf %20, %21 : vector<2x128xf32>
      %23 = arith.truncf %22 : vector<2x128xf32> to vector<2x128xbf16>
      %c0_17 = arith.constant 0 : index
      %c0_18 = arith.constant 0 : index
      %24 = vector.load %arg4[%c0_17, %c0_18] : memref<128x128xbf16, #tpu.memory_space<vmem>>, vector<128x128xbf16>
      %cst_19 = arith.constant dense<0.000000e+00> : vector<2x128xf32>
      %25 = tpu.matmul %23, %24, %cst_19 {dimension_numbers = #tpu.dot_dimension_numbers<[1], [0], [0], [1], [0, 0, 1, 1], [], []>} : vector<2x128xbf16>, vector<128x128xbf16>, vector<2x128xf32> -> vector<2x128xf32>
      %c0_20 = arith.constant 0 : index
      %c0_21 = arith.constant 0 : index
      %26 = vector.load %arg5[%c0_20, %c0_21] : memref<1x128xf32, #tpu.memory_space<vmem>>, vector<1x128xf32>
      %27 = vector.broadcast %26 : vector<1x128xf32> to vector<2x128xf32>
      %28 = arith.addf %25, %27 : vector<2x128xf32>
      %c0_22 = arith.constant 0 : index
      %c0_23 = arith.constant 0 : index
      %29 = vector.load %arg6[%c0_22, %c0_23] : memref<2x128xf32, #tpu.memory_space<vmem>>, vector<2x128xf32>
      tpu.vector_store %arg6[%c0_22, %c0_23], %28 {strides = array<i32>} : memref<2x128xf32, #tpu.memory_space<vmem>>, vector<2x128xf32>,
    } else {
    }
    return
  }
  func.func @transform_0(%arg0: i32) -> (i32, i32, i32) {
    %c0_i32 = arith.constant 0 : i32
    %c0_i32_0 = arith.constant 0 : i32
    %c0_i32_1 = arith.constant 0 : i32
    return %c0_i32, %arg0, %c0_i32_0 : i32, i32, i32
  }
  func.func @transform_1(%arg0: i32) -> (i32, i32) {
    %c0_i32 = arith.constant 0 : i32
    %c0_i32_0 = arith.constant 0 : i32
    %c0_i32_1 = arith.constant 0 : i32
    return %c0_i32, %c0_i32_0 : i32, i32
  }
  func.func @transform_2(%arg0: i32) -> (i32, i32) {
    %c0_i32 = arith.constant 0 : i32
    %c0_i32_0 = arith.constant 0 : i32
    %c0_i32_1 = arith.constant 0 : i32
    return %c0_i32, %c0_i32_0 : i32, i32
  }
  func.func @transform_3(%arg0: i32) -> (i32, i32) {
    %c0_i32 = arith.constant 0 : i32
    %c0_i32_0 = arith.constant 0 : i32
    %c0_i32_1 = arith.constant 0 : i32
    return %c0_i32, %c0_i32_0 : i32, i32
  }
  func.func @transform_4(%arg0: i32) -> (i32, i32) {
    %c0_i32 = arith.constant 0 : i32
    %c0_i32_0 = arith.constant 0 : i32
    %c0_i32_1 = arith.constant 0 : i32
    return %c0_i32, %c0_i32_0 : i32, i32
  }
  func.func @transform_5(%arg0: i32) -> (i32, i32) {
    %c0_i32 = arith.constant 0 : i32
    %c0_i32_0 = arith.constant 0 : i32
    %c0_i32_1 = arith.constant 0 : i32
    return %c0_i32, %c0_i32_0 : i32, i32
  }
}

module attributes {stable_mosaic.version = 11 : i64} {
  func.func @matmul_kernel(%arg0: i32, %arg1: i32, %arg2: i32, %arg3: memref<64x128xbf16, #tpu.memory_space<vmem>>, %arg4: memref<128x512xbf16, #tpu.memory_space<vmem>>, %arg5: memref<1x512xf32, #tpu.memory_space<vmem>>, %arg6: memref<64x512xf32, #tpu.memory_space<vmem>>, %arg7: memref<64x512xf32, #tpu.memory_space<vmem>>) attributes {dimension_semantics = [#tpu.dimension_semantics<parallel>, #tpu.dimension_semantics<parallel>, #tpu.dimension_semantics<arbitrary>], iteration_bounds = array<i64: 1, 1, 1>, scalar_prefetch = 0 : i64, scratch_operands = 1 : i64, tpu.core_type = #tpu.core_type<tc>, window_params = [{transform_indices = @transform_0, window_bounds = array<i64: 64, 128>}, {transform_indices = @transform_1, window_bounds = array<i64: 128, 512>}, {transform_indices = @transform_2, window_bounds = array<i64: 1, 512>}, {transform_indices = @transform_3, window_bounds = array<i64: 64, 512>}]} {
    %c0_i32 = arith.constant 0 : i32
    %0 = arith.cmpi eq, %arg2, %c0_i32 : i32
    %1 = arith.extui %0 : i1 to i32
    %c0_i32_0 = arith.constant 0 : i32
    %2 = arith.cmpi ne, %1, %c0_i32_0 : i32
    scf.if %2 {
      %cst_10 = arith.constant 0.000000e+00 : f32
      %12 = vector.broadcast %cst_10 : f32 to vector<64x512xf32>
      %c0_11 = arith.constant 0 : index
      %c0_12 = arith.constant 0 : index
      %13 = vector.load %arg7[%c0_11, %c0_12] : memref<64x512xf32, #tpu.memory_space<vmem>>, vector<64x512xf32>
      tpu.vector_store %arg7[%c0_11, %c0_12], %12 {strides = array<i32>} : memref<64x512xf32, #tpu.memory_space<vmem>>, vector<64x512xf32>,
    } else {
    }
    %c0 = arith.constant 0 : index
    %c0_1 = arith.constant 0 : index
    %3 = vector.load %arg7[%c0, %c0_1] : memref<64x512xf32, #tpu.memory_space<vmem>>, vector<64x512xf32>
    %c0_2 = arith.constant 0 : index
    %c0_3 = arith.constant 0 : index
    %4 = vector.load %arg3[%c0_2, %c0_3] : memref<64x128xbf16, #tpu.memory_space<vmem>>, vector<64x128xbf16>
    %c0_4 = arith.constant 0 : index
    %c0_5 = arith.constant 0 : index
    %5 = vector.load %arg4[%c0_4, %c0_5] : memref<128x512xbf16, #tpu.memory_space<vmem>>, vector<128x512xbf16>
    %cst = arith.constant dense<0.000000e+00> : vector<64x512xf32>
    %6 = tpu.matmul %4, %5, %cst {dimension_numbers = #tpu.dot_dimension_numbers<[1], [0], [0], [1], [0, 0, 1, 1], [], []>} : vector<64x128xbf16>, vector<128x512xbf16>, vector<64x512xf32> -> vector<64x512xf32>
    %7 = arith.addf %3, %6 : vector<64x512xf32>
    %c0_6 = arith.constant 0 : index
    %c0_7 = arith.constant 0 : index
    %8 = vector.load %arg7[%c0_6, %c0_7] : memref<64x512xf32, #tpu.memory_space<vmem>>, vector<64x512xf32>
    tpu.vector_store %arg7[%c0_6, %c0_7], %7 {strides = array<i32>} : memref<64x512xf32, #tpu.memory_space<vmem>>, vector<64x512xf32>,
    %c0_i32_8 = arith.constant 0 : i32
    %9 = arith.cmpi eq, %arg2, %c0_i32_8 : i32
    %10 = arith.extui %9 : i1 to i32
    %c0_i32_9 = arith.constant 0 : i32
    %11 = arith.cmpi ne, %10, %c0_i32_9 : i32
    scf.if %11 {
      %c0_10 = arith.constant 0 : index
      %c0_11 = arith.constant 0 : index
      %12 = vector.load %arg7[%c0_10, %c0_11] : memref<64x512xf32, #tpu.memory_space<vmem>>, vector<64x512xf32>
      %c0_12 = arith.constant 0 : index
      %c0_13 = arith.constant 0 : index
      %13 = vector.load %arg5[%c0_12, %c0_13] : memref<1x512xf32, #tpu.memory_space<vmem>>, vector<1x512xf32>
      %14 = vector.broadcast %13 : vector<1x512xf32> to vector<64x512xf32>
      %15 = arith.addf %12, %14 : vector<64x512xf32>
      %c0_14 = arith.constant 0 : index
      %c0_15 = arith.constant 0 : index
      %16 = vector.load %arg6[%c0_14, %c0_15] : memref<64x512xf32, #tpu.memory_space<vmem>>, vector<64x512xf32>
      tpu.vector_store %arg6[%c0_14, %c0_15], %15 {strides = array<i32>} : memref<64x512xf32, #tpu.memory_space<vmem>>, vector<64x512xf32>,
    } else {
    }
    return
  }
  func.func @transform_0(%arg0: i32, %arg1: i32, %arg2: i32) -> (i32, i32) {
    %c0_i32 = arith.constant 0 : i32
    return %arg0, %arg2 : i32, i32
  }
  func.func @transform_1(%arg0: i32, %arg1: i32, %arg2: i32) -> (i32, i32) {
    %c0_i32 = arith.constant 0 : i32
    return %arg2, %arg1 : i32, i32
  }
  func.func @transform_2(%arg0: i32, %arg1: i32, %arg2: i32) -> (i32, i32) {
    %c0_i32 = arith.constant 0 : i32
    %c0_i32_0 = arith.constant 0 : i32
    return %c0_i32, %arg1 : i32, i32
  }
  func.func @transform_3(%arg0: i32, %arg1: i32, %arg2: i32) -> (i32, i32) {
    %c0_i32 = arith.constant 0 : i32
    return %arg0, %arg1 : i32, i32
  }
}

module attributes {stable_mosaic.version = 11 : i64} {
  func.func @lstm_kernel(%arg0: i32, %arg1: memref<8x8x512xf32, #tpu.memory_space<vmem>>, %arg2: memref<128x512xbf16, #tpu.memory_space<vmem>>, %arg3: memref<8x8x128xf32, #tpu.memory_space<vmem>>, %arg4: memref<8x128xf32, #tpu.memory_space<vmem>>, %arg5: memref<8x128xf32, #tpu.memory_space<vmem>>) attributes {dimension_semantics = [#tpu.dimension_semantics<arbitrary>], iteration_bounds = array<i64: 1>, scalar_prefetch = 0 : i64, scratch_operands = 2 : i64, tpu.core_type = #tpu.core_type<tc>, window_params = [{transform_indices = @transform_0, window_bounds = array<i64: 8, 8, 512>}, {pipeline_mode = #tpu.pipeline_mode<synchronous>, transform_indices = @transform_1, window_bounds = array<i64: 128, 512>}, {transform_indices = @transform_2, window_bounds = array<i64: 8, 8, 128>}]} {
    %c0_i32 = arith.constant 0 : i32
    %0 = arith.cmpi eq, %arg0, %c0_i32 : i32
    %1 = arith.extui %0 : i1 to i32
    %c0_i32_0 = arith.constant 0 : i32
    %2 = arith.cmpi ne, %1, %c0_i32_0 : i32
    scf.if %2 {
      %cst_74 = arith.constant 0.000000e+00 : f32
      %288 = vector.broadcast %cst_74 : f32 to vector<8x128xf32>
      %c0_75 = arith.constant 0 : index
      %c0_76 = arith.constant 0 : index
      %289 = vector.load %arg4[%c0_75, %c0_76] : memref<8x128xf32, #tpu.memory_space<vmem>>, vector<8x128xf32>
      tpu.vector_store %arg4[%c0_75, %c0_76], %288 {strides = array<i32>} : memref<8x128xf32, #tpu.memory_space<vmem>>, vector<8x128xf32>,
      %cst_77 = arith.constant 0.000000e+00 : f32
      %290 = vector.broadcast %cst_77 : f32 to vector<8x128xf32>
      %c0_78 = arith.constant 0 : index
      %c0_79 = arith.constant 0 : index
      %291 = vector.load %arg5[%c0_78, %c0_79] : memref<8x128xf32, #tpu.memory_space<vmem>>, vector<8x128xf32>
      tpu.vector_store %arg5[%c0_78, %c0_79], %290 {strides = array<i32>} : memref<8x128xf32, #tpu.memory_space<vmem>>, vector<8x128xf32>,
    } else {
    }
    %c0 = arith.constant 0 : index
    %c0_1 = arith.constant 0 : index
    %3 = vector.load %arg2[%c0, %c0_1] : memref<128x512xbf16, #tpu.memory_space<vmem>>, vector<128x512xbf16>
    %c0_2 = arith.constant 0 : index
    %c0_3 = arith.constant 0 : index
    %4 = vector.load %arg4[%c0_2, %c0_3] : memref<8x128xf32, #tpu.memory_space<vmem>>, vector<8x128xf32>
    %c0_4 = arith.constant 0 : index
    %c0_5 = arith.constant 0 : index
    %5 = vector.load %arg5[%c0_4, %c0_5] : memref<8x128xf32, #tpu.memory_space<vmem>>, vector<8x128xf32>
    %c0_i32_6 = arith.constant 0 : i32
    %6 = arith.index_cast %c0_i32_6 : i32 to index
    %c0_7 = arith.constant 0 : index
    %c0_8 = arith.constant 0 : index
    %7 = vector.load %arg1[%6, %c0_7, %c0_8] : memref<8x8x512xf32, #tpu.memory_space<vmem>>, vector<1x8x512xf32>
    %8 = vector.shape_cast %7 : vector<1x8x512xf32> to vector<8x512xf32>
    %9 = arith.truncf %4 : vector<8x128xf32> to vector<8x128xbf16>
    %cst = arith.constant dense<0.000000e+00> : vector<8x512xf32>
    %10 = tpu.matmul %9, %3, %cst {dimension_numbers = #tpu.dot_dimension_numbers<[1], [0], [0], [1], [0, 0, 1, 1], [], []>} : vector<8x128xbf16>, vector<128x512xbf16>, vector<8x512xf32> -> vector<8x512xf32>
    %11 = arith.addf %8, %10 : vector<8x512xf32>
    %12 = vector.extract_strided_slice %11 {offsets = [0, 0], sizes = [8, 128], strides = [1, 1]} : vector<8x512xf32> to vector<8x128xf32>
    %13 = arith.negf %12 : vector<8x128xf32>
    %14 = math.exp %13 : vector<8x128xf32>
    %cst_9 = arith.constant 1.000000e+00 : f32
    %15 = vector.broadcast %cst_9 : f32 to vector<8x128xf32>
    %16 = arith.addf %15, %14 : vector<8x128xf32>
    %17 = arith.divf %15, %16 : vector<8x128xf32>
    %18 = vector.extract_strided_slice %11 {offsets = [0, 128], sizes = [8, 128], strides = [1, 1]} : vector<8x512xf32> to vector<8x128xf32>
    %19 = arith.negf %18 : vector<8x128xf32>
    %20 = math.exp %19 : vector<8x128xf32>
    %cst_10 = arith.constant 1.000000e+00 : f32
    %21 = vector.broadcast %cst_10 : f32 to vector<8x128xf32>
    %22 = arith.addf %21, %20 : vector<8x128xf32>
    %23 = arith.divf %21, %22 : vector<8x128xf32>
    %24 = vector.extract_strided_slice %11 {offsets = [0, 256], sizes = [8, 128], strides = [1, 1]} : vector<8x512xf32> to vector<8x128xf32>
    %25 = math.tanh %24 : vector<8x128xf32>
    %26 = vector.extract_strided_slice %11 {offsets = [0, 384], sizes = [8, 128], strides = [1, 1]} : vector<8x512xf32> to vector<8x128xf32>
    %27 = arith.negf %26 : vector<8x128xf32>
    %28 = math.exp %27 : vector<8x128xf32>
    %cst_11 = arith.constant 1.000000e+00 : f32
    %29 = vector.broadcast %cst_11 : f32 to vector<8x128xf32>
    %30 = arith.addf %29, %28 : vector<8x128xf32>
    %31 = arith.divf %29, %30 : vector<8x128xf32>
    %32 = arith.mulf %23, %5 : vector<8x128xf32>
    %33 = arith.mulf %17, %25 : vector<8x128xf32>
    %34 = arith.addf %32, %33 : vector<8x128xf32>
    %35 = math.tanh %34 : vector<8x128xf32>
    %36 = arith.mulf %31, %35 : vector<8x128xf32>
    %37 = arith.index_cast %c0_i32_6 : i32 to index
    %c0_12 = arith.constant 0 : index
    %c0_13 = arith.constant 0 : index
    %38 = vector.load %arg3[%37, %c0_12, %c0_13] : memref<8x8x128xf32, #tpu.memory_space<vmem>>, vector<1x8x128xf32>
    %39 = vector.shape_cast %38 : vector<1x8x128xf32> to vector<8x128xf32>
    %40 = vector.shape_cast %36 : vector<8x128xf32> to vector<1x8x128xf32>
    tpu.vector_store %arg3[%37, %c0_12, %c0_13], %40 {strides = array<i32>} : memref<8x8x128xf32, #tpu.memory_space<vmem>>, vector<1x8x128xf32>,
    %c1_i32 = arith.constant 1 : i32
    %41 = arith.index_cast %c1_i32 : i32 to index
    %c0_14 = arith.constant 0 : index
    %c0_15 = arith.constant 0 : index
    %42 = vector.load %arg1[%41, %c0_14, %c0_15] : memref<8x8x512xf32, #tpu.memory_space<vmem>>, vector<1x8x512xf32>
    %43 = vector.shape_cast %42 : vector<1x8x512xf32> to vector<8x512xf32>
    %44 = arith.truncf %36 : vector<8x128xf32> to vector<8x128xbf16>
    %cst_16 = arith.constant dense<0.000000e+00> : vector<8x512xf32>
    %45 = tpu.matmul %44, %3, %cst_16 {dimension_numbers = #tpu.dot_dimension_numbers<[1], [0], [0], [1], [0, 0, 1, 1], [], []>} : vector<8x128xbf16>, vector<128x512xbf16>, vector<8x512xf32> -> vector<8x512xf32>
    %46 = arith.addf %43, %45 : vector<8x512xf32>
    %47 = vector.extract_strided_slice %46 {offsets = [0, 0], sizes = [8, 128], strides = [1, 1]} : vector<8x512xf32> to vector<8x128xf32>
    %48 = arith.negf %47 : vector<8x128xf32>
    %49 = math.exp %48 : vector<8x128xf32>
    %cst_17 = arith.constant 1.000000e+00 : f32
    %50 = vector.broadcast %cst_17 : f32 to vector<8x128xf32>
    %51 = arith.addf %50, %49 : vector<8x128xf32>
    %52 = arith.divf %50, %51 : vector<8x128xf32>
    %53 = vector.extract_strided_slice %46 {offsets = [0, 128], sizes = [8, 128], strides = [1, 1]} : vector<8x512xf32> to vector<8x128xf32>
    %54 = arith.negf %53 : vector<8x128xf32>
    %55 = math.exp %54 : vector<8x128xf32>
    %cst_18 = arith.constant 1.000000e+00 : f32
    %56 = vector.broadcast %cst_18 : f32 to vector<8x128xf32>
    %57 = arith.addf %56, %55 : vector<8x128xf32>
    %58 = arith.divf %56, %57 : vector<8x128xf32>
    %59 = vector.extract_strided_slice %46 {offsets = [0, 256], sizes = [8, 128], strides = [1, 1]} : vector<8x512xf32> to vector<8x128xf32>
    %60 = math.tanh %59 : vector<8x128xf32>
    %61 = vector.extract_strided_slice %46 {offsets = [0, 384], sizes = [8, 128], strides = [1, 1]} : vector<8x512xf32> to vector<8x128xf32>
    %62 = arith.negf %61 : vector<8x128xf32>
    %63 = math.exp %62 : vector<8x128xf32>
    %cst_19 = arith.constant 1.000000e+00 : f32
    %64 = vector.broadcast %cst_19 : f32 to vector<8x128xf32>
    %65 = arith.addf %64, %63 : vector<8x128xf32>
    %66 = arith.divf %64, %65 : vector<8x128xf32>
    %67 = arith.mulf %58, %34 : vector<8x128xf32>
    %68 = arith.mulf %52, %60 : vector<8x128xf32>
    %69 = arith.addf %67, %68 : vector<8x128xf32>
    %70 = math.tanh %69 : vector<8x128xf32>
    %71 = arith.mulf %66, %70 : vector<8x128xf32>
    %72 = arith.index_cast %c1_i32 : i32 to index
    %c0_20 = arith.constant 0 : index
    %c0_21 = arith.constant 0 : index
    %73 = vector.load %arg3[%72, %c0_20, %c0_21] : memref<8x8x128xf32, #tpu.memory_space<vmem>>, vector<1x8x128xf32>
    %74 = vector.shape_cast %73 : vector<1x8x128xf32> to vector<8x128xf32>
    %75 = vector.shape_cast %71 : vector<8x128xf32> to vector<1x8x128xf32>
    tpu.vector_store %arg3[%72, %c0_20, %c0_21], %75 {strides = array<i32>} : memref<8x8x128xf32, #tpu.memory_space<vmem>>, vector<1x8x128xf32>,
    %c2_i32 = arith.constant 2 : i32
    %76 = arith.index_cast %c2_i32 : i32 to index
    %c0_22 = arith.constant 0 : index
    %c0_23 = arith.constant 0 : index
    %77 = vector.load %arg1[%76, %c0_22, %c0_23] : memref<8x8x512xf32, #tpu.memory_space<vmem>>, vector<1x8x512xf32>
    %78 = vector.shape_cast %77 : vector<1x8x512xf32> to vector<8x512xf32>
    %79 = arith.truncf %71 : vector<8x128xf32> to vector<8x128xbf16>
    %cst_24 = arith.constant dense<0.000000e+00> : vector<8x512xf32>
    %80 = tpu.matmul %79, %3, %cst_24 {dimension_numbers = #tpu.dot_dimension_numbers<[1], [0], [0], [1], [0, 0, 1, 1], [], []>} : vector<8x128xbf16>, vector<128x512xbf16>, vector<8x512xf32> -> vector<8x512xf32>
    %81 = arith.addf %78, %80 : vector<8x512xf32>
    %82 = vector.extract_strided_slice %81 {offsets = [0, 0], sizes = [8, 128], strides = [1, 1]} : vector<8x512xf32> to vector<8x128xf32>
    %83 = arith.negf %82 : vector<8x128xf32>
    %84 = math.exp %83 : vector<8x128xf32>
    %cst_25 = arith.constant 1.000000e+00 : f32
    %85 = vector.broadcast %cst_25 : f32 to vector<8x128xf32>
    %86 = arith.addf %85, %84 : vector<8x128xf32>
    %87 = arith.divf %85, %86 : vector<8x128xf32>
    %88 = vector.extract_strided_slice %81 {offsets = [0, 128], sizes = [8, 128], strides = [1, 1]} : vector<8x512xf32> to vector<8x128xf32>
    %89 = arith.negf %88 : vector<8x128xf32>
    %90 = math.exp %89 : vector<8x128xf32>
    %cst_26 = arith.constant 1.000000e+00 : f32
    %91 = vector.broadcast %cst_26 : f32 to vector<8x128xf32>
    %92 = arith.addf %91, %90 : vector<8x128xf32>
    %93 = arith.divf %91, %92 : vector<8x128xf32>
    %94 = vector.extract_strided_slice %81 {offsets = [0, 256], sizes = [8, 128], strides = [1, 1]} : vector<8x512xf32> to vector<8x128xf32>
    %95 = math.tanh %94 : vector<8x128xf32>
    %96 = vector.extract_strided_slice %81 {offsets = [0, 384], sizes = [8, 128], strides = [1, 1]} : vector<8x512xf32> to vector<8x128xf32>
    %97 = arith.negf %96 : vector<8x128xf32>
    %98 = math.exp %97 : vector<8x128xf32>
    %cst_27 = arith.constant 1.000000e+00 : f32
    %99 = vector.broadcast %cst_27 : f32 to vector<8x128xf32>
    %100 = arith.addf %99, %98 : vector<8x128xf32>
    %101 = arith.divf %99, %100 : vector<8x128xf32>
    %102 = arith.mulf %93, %69 : vector<8x128xf32>
    %103 = arith.mulf %87, %95 : vector<8x128xf32>
    %104 = arith.addf %102, %103 : vector<8x128xf32>
    %105 = math.tanh %104 : vector<8x128xf32>
    %106 = arith.mulf %101, %105 : vector<8x128xf32>
    %107 = arith.index_cast %c2_i32 : i32 to index
    %c0_28 = arith.constant 0 : index
    %c0_29 = arith.constant 0 : index
    %108 = vector.load %arg3[%107, %c0_28, %c0_29] : memref<8x8x128xf32, #tpu.memory_space<vmem>>, vector<1x8x128xf32>
    %109 = vector.shape_cast %108 : vector<1x8x128xf32> to vector<8x128xf32>
    %110 = vector.shape_cast %106 : vector<8x128xf32> to vector<1x8x128xf32>
    tpu.vector_store %arg3[%107, %c0_28, %c0_29], %110 {strides = array<i32>} : memref<8x8x128xf32, #tpu.memory_space<vmem>>, vector<1x8x128xf32>,
    %c3_i32 = arith.constant 3 : i32
    %111 = arith.index_cast %c3_i32 : i32 to index
    %c0_30 = arith.constant 0 : index
    %c0_31 = arith.constant 0 : index
    %112 = vector.load %arg1[%111, %c0_30, %c0_31] : memref<8x8x512xf32, #tpu.memory_space<vmem>>, vector<1x8x512xf32>
    %113 = vector.shape_cast %112 : vector<1x8x512xf32> to vector<8x512xf32>
    %114 = arith.truncf %106 : vector<8x128xf32> to vector<8x128xbf16>
    %cst_32 = arith.constant dense<0.000000e+00> : vector<8x512xf32>
    %115 = tpu.matmul %114, %3, %cst_32 {dimension_numbers = #tpu.dot_dimension_numbers<[1], [0], [0], [1], [0, 0, 1, 1], [], []>} : vector<8x128xbf16>, vector<128x512xbf16>, vector<8x512xf32> -> vector<8x512xf32>
    %116 = arith.addf %113, %115 : vector<8x512xf32>
    %117 = vector.extract_strided_slice %116 {offsets = [0, 0], sizes = [8, 128], strides = [1, 1]} : vector<8x512xf32> to vector<8x128xf32>
    %118 = arith.negf %117 : vector<8x128xf32>
    %119 = math.exp %118 : vector<8x128xf32>
    %cst_33 = arith.constant 1.000000e+00 : f32
    %120 = vector.broadcast %cst_33 : f32 to vector<8x128xf32>
    %121 = arith.addf %120, %119 : vector<8x128xf32>
    %122 = arith.divf %120, %121 : vector<8x128xf32>
    %123 = vector.extract_strided_slice %116 {offsets = [0, 128], sizes = [8, 128], strides = [1, 1]} : vector<8x512xf32> to vector<8x128xf32>
    %124 = arith.negf %123 : vector<8x128xf32>
    %125 = math.exp %124 : vector<8x128xf32>
    %cst_34 = arith.constant 1.000000e+00 : f32
    %126 = vector.broadcast %cst_34 : f32 to vector<8x128xf32>
    %127 = arith.addf %126, %125 : vector<8x128xf32>
    %128 = arith.divf %126, %127 : vector<8x128xf32>
    %129 = vector.extract_strided_slice %116 {offsets = [0, 256], sizes = [8, 128], strides = [1, 1]} : vector<8x512xf32> to vector<8x128xf32>
    %130 = math.tanh %129 : vector<8x128xf32>
    %131 = vector.extract_strided_slice %116 {offsets = [0, 384], sizes = [8, 128], strides = [1, 1]} : vector<8x512xf32> to vector<8x128xf32>
    %132 = arith.negf %131 : vector<8x128xf32>
    %133 = math.exp %132 : vector<8x128xf32>
    %cst_35 = arith.constant 1.000000e+00 : f32
    %134 = vector.broadcast %cst_35 : f32 to vector<8x128xf32>
    %135 = arith.addf %134, %133 : vector<8x128xf32>
    %136 = arith.divf %134, %135 : vector<8x128xf32>
    %137 = arith.mulf %128, %104 : vector<8x128xf32>
    %138 = arith.mulf %122, %130 : vector<8x128xf32>
    %139 = arith.addf %137, %138 : vector<8x128xf32>
    %140 = math.tanh %139 : vector<8x128xf32>
    %141 = arith.mulf %136, %140 : vector<8x128xf32>
    %142 = arith.index_cast %c3_i32 : i32 to index
    %c0_36 = arith.constant 0 : index
    %c0_37 = arith.constant 0 : index
    %143 = vector.load %arg3[%142, %c0_36, %c0_37] : memref<8x8x128xf32, #tpu.memory_space<vmem>>, vector<1x8x128xf32>
    %144 = vector.shape_cast %143 : vector<1x8x128xf32> to vector<8x128xf32>
    %145 = vector.shape_cast %141 : vector<8x128xf32> to vector<1x8x128xf32>
    tpu.vector_store %arg3[%142, %c0_36, %c0_37], %145 {strides = array<i32>} : memref<8x8x128xf32, #tpu.memory_space<vmem>>, vector<1x8x128xf32>,
    %c4_i32 = arith.constant 4 : i32
    %146 = arith.index_cast %c4_i32 : i32 to index
    %c0_38 = arith.constant 0 : index
    %c0_39 = arith.constant 0 : index
    %147 = vector.load %arg1[%146, %c0_38, %c0_39] : memref<8x8x512xf32, #tpu.memory_space<vmem>>, vector<1x8x512xf32>
    %148 = vector.shape_cast %147 : vector<1x8x512xf32> to vector<8x512xf32>
    %149 = arith.truncf %141 : vector<8x128xf32> to vector<8x128xbf16>
    %cst_40 = arith.constant dense<0.000000e+00> : vector<8x512xf32>
    %150 = tpu.matmul %149, %3, %cst_40 {dimension_numbers = #tpu.dot_dimension_numbers<[1], [0], [0], [1], [0, 0, 1, 1], [], []>} : vector<8x128xbf16>, vector<128x512xbf16>, vector<8x512xf32> -> vector<8x512xf32>
    %151 = arith.addf %148, %150 : vector<8x512xf32>
    %152 = vector.extract_strided_slice %151 {offsets = [0, 0], sizes = [8, 128], strides = [1, 1]} : vector<8x512xf32> to vector<8x128xf32>
    %153 = arith.negf %152 : vector<8x128xf32>
    %154 = math.exp %153 : vector<8x128xf32>
    %cst_41 = arith.constant 1.000000e+00 : f32
    %155 = vector.broadcast %cst_41 : f32 to vector<8x128xf32>
    %156 = arith.addf %155, %154 : vector<8x128xf32>
    %157 = arith.divf %155, %156 : vector<8x128xf32>
    %158 = vector.extract_strided_slice %151 {offsets = [0, 128], sizes = [8, 128], strides = [1, 1]} : vector<8x512xf32> to vector<8x128xf32>
    %159 = arith.negf %158 : vector<8x128xf32>
    %160 = math.exp %159 : vector<8x128xf32>
    %cst_42 = arith.constant 1.000000e+00 : f32
    %161 = vector.broadcast %cst_42 : f32 to vector<8x128xf32>
    %162 = arith.addf %161, %160 : vector<8x128xf32>
    %163 = arith.divf %161, %162 : vector<8x128xf32>
    %164 = vector.extract_strided_slice %151 {offsets = [0, 256], sizes = [8, 128], strides = [1, 1]} : vector<8x512xf32> to vector<8x128xf32>
    %165 = math.tanh %164 : vector<8x128xf32>
    %166 = vector.extract_strided_slice %151 {offsets = [0, 384], sizes = [8, 128], strides = [1, 1]} : vector<8x512xf32> to vector<8x128xf32>
    %167 = arith.negf %166 : vector<8x128xf32>
    %168 = math.exp %167 : vector<8x128xf32>
    %cst_43 = arith.constant 1.000000e+00 : f32
    %169 = vector.broadcast %cst_43 : f32 to vector<8x128xf32>
    %170 = arith.addf %169, %168 : vector<8x128xf32>
    %171 = arith.divf %169, %170 : vector<8x128xf32>
    %172 = arith.mulf %163, %139 : vector<8x128xf32>
    %173 = arith.mulf %157, %165 : vector<8x128xf32>
    %174 = arith.addf %172, %173 : vector<8x128xf32>
    %175 = math.tanh %174 : vector<8x128xf32>
    %176 = arith.mulf %171, %175 : vector<8x128xf32>
    %177 = arith.index_cast %c4_i32 : i32 to index
    %c0_44 = arith.constant 0 : index
    %c0_45 = arith.constant 0 : index
    %178 = vector.load %arg3[%177, %c0_44, %c0_45] : memref<8x8x128xf32, #tpu.memory_space<vmem>>, vector<1x8x128xf32>
    %179 = vector.shape_cast %178 : vector<1x8x128xf32> to vector<8x128xf32>
    %180 = vector.shape_cast %176 : vector<8x128xf32> to vector<1x8x128xf32>
    tpu.vector_store %arg3[%177, %c0_44, %c0_45], %180 {strides = array<i32>} : memref<8x8x128xf32, #tpu.memory_space<vmem>>, vector<1x8x128xf32>,
    %c5_i32 = arith.constant 5 : i32
    %181 = arith.index_cast %c5_i32 : i32 to index
    %c0_46 = arith.constant 0 : index
    %c0_47 = arith.constant 0 : index
    %182 = vector.load %arg1[%181, %c0_46, %c0_47] : memref<8x8x512xf32, #tpu.memory_space<vmem>>, vector<1x8x512xf32>
    %183 = vector.shape_cast %182 : vector<1x8x512xf32> to vector<8x512xf32>
    %184 = arith.truncf %176 : vector<8x128xf32> to vector<8x128xbf16>
    %cst_48 = arith.constant dense<0.000000e+00> : vector<8x512xf32>
    %185 = tpu.matmul %184, %3, %cst_48 {dimension_numbers = #tpu.dot_dimension_numbers<[1], [0], [0], [1], [0, 0, 1, 1], [], []>} : vector<8x128xbf16>, vector<128x512xbf16>, vector<8x512xf32> -> vector<8x512xf32>
    %186 = arith.addf %183, %185 : vector<8x512xf32>
    %187 = vector.extract_strided_slice %186 {offsets = [0, 0], sizes = [8, 128], strides = [1, 1]} : vector<8x512xf32> to vector<8x128xf32>
    %188 = arith.negf %187 : vector<8x128xf32>
    %189 = math.exp %188 : vector<8x128xf32>
    %cst_49 = arith.constant 1.000000e+00 : f32
    %190 = vector.broadcast %cst_49 : f32 to vector<8x128xf32>
    %191 = arith.addf %190, %189 : vector<8x128xf32>
    %192 = arith.divf %190, %191 : vector<8x128xf32>
    %193 = vector.extract_strided_slice %186 {offsets = [0, 128], sizes = [8, 128], strides = [1, 1]} : vector<8x512xf32> to vector<8x128xf32>
    %194 = arith.negf %193 : vector<8x128xf32>
    %195 = math.exp %194 : vector<8x128xf32>
    %cst_50 = arith.constant 1.000000e+00 : f32
    %196 = vector.broadcast %cst_50 : f32 to vector<8x128xf32>
    %197 = arith.addf %196, %195 : vector<8x128xf32>
    %198 = arith.divf %196, %197 : vector<8x128xf32>
    %199 = vector.extract_strided_slice %186 {offsets = [0, 256], sizes = [8, 128], strides = [1, 1]} : vector<8x512xf32> to vector<8x128xf32>
    %200 = math.tanh %199 : vector<8x128xf32>
    %201 = vector.extract_strided_slice %186 {offsets = [0, 384], sizes = [8, 128], strides = [1, 1]} : vector<8x512xf32> to vector<8x128xf32>
    %202 = arith.negf %201 : vector<8x128xf32>
    %203 = math.exp %202 : vector<8x128xf32>
    %cst_51 = arith.constant 1.000000e+00 : f32
    %204 = vector.broadcast %cst_51 : f32 to vector<8x128xf32>
    %205 = arith.addf %204, %203 : vector<8x128xf32>
    %206 = arith.divf %204, %205 : vector<8x128xf32>
    %207 = arith.mulf %198, %174 : vector<8x128xf32>
    %208 = arith.mulf %192, %200 : vector<8x128xf32>
    %209 = arith.addf %207, %208 : vector<8x128xf32>
    %210 = math.tanh %209 : vector<8x128xf32>
    %211 = arith.mulf %206, %210 : vector<8x128xf32>
    %212 = arith.index_cast %c5_i32 : i32 to index
    %c0_52 = arith.constant 0 : index
    %c0_53 = arith.constant 0 : index
    %213 = vector.load %arg3[%212, %c0_52, %c0_53] : memref<8x8x128xf32, #tpu.memory_space<vmem>>, vector<1x8x128xf32>
    %214 = vector.shape_cast %213 : vector<1x8x128xf32> to vector<8x128xf32>
    %215 = vector.shape_cast %211 : vector<8x128xf32> to vector<1x8x128xf32>
    tpu.vector_store %arg3[%212, %c0_52, %c0_53], %215 {strides = array<i32>} : memref<8x8x128xf32, #tpu.memory_space<vmem>>, vector<1x8x128xf32>,
    %c6_i32 = arith.constant 6 : i32
    %216 = arith.index_cast %c6_i32 : i32 to index
    %c0_54 = arith.constant 0 : index
    %c0_55 = arith.constant 0 : index
    %217 = vector.load %arg1[%216, %c0_54, %c0_55] : memref<8x8x512xf32, #tpu.memory_space<vmem>>, vector<1x8x512xf32>
    %218 = vector.shape_cast %217 : vector<1x8x512xf32> to vector<8x512xf32>
    %219 = arith.truncf %211 : vector<8x128xf32> to vector<8x128xbf16>
    %cst_56 = arith.constant dense<0.000000e+00> : vector<8x512xf32>
    %220 = tpu.matmul %219, %3, %cst_56 {dimension_numbers = #tpu.dot_dimension_numbers<[1], [0], [0], [1], [0, 0, 1, 1], [], []>} : vector<8x128xbf16>, vector<128x512xbf16>, vector<8x512xf32> -> vector<8x512xf32>
    %221 = arith.addf %218, %220 : vector<8x512xf32>
    %222 = vector.extract_strided_slice %221 {offsets = [0, 0], sizes = [8, 128], strides = [1, 1]} : vector<8x512xf32> to vector<8x128xf32>
    %223 = arith.negf %222 : vector<8x128xf32>
    %224 = math.exp %223 : vector<8x128xf32>
    %cst_57 = arith.constant 1.000000e+00 : f32
    %225 = vector.broadcast %cst_57 : f32 to vector<8x128xf32>
    %226 = arith.addf %225, %224 : vector<8x128xf32>
    %227 = arith.divf %225, %226 : vector<8x128xf32>
    %228 = vector.extract_strided_slice %221 {offsets = [0, 128], sizes = [8, 128], strides = [1, 1]} : vector<8x512xf32> to vector<8x128xf32>
    %229 = arith.negf %228 : vector<8x128xf32>
    %230 = math.exp %229 : vector<8x128xf32>
    %cst_58 = arith.constant 1.000000e+00 : f32
    %231 = vector.broadcast %cst_58 : f32 to vector<8x128xf32>
    %232 = arith.addf %231, %230 : vector<8x128xf32>
    %233 = arith.divf %231, %232 : vector<8x128xf32>
    %234 = vector.extract_strided_slice %221 {offsets = [0, 256], sizes = [8, 128], strides = [1, 1]} : vector<8x512xf32> to vector<8x128xf32>
    %235 = math.tanh %234 : vector<8x128xf32>
    %236 = vector.extract_strided_slice %221 {offsets = [0, 384], sizes = [8, 128], strides = [1, 1]} : vector<8x512xf32> to vector<8x128xf32>
    %237 = arith.negf %236 : vector<8x128xf32>
    %238 = math.exp %237 : vector<8x128xf32>
    %cst_59 = arith.constant 1.000000e+00 : f32
    %239 = vector.broadcast %cst_59 : f32 to vector<8x128xf32>
    %240 = arith.addf %239, %238 : vector<8x128xf32>
    %241 = arith.divf %239, %240 : vector<8x128xf32>
    %242 = arith.mulf %233, %209 : vector<8x128xf32>
    %243 = arith.mulf %227, %235 : vector<8x128xf32>
    %244 = arith.addf %242, %243 : vector<8x128xf32>
    %245 = math.tanh %244 : vector<8x128xf32>
    %246 = arith.mulf %241, %245 : vector<8x128xf32>
    %247 = arith.index_cast %c6_i32 : i32 to index
    %c0_60 = arith.constant 0 : index
    %c0_61 = arith.constant 0 : index
    %248 = vector.load %arg3[%247, %c0_60, %c0_61] : memref<8x8x128xf32, #tpu.memory_space<vmem>>, vector<1x8x128xf32>
    %249 = vector.shape_cast %248 : vector<1x8x128xf32> to vector<8x128xf32>
    %250 = vector.shape_cast %246 : vector<8x128xf32> to vector<1x8x128xf32>
    tpu.vector_store %arg3[%247, %c0_60, %c0_61], %250 {strides = array<i32>} : memref<8x8x128xf32, #tpu.memory_space<vmem>>, vector<1x8x128xf32>,
    %c7_i32 = arith.constant 7 : i32
    %251 = arith.index_cast %c7_i32 : i32 to index
    %c0_62 = arith.constant 0 : index
    %c0_63 = arith.constant 0 : index
    %252 = vector.load %arg1[%251, %c0_62, %c0_63] : memref<8x8x512xf32, #tpu.memory_space<vmem>>, vector<1x8x512xf32>
    %253 = vector.shape_cast %252 : vector<1x8x512xf32> to vector<8x512xf32>
    %254 = arith.truncf %246 : vector<8x128xf32> to vector<8x128xbf16>
    %cst_64 = arith.constant dense<0.000000e+00> : vector<8x512xf32>
    %255 = tpu.matmul %254, %3, %cst_64 {dimension_numbers = #tpu.dot_dimension_numbers<[1], [0], [0], [1], [0, 0, 1, 1], [], []>} : vector<8x128xbf16>, vector<128x512xbf16>, vector<8x512xf32> -> vector<8x512xf32>
    %256 = arith.addf %253, %255 : vector<8x512xf32>
    %257 = vector.extract_strided_slice %256 {offsets = [0, 0], sizes = [8, 128], strides = [1, 1]} : vector<8x512xf32> to vector<8x128xf32>
    %258 = arith.negf %257 : vector<8x128xf32>
    %259 = math.exp %258 : vector<8x128xf32>
    %cst_65 = arith.constant 1.000000e+00 : f32
    %260 = vector.broadcast %cst_65 : f32 to vector<8x128xf32>
    %261 = arith.addf %260, %259 : vector<8x128xf32>
    %262 = arith.divf %260, %261 : vector<8x128xf32>
    %263 = vector.extract_strided_slice %256 {offsets = [0, 128], sizes = [8, 128], strides = [1, 1]} : vector<8x512xf32> to vector<8x128xf32>
    %264 = arith.negf %263 : vector<8x128xf32>
    %265 = math.exp %264 : vector<8x128xf32>
    %cst_66 = arith.constant 1.000000e+00 : f32
    %266 = vector.broadcast %cst_66 : f32 to vector<8x128xf32>
    %267 = arith.addf %266, %265 : vector<8x128xf32>
    %268 = arith.divf %266, %267 : vector<8x128xf32>
    %269 = vector.extract_strided_slice %256 {offsets = [0, 256], sizes = [8, 128], strides = [1, 1]} : vector<8x512xf32> to vector<8x128xf32>
    %270 = math.tanh %269 : vector<8x128xf32>
    %271 = vector.extract_strided_slice %256 {offsets = [0, 384], sizes = [8, 128], strides = [1, 1]} : vector<8x512xf32> to vector<8x128xf32>
    %272 = arith.negf %271 : vector<8x128xf32>
    %273 = math.exp %272 : vector<8x128xf32>
    %cst_67 = arith.constant 1.000000e+00 : f32
    %274 = vector.broadcast %cst_67 : f32 to vector<8x128xf32>
    %275 = arith.addf %274, %273 : vector<8x128xf32>
    %276 = arith.divf %274, %275 : vector<8x128xf32>
    %277 = arith.mulf %268, %244 : vector<8x128xf32>
    %278 = arith.mulf %262, %270 : vector<8x128xf32>
    %279 = arith.addf %277, %278 : vector<8x128xf32>
    %280 = math.tanh %279 : vector<8x128xf32>
    %281 = arith.mulf %276, %280 : vector<8x128xf32>
    %282 = arith.index_cast %c7_i32 : i32 to index
    %c0_68 = arith.constant 0 : index
    %c0_69 = arith.constant 0 : index
    %283 = vector.load %arg3[%282, %c0_68, %c0_69] : memref<8x8x128xf32, #tpu.memory_space<vmem>>, vector<1x8x128xf32>
    %284 = vector.shape_cast %283 : vector<1x8x128xf32> to vector<8x128xf32>
    %285 = vector.shape_cast %281 : vector<8x128xf32> to vector<1x8x128xf32>
    tpu.vector_store %arg3[%282, %c0_68, %c0_69], %285 {strides = array<i32>} : memref<8x8x128xf32, #tpu.memory_space<vmem>>, vector<1x8x128xf32>,
    %c8_i32 = arith.constant 8 : i32
    %c0_70 = arith.constant 0 : index
    %c0_71 = arith.constant 0 : index
    %286 = vector.load %arg4[%c0_70, %c0_71] : memref<8x128xf32, #tpu.memory_space<vmem>>, vector<8x128xf32>
    tpu.vector_store %arg4[%c0_70, %c0_71], %281 {strides = array<i32>} : memref<8x128xf32, #tpu.memory_space<vmem>>, vector<8x128xf32>,
    %c0_72 = arith.constant 0 : index
    %c0_73 = arith.constant 0 : index
    %287 = vector.load %arg5[%c0_72, %c0_73] : memref<8x128xf32, #tpu.memory_space<vmem>>, vector<8x128xf32>
    tpu.vector_store %arg5[%c0_72, %c0_73], %279 {strides = array<i32>} : memref<8x128xf32, #tpu.memory_space<vmem>>, vector<8x128xf32>,
    return
  }
  func.func @transform_0(%arg0: i32) -> (i32, i32, i32) {
    %c0_i32 = arith.constant 0 : i32
    %c0_i32_0 = arith.constant 0 : i32
    %c0_i32_1 = arith.constant 0 : i32
    return %arg0, %c0_i32, %c0_i32_0 : i32, i32, i32
  }
  func.func @transform_1(%arg0: i32) -> (i32, i32) {
    %c0_i32 = arith.constant 0 : i32
    %c0_i32_0 = arith.constant 0 : i32
    %c0_i32_1 = arith.constant 0 : i32
    return %c0_i32, %c0_i32_0 : i32, i32
  }
  func.func @transform_2(%arg0: i32) -> (i32, i32, i32) {
    %c0_i32 = arith.constant 0 : i32
    %c0_i32_0 = arith.constant 0 : i32
    %c0_i32_1 = arith.constant 0 : i32
    return %arg0, %c0_i32, %c0_i32_0 : i32, i32, i32
  }
}

module attributes {stable_mosaic.version = 11 : i64} {
  func.func @matmul_kernel(%arg0: i32, %arg1: i32, %arg2: i32, %arg3: memref<16x128xbf16, #tpu.memory_space<vmem>>, %arg4: memref<128x256xbf16, #tpu.memory_space<vmem>>, %arg5: memref<1x256xf32, #tpu.memory_space<vmem>>, %arg6: memref<16x256xf32, #tpu.memory_space<vmem>>, %arg7: memref<16x256xf32, #tpu.memory_space<vmem>>) attributes {dimension_semantics = [#tpu.dimension_semantics<parallel>, #tpu.dimension_semantics<parallel>, #tpu.dimension_semantics<arbitrary>], iteration_bounds = array<i64: 1, 1, 1>, scalar_prefetch = 0 : i64, scratch_operands = 1 : i64, tpu.core_type = #tpu.core_type<tc>, window_params = [{transform_indices = @transform_0, window_bounds = array<i64: 16, 128>}, {transform_indices = @transform_1, window_bounds = array<i64: 128, 256>}, {transform_indices = @transform_2, window_bounds = array<i64: 1, 256>}, {transform_indices = @transform_3, window_bounds = array<i64: 16, 256>}]} {
    %c0_i32 = arith.constant 0 : i32
    %0 = arith.cmpi eq, %arg2, %c0_i32 : i32
    %1 = arith.extui %0 : i1 to i32
    %c0_i32_0 = arith.constant 0 : i32
    %2 = arith.cmpi ne, %1, %c0_i32_0 : i32
    scf.if %2 {
      %cst_10 = arith.constant 0.000000e+00 : f32
      %12 = vector.broadcast %cst_10 : f32 to vector<16x256xf32>
      %c0_11 = arith.constant 0 : index
      %c0_12 = arith.constant 0 : index
      %13 = vector.load %arg7[%c0_11, %c0_12] : memref<16x256xf32, #tpu.memory_space<vmem>>, vector<16x256xf32>
      tpu.vector_store %arg7[%c0_11, %c0_12], %12 {strides = array<i32>} : memref<16x256xf32, #tpu.memory_space<vmem>>, vector<16x256xf32>,
    } else {
    }
    %c0 = arith.constant 0 : index
    %c0_1 = arith.constant 0 : index
    %3 = vector.load %arg7[%c0, %c0_1] : memref<16x256xf32, #tpu.memory_space<vmem>>, vector<16x256xf32>
    %c0_2 = arith.constant 0 : index
    %c0_3 = arith.constant 0 : index
    %4 = vector.load %arg3[%c0_2, %c0_3] : memref<16x128xbf16, #tpu.memory_space<vmem>>, vector<16x128xbf16>
    %c0_4 = arith.constant 0 : index
    %c0_5 = arith.constant 0 : index
    %5 = vector.load %arg4[%c0_4, %c0_5] : memref<128x256xbf16, #tpu.memory_space<vmem>>, vector<128x256xbf16>
    %cst = arith.constant dense<0.000000e+00> : vector<16x256xf32>
    %6 = tpu.matmul %4, %5, %cst {dimension_numbers = #tpu.dot_dimension_numbers<[1], [0], [0], [1], [0, 0, 1, 1], [], []>} : vector<16x128xbf16>, vector<128x256xbf16>, vector<16x256xf32> -> vector<16x256xf32>
    %7 = arith.addf %3, %6 : vector<16x256xf32>
    %c0_6 = arith.constant 0 : index
    %c0_7 = arith.constant 0 : index
    %8 = vector.load %arg7[%c0_6, %c0_7] : memref<16x256xf32, #tpu.memory_space<vmem>>, vector<16x256xf32>
    tpu.vector_store %arg7[%c0_6, %c0_7], %7 {strides = array<i32>} : memref<16x256xf32, #tpu.memory_space<vmem>>, vector<16x256xf32>,
    %c0_i32_8 = arith.constant 0 : i32
    %9 = arith.cmpi eq, %arg2, %c0_i32_8 : i32
    %10 = arith.extui %9 : i1 to i32
    %c0_i32_9 = arith.constant 0 : i32
    %11 = arith.cmpi ne, %10, %c0_i32_9 : i32
    scf.if %11 {
      %c0_10 = arith.constant 0 : index
      %c0_11 = arith.constant 0 : index
      %12 = vector.load %arg7[%c0_10, %c0_11] : memref<16x256xf32, #tpu.memory_space<vmem>>, vector<16x256xf32>
      %c0_12 = arith.constant 0 : index
      %c0_13 = arith.constant 0 : index
      %13 = vector.load %arg5[%c0_12, %c0_13] : memref<1x256xf32, #tpu.memory_space<vmem>>, vector<1x256xf32>
      %14 = vector.broadcast %13 : vector<1x256xf32> to vector<16x256xf32>
      %15 = arith.addf %12, %14 : vector<16x256xf32>
      %c0_14 = arith.constant 0 : index
      %c0_15 = arith.constant 0 : index
      %16 = vector.load %arg6[%c0_14, %c0_15] : memref<16x256xf32, #tpu.memory_space<vmem>>, vector<16x256xf32>
      tpu.vector_store %arg6[%c0_14, %c0_15], %15 {strides = array<i32>} : memref<16x256xf32, #tpu.memory_space<vmem>>, vector<16x256xf32>,
    } else {
    }
    return
  }
  func.func @transform_0(%arg0: i32, %arg1: i32, %arg2: i32) -> (i32, i32) {
    %c0_i32 = arith.constant 0 : i32
    return %arg0, %arg2 : i32, i32
  }
  func.func @transform_1(%arg0: i32, %arg1: i32, %arg2: i32) -> (i32, i32) {
    %c0_i32 = arith.constant 0 : i32
    return %arg2, %arg1 : i32, i32
  }
  func.func @transform_2(%arg0: i32, %arg1: i32, %arg2: i32) -> (i32, i32) {
    %c0_i32 = arith.constant 0 : i32
    %c0_i32_0 = arith.constant 0 : i32
    return %c0_i32, %arg1 : i32, i32
  }
  func.func @transform_3(%arg0: i32, %arg1: i32, %arg2: i32) -> (i32, i32) {
    %c0_i32 = arith.constant 0 : i32
    return %arg0, %arg1 : i32, i32
  }
}

</mosaic_0001>

<llo_original>
// kernel: captioning_forward.4
$region0: #{captioning_forward.4}
  #allocation0 [shape = 'u32[]', space=smem, size = 0x4, offset = 0x4, fixed_abs, tag = 'smem constant byte address 0x4 - core index']
  #allocation1 [shape = 'u32[72,128]{1,0:T(1,128)}', space=vmem, size = 0x9000, scoped, tag = 'internal scratch']
  #allocation2 [shape = 'f32[2,128]{1,0:T(2,128)}', space=vmem, size = 0x400, scoped, tag = 'scratch operand']
  %s0 = inlined_call_operand.vmem [shape: bf16[2,256,27], index: 0, kind: input, shape index: {}]
  %s1 = inlined_call_operand.vmem [shape: bf16[27,128], index: 1, kind: input, shape index: {}]
  %s2 = inlined_call_operand.vmem [shape: f32[1,128], index: 2, kind: input, shape index: {}]
  %s3 = inlined_call_operand.vmem [shape: bf16[128,128], index: 3, kind: input, shape index: {}]
  %s4 = inlined_call_operand.vmem [shape: f32[1,128], index: 4, kind: input, shape index: {}]
  %s5 = inlined_call_operand.vmem [shape: f32[2,128], index: 5, kind: output, shape index: {}]
  %s6 = sld [smem:[#allocation0]]
  $region102: #{captioning_forward.4} parent=0
    _
  %s8 = ssub.s32 1, %s6
  %s9 = scalar_select 0, %s8, %s6
  $region1: #{captioning_forward.4} parent=0
    #allocation3 [shape = 'u8[131072]{0}', space=vmem, size = 0x20000, scoped, tag = 'input window, operand 0']
    loop: start=0, step=1, limit=4
    $region2: #{captioning_forward.4} parent=1 // loop_pre_header
      _
    $region3: #{captioning_forward.4} parent=1 // loop_header
      %s11 = sphi 0, %s15
      %p12 = scmp.ge.s32.totalorder %s11, 4
      %s21 = sphi 0, %s23
      %s24 = sphi 0, %s21
      %s25 = sphi 0, %s24
      %s41 = sphi 0, %s25
      %s45 = sphi 0, %s45
      %s47 = sphi 0, %s45
      %s48 = sphi 0, %s47
      %s62 = sphi 0, %s48
      %s66 = sphi 0, %s66
      %s68 = sphi 0, %s66
      %s69 = sphi 0, %s68
      %s83 = sphi 0, %s69
      %s87 = sphi 0, %s87
      %s89 = sphi 0, %s87
      %s90 = sphi 0, %s89
      %s104 = sphi 0, %s90
      %s108 = sphi 0, %s108
      %s110 = sphi 0, %s108
      %s111 = sphi 0, %s110
      %s125 = sphi 0, %s111
      %s129 = sphi 0, %s129
      %s131 = sphi 0, %s129
      %s132 = sphi 0, %s131
      %s146 = sphi 0, %s132
    $region4: #{captioning_forward.4} parent=1 // loop_header_branch
      %14 = sbr.rel (%p12) target = $region8
    $region5: #{captioning_forward.4} parent=1 // loop_body
      %s16 = ssub.s32 %s11, 1
      %s17 = ssub.s32 %s11, 2
      %s18 = sadd.s32 %s11, 1
      %s19 = ssub.s32 %s11, %s18
      %p20 = scmp.eq.s32.totalorder %s19, 0
      %s22 = sadd.s32 %s21, 1
      %s23 = scalar_select %p20, %s21, %s22
      %p26 = pneg %p20
      %p27 = scmp.eq.s32.totalorder %s11, 1
      %p28 = por %p26, %p27
      %p29 = scmp.ne.s32.totalorder %s21, %s24
      %p30 = scmp.eq.s32.totalorder %s11, 0
      %p31 = por %p29, %p30
      %p32 = scmp.ne.s32.totalorder %s21, %s24
      %p33 = scmp.eq.s32.totalorder %s16, 1
      %p34 = por %p32, %p33
      %p35 = scmp.ne.s32.totalorder %s24, %s25
      %p36 = scmp.eq.s32.totalorder %s16, 0
      %p37 = por %p35, %p36
      %p38 = scmp.ne.s32.totalorder %s24, %s25
      %p39 = scmp.eq.s32.totalorder %s17, 1
      %p40 = por %p38, %p39
      %p42 = scmp.ne.s32.totalorder %s25, %s41
      %p43 = scmp.eq.s32.totalorder %s17, 0
      %p44 = por %p42, %p43
      %s46 = sadd.s32 %s45, 1
      %p49 = scmp.eq.s32.totalorder %s11, 1
      %p50 = scmp.ne.s32.totalorder %s45, %s47
      %p51 = scmp.eq.s32.totalorder %s11, 0
      %p52 = por %p50, %p51
      %p53 = scmp.ne.s32.totalorder %s45, %s47
      %p54 = scmp.eq.s32.totalorder %s16, 1
      %p55 = por %p53, %p54
      %p56 = scmp.ne.s32.totalorder %s47, %s48
      %p57 = scmp.eq.s32.totalorder %s16, 0
      %p58 = por %p56, %p57
      %p59 = scmp.ne.s32.totalorder %s47, %s48
      %p60 = scmp.eq.s32.totalorder %s17, 1
      %p61 = por %p59, %p60
      %p63 = scmp.ne.s32.totalorder %s48, %s62
      %p64 = scmp.eq.s32.totalorder %s17, 0
      %p65 = por %p63, %p64
      %s67 = sadd.s32 %s66, 1
      %p70 = scmp.eq.s32.totalorder %s11, 1
      %p71 = scmp.ne.s32.totalorder %s66, %s68
      %p72 = scmp.eq.s32.totalorder %s11, 0
      %p73 = por %p71, %p72
      %p74 = scmp.ne.s32.totalorder %s66, %s68
      %p75 = scmp.eq.s32.totalorder %s16, 1
      %p76 = por %p74, %p75
      %p77 = scmp.ne.s32.totalorder %s68, %s69
      %p78 = scmp.eq.s32.totalorder %s16, 0
      %p79 = por %p77, %p78
      %p80 = scmp.ne.s32.totalorder %s68, %s69
      %p81 = scmp.eq.s32.totalorder %s17, 1
      %p82 = por %p80, %p81
      %p84 = scmp.ne.s32.totalorder %s69, %s83
      %p85 = scmp.eq.s32.totalorder %s17, 0
      %p86 = por %p84, %p85
      %s88 = sadd.s32 %s87, 1
      %p91 = scmp.eq.s32.totalorder %s11, 1
      %p92 = scmp.ne.s32.totalorder %s87, %s89
      %p93 = scmp.eq.s32.totalorder %s11, 0
      %p94 = por %p92, %p93
      %p95 = scmp.ne.s32.totalorder %s87, %s89
      %p96 = scmp.eq.s32.totalorder %s16, 1
      %p97 = por %p95, %p96
      %p98 = scmp.ne.s32.totalorder %s89, %s90
      %p99 = scmp.eq.s32.totalorder %s16, 0
      %p100 = por %p98, %p99
      %p101 = scmp.ne.s32.totalorder %s89, %s90
      %p102 = scmp.eq.s32.totalorder %s17, 1
      %p103 = por %p101, %p102
      %p105 = scmp.ne.s32.totalorder %s90, %s104
      %p106 = scmp.eq.s32.totalorder %s17, 0
      %p107 = por %p105, %p106
      %s109 = sadd.s32 %s108, 1
      %p112 = scmp.eq.s32.totalorder %s11, 1
      %p113 = scmp.ne.s32.totalorder %s108, %s110
      %p114 = scmp.eq.s32.totalorder %s11, 0
      %p115 = por %p113, %p114
      %p116 = scmp.ne.s32.totalorder %s108, %s110
      %p117 = scmp.eq.s32.totalorder %s16, 1
      %p118 = por %p116, %p117
      %p119 = scmp.ne.s32.totalorder %s110, %s111
      %p120 = scmp.eq.s32.totalorder %s16, 0
      %p121 = por %p119, %p120
      %p122 = scmp.ne.s32.totalorder %s110, %s111
      %p123 = scmp.eq.s32.totalorder %s17, 1
      %p124 = por %p122, %p123
      %p126 = scmp.ne.s32.totalorder %s111, %s125
      %p127 = scmp.eq.s32.totalorder %s17, 0
      %p128 = por %p126, %p127
      %s130 = sadd.s32 %s129, 1
      %p133 = scmp.eq.s32.totalorder %s11, 1
      %p134 = scmp.ne.s32.totalorder %s129, %s131
      %p135 = scmp.eq.s32.totalorder %s11, 0
      %p136 = por %p134, %p135
      %p137 = scmp.ne.s32.totalorder %s129, %s131
      %p138 = scmp.eq.s32.totalorder %s16, 1
      %p139 = por %p137, %p138
      %p140 = scmp.ne.s32.totalorder %s131, %s132
      %p141 = scmp.eq.s32.totalorder %s16, 0
      %p142 = por %p140, %p141
      %p143 = scmp.ne.s32.totalorder %s131, %s132
      %p144 = scmp.eq.s32.totalorder %s17, 1
      %p145 = por %p143, %p144
      %p147 = scmp.ne.s32.totalorder %s132, %s146
      %p148 = scmp.eq.s32.totalorder %s17, 0
      %p149 = por %p147, %p148
      %p150 = scmp.le.s32.totalorder 1, %s11
      %p151 = scmp.lt.s32.totalorder %s11, 3
      %p152 = pnand %p150, %p151
      %p153 = pneg %p152
      // Predicated region
      $region9: #{captioning_forward.4} parent=5 // pred_check
        _
      $region10: #{captioning_forward.4} parent=5 // pred_check_branch
        %155 = sbr.rel (%p152) target = $region12
      $region11: #{captioning_forward.4} parent=5 // pred_region
        %s156 = ssub.s32 %s11, 1
        // Predicated region
        $region13: #{captioning_forward.4} parent=11 // pred_check
          %p157 = pneg %p58
        $region14: #{captioning_forward.4} parent=11 // pred_check_branch
          %159 = sbr.rel (%p157) target = $region16
        $region15: #{captioning_forward.4} parent=11 // pred_region
          _
        $region16: #{captioning_forward.4} parent=11 // pred_fallthru
          _
        // Predicated region
        $region17: #{captioning_forward.4} parent=11 // pred_check
          %p160 = pneg %p79
        $region18: #{captioning_forward.4} parent=11 // pred_check_branch
          %162 = sbr.rel (%p160) target = $region20
        $region19: #{captioning_forward.4} parent=11 // pred_region
          _
        $region20: #{captioning_forward.4} parent=11 // pred_fallthru
          _
        // Predicated region
        $region21: #{captioning_forward.4} parent=11 // pred_check
          %p163 = pneg %p100
        $region22: #{captioning_forward.4} parent=11 // pred_check_branch
          %165 = sbr.rel (%p163) target = $region24
        $region23: #{captioning_forward.4} parent=11 // pred_region
          _
        $region24: #{captioning_forward.4} parent=11 // pred_fallthru
          _
        // Predicated region
        $region25: #{captioning_forward.4} parent=11 // pred_check
          %p166 = pneg %p121
        $region26: #{captioning_forward.4} parent=11 // pred_check_branch
          %168 = sbr.rel (%p166) target = $region28
        $region27: #{captioning_forward.4} parent=11 // pred_region
          _
        $region28: #{captioning_forward.4} parent=11 // pred_fallthru
          _
      $region12: #{captioning_forward.4} parent=5 // pred_fallthru
        _
      %p169 = scmp.lt.s32.totalorder %s11, 2
      // Predicated region
      $region29: #{captioning_forward.4} parent=5 // pred_check
        %p170 = pneg %p169
      $region30: #{captioning_forward.4} parent=5 // pred_check_branch
        %172 = sbr.rel (%p170) target = $region32
      $region31: #{captioning_forward.4} parent=5 // pred_region
        // Predicated region
        $region33: #{captioning_forward.4} parent=31 // pred_check
          %p173 = pneg %p31
        $region34: #{captioning_forward.4} parent=31 // pred_check_branch
          %175 = sbr.rel (%p173) target = $region36
        $region35: #{captioning_forward.4} parent=31 // pred_region
          %s176 = sand.u32 %s21, 1
          %s177 = sand.u32 %s21, 1
          %s178 = smul.addr %s177, 128
          %s179 = scalar_lea.vmem [#allocation3], %s178
          %s180 = smul.u32 16, %s11
          %s181 = smul.addr %s180, 4
          %s182 = scalar_lea.vmem %s0, %s181
          // Predicated region
          $region37: #{captioning_forward.4} parent=35 // pred_check
            _
          $region38: #{captioning_forward.4} parent=35 // pred_check_branch
            %184 = sbr.rel (0) target = $region40
          $region39: #{captioning_forward.4} parent=35 // pred_region
            // Predicated region
            $region41: #{captioning_forward.4} parent=39 // pred_check
              _
            $region42: #{captioning_forward.4} parent=39 // pred_check_branch
              %186 = sbr.rel target = $region44
            $region43: #{captioning_forward.4} parent=39 // pred_region
              // Predicated region
              $region56: #{captioning_forward.4} parent=43 // pred_check
                _
              $region57: #{captioning_forward.4} parent=43 // pred_check_branch
                %264 = sbr.rel (0) target = $region59
              $region58: #{captioning_forward.4} parent=43 // pred_region
                loop: start=0, step=1, limit=1
                $region60: #{captioning_forward.4} parent=58 // loop_pre_header
                  _
                $region61: #{captioning_forward.4} parent=58 // loop_header
                  %s266 = sphi 0, %s270
                  %p267 = scmp.ge.s32.totalorder %s266, 1
                  %s271 = sphi %s182, %s182
                  %s272 = sphi %s179, %s179
                $region62: #{captioning_forward.4} parent=58 // loop_header_branch
                  %269 = sbr.rel (%p267) target = $region66
                $region63: #{captioning_forward.4} parent=58 // loop_body
                  _
                $region64: #{captioning_forward.4} parent=58 // loop_footer
                  %s270 = sadd.s32 1, %s266
                $region65: #{captioning_forward.4} parent=58 // loop_footer_branch
                  %265 = sbr.rel target = $region61
                $region66: #{captioning_forward.4} parent=58 // loop_exit
                  _
                %s274 = ssub.s32 16, 1
                loop: start=0, step=1, limit=1
                $region67: #{captioning_forward.4} parent=58 // loop_pre_header
                  _
                $region68: #{captioning_forward.4} parent=58 // loop_header
                  %s276 = sphi 0, %s280
                  %p277 = scmp.ge.s32.totalorder %s276, 1
                  %s281 = sphi %s182, %s182
                  %s282 = sphi %s179, %s179
                $region69: #{captioning_forward.4} parent=58 // loop_header_branch
                  %279 = sbr.rel (%p277) target = $region73
                $region70: #{captioning_forward.4} parent=58 // loop_body
                  %v283 = vld [vmem:[%s281] sm:%s274]
                  %284 = vst [vmem:[%s282] sm:%s274] %v283
                  %v285 = vld [vmem:[%s281 + $0x4] sm:%s274]
                  %286 = vst [vmem:[%s282 + $0x4] sm:%s274] %v285
                  %v287 = vld [vmem:[%s281 + $0x8] sm:%s274]
                  %288 = vst [vmem:[%s282 + $0x8] sm:%s274] %v287
                  %v289 = vld [vmem:[%s281 + $0xc] sm:%s274]
                  %290 = vst [vmem:[%s282 + $0xc] sm:%s274] %v289
                  %v291 = vld [vmem:[%s281 + $0x10] sm:%s274]
                  %292 = vst [vmem:[%s282 + $0x10] sm:%s274] %v291
                  %v293 = vld [vmem:[%s281 + $0x14] sm:%s274]
                  %294 = vst [vmem:[%s282 + $0x14] sm:%s274] %v293
                  %v295 = vld [vmem:[%s281 + $0x18] sm:%s274]
                  %296 = vst [vmem:[%s282 + $0x18] sm:%s274] %v295
                  %v297 = vld [vmem:[%s281 + $0x1c] sm:%s274]
                  %298 = vst [vmem:[%s282 + $0x1c] sm:%s274] %v297
                  %v299 = vld [vmem:[%s281 + $0x20] sm:%s274]
                  %300 = vst [vmem:[%s282 + $0x20] sm:%s274] %v299
                  %v301 = vld [vmem:[%s281 + $0x24] sm:%s274]
                  %302 = vst [vmem:[%s282 + $0x24] sm:%s274] %v301
                  %v303 = vld [vmem:[%s281 + $0x28] sm:%s274]
                  %304 = vst [vmem:[%s282 + $0x28] sm:%s274] %v303
                  %v305 = vld [vmem:[%s281 + $0x2c] sm:%s274]
                  %306 = vst [vmem:[%s282 + $0x2c] sm:%s274] %v305
                  %v307 = vld [vmem:[%s281 + $0x30] sm:%s274]
                  %308 = vst [vmem:[%s282 + $0x30] sm:%s274] %v307
                  %v309 = vld [vmem:[%s281 + $0x34] sm:%s274]
                  %310 = vst [vmem:[%s282 + $0x34] sm:%s274] %v309
                  %v311 = vld [vmem:[%s281 + $0x38] sm:%s274]
                  %312 = vst [vmem:[%s282 + $0x38] sm:%s274] %v311
                  %v313 = vld [vmem:[%s281 + $0x3c] sm:%s274]
                  %314 = vst [vmem:[%s282 + $0x3c] sm:%s274] %v313
                  %v315 = vld [vmem:[%s281 + $0x80] sm:%s274]
                  %316 = vst [vmem:[%s282 + $0x40] sm:%s274] %v315
                  %v317 = vld [vmem:[%s281 + $0x84] sm:%s274]
                  %318 = vst [vmem:[%s282 + $0x44] sm:%s274] %v317
                  %v319 = vld [vmem:[%s281 + $0x88] sm:%s274]
                  %320 = vst [vmem:[%s282 + $0x48] sm:%s274] %v319
                  %v321 = vld [vmem:[%s281 + $0x8c] sm:%s274]
                  %322 = vst [vmem:[%s282 + $0x4c] sm:%s274] %v321
                  %v323 = vld [vmem:[%s281 + $0x90] sm:%s274]
                  %324 = vst [vmem:[%s282 + $0x50] sm:%s274] %v323
                  %v325 = vld [vmem:[%s281 + $0x94] sm:%s274]
                  %326 = vst [vmem:[%s282 + $0x54] sm:%s274] %v325
                  %v327 = vld [vmem:[%s281 + $0x98] sm:%s274]
                  %328 = vst [vmem:[%s282 + $0x58] sm:%s274] %v327
                  %v329 = vld [vmem:[%s281 + $0x9c] sm:%s274]
                  %330 = vst [vmem:[%s282 + $0x5c] sm:%s274] %v329
                  %v331 = vld [vmem:[%s281 + $0xa0] sm:%s274]
                  %332 = vst [vmem:[%s282 + $0x60] sm:%s274] %v331
                  %v333 = vld [vmem:[%s281 + $0xa4] sm:%s274]
                  %334 = vst [vmem:[%s282 + $0x64] sm:%s274] %v333
                  %v335 = vld [vmem:[%s281 + $0xa8] sm:%s274]
                  %336 = vst [vmem:[%s282 + $0x68] sm:%s274] %v335
                  %v337 = vld [vmem:[%s281 + $0xac] sm:%s274]
                  %338 = vst [vmem:[%s282 + $0x6c] sm:%s274] %v337
                  %v339 = vld [vmem:[%s281 + $0xb0] sm:%s274]
                  %340 = vst [vmem:[%s282 + $0x70] sm:%s274] %v339
                  %v341 = vld [vmem:[%s281 + $0xb4] sm:%s274]
                  %342 = vst [vmem:[%s282 + $0x74] sm:%s274] %v341
                  %v343 = vld [vmem:[%s281 + $0xb8] sm:%s274]
                  %344 = vst [vmem:[%s282 + $0x78] sm:%s274] %v343
                  %v345 = vld [vmem:[%s281 + $0xbc] sm:%s274]
                  %346 = vst [vmem:[%s282 + $0x7c] sm:%s274] %v345
                $region71: #{captioning_forward.4} parent=58 // loop_footer
                  %s280 = sadd.s32 1, %s276
                $region72: #{captioning_forward.4} parent=58 // loop_footer_branch
                  %275 = sbr.rel target = $region68
                $region73: #{captioning_forward.4} parent=58 // loop_exit
                  _
              $region59: #{captioning_forward.4} parent=43 // pred_fallthru
                _
            $region44: #{captioning_forward.4} parent=39 // pred_fallthru
              _
            // Predicated region
            $region45: #{captioning_forward.4} parent=39 // pred_check
              _
            $region46: #{captioning_forward.4} parent=39 // pred_check_branch
              %188 = sbr.rel (0) target = $region48
            $region47: #{captioning_forward.4} parent=39 // pred_region
              %s190 = ssub.s32 16, 1
              loop: start=0, step=1, limit=1
              $region49: #{captioning_forward.4} parent=47 // loop_pre_header
                _
              $region50: #{captioning_forward.4} parent=47 // loop_header
                %s192 = sphi 0, %s196
                %p193 = scmp.ge.s32.totalorder %s192, 1
                %s197 = sphi %s182, %s182
                %s198 = sphi %s179, %s179
              $region51: #{captioning_forward.4} parent=47 // loop_header_branch
                %195 = sbr.rel (%p193) target = $region55
              $region52: #{captioning_forward.4} parent=47 // loop_body
                %v199 = vld [vmem:[%s197] sm:%s190]
                %200 = vst [vmem:[%s198] sm:%s190] %v199
                %v201 = vld [vmem:[%s197 + $0x4] sm:%s190]
                %202 = vst [vmem:[%s198 + $0x4] sm:%s190] %v201
                %v203 = vld [vmem:[%s197 + $0x8] sm:%s190]
                %204 = vst [vmem:[%s198 + $0x8] sm:%s190] %v203
                %v205 = vld [vmem:[%s197 + $0xc] sm:%s190]
                %206 = vst [vmem:[%s198 + $0xc] sm:%s190] %v205
                %v207 = vld [vmem:[%s197 + $0x10] sm:%s190]
                %208 = vst [vmem:[%s198 + $0x10] sm:%s190] %v207
                %v209 = vld [vmem:[%s197 + $0x14] sm:%s190]
                %210 = vst [vmem:[%s198 + $0x14] sm:%s190] %v209
                %v211 = vld [vmem:[%s197 + $0x18] sm:%s190]
                %212 = vst [vmem:[%s198 + $0x18] sm:%s190] %v211
                %v213 = vld [vmem:[%s197 + $0x1c] sm:%s190]
                %214 = vst [vmem:[%s198 + $0x1c] sm:%s190] %v213
                %v215 = vld [vmem:[%s197 + $0x20] sm:%s190]
                %216 = vst [vmem:[%s198 + $0x20] sm:%s190] %v215
                %v217 = vld [vmem:[%s197 + $0x24] sm:%s190]
                %218 = vst [vmem:[%s198 + $0x24] sm:%s190] %v217
                %v219 = vld [vmem:[%s197 + $0x28] sm:%s190]
                %220 = vst [vmem:[%s198 + $0x28] sm:%s190] %v219
                %v221 = vld [vmem:[%s197 + $0x2c] sm:%s190]
                %222 = vst [vmem:[%s198 + $0x2c] sm:%s190] %v221
                %v223 = vld [vmem:[%s197 + $0x30] sm:%s190]
                %224 = vst [vmem:[%s198 + $0x30] sm:%s190] %v223
                %v225 = vld [vmem:[%s197 + $0x34] sm:%s190]
                %226 = vst [vmem:[%s198 + $0x34] sm:%s190] %v225
                %v227 = vld [vmem:[%s197 + $0x38] sm:%s190]
                %228 = vst [vmem:[%s198 + $0x38] sm:%s190] %v227
                %v229 = vld [vmem:[%s197 + $0x3c] sm:%s190]
                %230 = vst [vmem:[%s198 + $0x3c] sm:%s190] %v229
                %v231 = vld [vmem:[%s197 + $0x80] sm:%s190]
                %232 = vst [vmem:[%s198 + $0x40] sm:%s190] %v231
                %v233 = vld [vmem:[%s197 + $0x84] sm:%s190]
                %234 = vst [vmem:[%s198 + $0x44] sm:%s190] %v233
                %v235 = vld [vmem:[%s197 + $0x88] sm:%s190]
                %236 = vst [vmem:[%s198 + $0x48] sm:%s190] %v235
                %v237 = vld [vmem:[%s197 + $0x8c] sm:%s190]
                %238 = vst [vmem:[%s198 + $0x4c] sm:%s190] %v237
                %v239 = vld [vmem:[%s197 + $0x90] sm:%s190]
                %240 = vst [vmem:[%s198 + $0x50] sm:%s190] %v239
                %v241 = vld [vmem:[%s197 + $0x94] sm:%s190]
                %242 = vst [vmem:[%s198 + $0x54] sm:%s190] %v241
                %v243 = vld [vmem:[%s197 + $0x98] sm:%s190]
                %244 = vst [vmem:[%s198 + $0x58] sm:%s190] %v243
                %v245 = vld [vmem:[%s197 + $0x9c] sm:%s190]
                %246 = vst [vmem:[%s198 + $0x5c] sm:%s190] %v245
                %v247 = vld [vmem:[%s197 + $0xa0] sm:%s190]
                %248 = vst [vmem:[%s198 + $0x60] sm:%s190] %v247
                %v249 = vld [vmem:[%s197 + $0xa4] sm:%s190]
                %250 = vst [vmem:[%s198 + $0x64] sm:%s190] %v249
                %v251 = vld [vmem:[%s197 + $0xa8] sm:%s190]
                %252 = vst [vmem:[%s198 + $0x68] sm:%s190] %v251
                %v253 = vld [vmem:[%s197 + $0xac] sm:%s190]
                %254 = vst [vmem:[%s198 + $0x6c] sm:%s190] %v253
                %v255 = vld [vmem:[%s197 + $0xb0] sm:%s190]
                %256 = vst [vmem:[%s198 + $0x70] sm:%s190] %v255
                %v257 = vld [vmem:[%s197 + $0xb4] sm:%s190]
                %258 = vst [vmem:[%s198 + $0x74] sm:%s190] %v257
                %v259 = vld [vmem:[%s197 + $0xb8] sm:%s190]
                %260 = vst [vmem:[%s198 + $0x78] sm:%s190] %v259
                %v261 = vld [vmem:[%s197 + $0xbc] sm:%s190]
                %262 = vst [vmem:[%s198 + $0x7c] sm:%s190] %v261
              $region53: #{captioning_forward.4} parent=47 // loop_footer
                %s196 = sadd.s32 1, %s192
              $region54: #{captioning_forward.4} parent=47 // loop_footer_branch
                %191 = sbr.rel target = $region50
              $region55: #{captioning_forward.4} parent=47 // loop_exit
                _
            $region48: #{captioning_forward.4} parent=39 // pred_fallthru
              _
          $region40: #{captioning_forward.4} parent=35 // pred_fallthru
            _
          %347 = vnop
        $region36: #{captioning_forward.4} parent=31 // pred_fallthru
          _
      $region32: #{captioning_forward.4} parent=5 // pred_fallthru
        _
      %p348 = scmp.le.s32.totalorder 1, %s11
      %p349 = scmp.lt.s32.totalorder %s11, 3
      %p350 = pnand %p348, %p349
      %p351 = pneg %p350
      // Predicated region
      $region74: #{captioning_forward.4} parent=5 // pred_check
        _
      $region75: #{captioning_forward.4} parent=5 // pred_check_branch
        %353 = sbr.rel (%p350) target = $region77
      $region76: #{captioning_forward.4} parent=5 // pred_region
        %s354 = ssub.s32 %s11, 1
        %s355 = sand.u32 %s24, 1
        %s356 = sand.u32 %s24, 1
        %s357 = smul.addr %s356, 128
        %s358 = scalar_lea.vmem [#allocation3], %s357
        // Predicated region
        $region78: #{captioning_forward.4} parent=76 // pred_check
          %p359 = pneg %p37
        $region79: #{captioning_forward.4} parent=76 // pred_check_branch
          %361 = sbr.rel (%p359) target = $region81
        $region80: #{captioning_forward.4} parent=76 // pred_region
          _
        $region81: #{captioning_forward.4} parent=76 // pred_fallthru
          _
        %s362 = sand.u32 %s24, 1
        %s363 = sand.u32 %s24, 1
        %s364 = smul.addr %s363, 128
        %s365 = scalar_lea.vmem [#allocation3], %s364
        %p366 = pneg %p37
        %p367 = pneg %p34
        %p368 = pneg %p58
        %p369 = pneg %p55
        %p370 = pneg %p79
        %p371 = pneg %p76
        %p372 = pneg %p100
        %p373 = pneg %p97
        %p374 = pneg %p121
        %p375 = pneg %p118
        %p376 = pneg %p142
        %p377 = pneg %p139
        %s378 = smul.u32 16, %s16
        %p380 = scmp.eq.s32.totalorder %s16, 0
        // Predicated region
        $region82: #{captioning_forward.4} parent=76 // pred_check
          %p381 = pneg %p380
        $region83: #{captioning_forward.4} parent=76 // pred_check_branch
          %383 = sbr.rel (%p381) target = $region85
        $region84: #{captioning_forward.4} parent=76 // pred_region
          %384 = vst [vmem:[#allocation2] sm:$0x3] 0.0
        $region85: #{captioning_forward.4} parent=76 // pred_fallthru
          _
        %v385 = vld [vmem:[%s358] sm:$0xf]
        %v386 = vld [vmem:[%s358 + $0x4] sm:$0xf]
        %v387 = vld [vmem:[%s358 + $0x8] sm:$0xf]
        %v388 = vld [vmem:[%s358 + $0xc] sm:$0xf]
        %v389 = vld [vmem:[%s358 + $0x10] sm:$0xf]
        %v390 = vld [vmem:[%s358 + $0x14] sm:$0xf]
        %v391 = vld [vmem:[%s358 + $0x18] sm:$0xf]
        %v392 = vld [vmem:[%s358 + $0x1c] sm:$0xf]
        %v393 = vld [vmem:[%s358 + $0x20] sm:$0xf]
        %v394 = vld [vmem:[%s358 + $0x24] sm:$0xf]
        %v395 = vld [vmem:[%s358 + $0x28] sm:$0xf]
        %v396 = vld [vmem:[%s358 + $0x2c] sm:$0xf]
        %v397 = vld [vmem:[%s358 + $0x30] sm:$0xf]
        %v398 = vld [vmem:[%s358 + $0x34] sm:$0xf]
        %v399 = vld [vmem:[%s358 + $0x38] sm:$0xf]
        %v400 = vld [vmem:[%s358 + $0x3c] sm:$0xf]
        %v401 = vld [vmem:[%s358 + $0x40] sm:$0xf]
        %v402 = vld [vmem:[%s358 + $0x44] sm:$0xf]
        %v403 = vld [vmem:[%s358 + $0x48] sm:$0xf]
        %v404 = vld [vmem:[%s358 + $0x4c] sm:$0xf]
        %v405 = vld [vmem:[%s358 + $0x50] sm:$0xf]
        %v406 = vld [vmem:[%s358 + $0x54] sm:$0xf]
        %v407 = vld [vmem:[%s358 + $0x58] sm:$0xf]
        %v408 = vld [vmem:[%s358 + $0x5c] sm:$0xf]
        %v409 = vld [vmem:[%s358 + $0x60] sm:$0xf]
        %v410 = vld [vmem:[%s358 + $0x64] sm:$0xf]
        %v411 = vld [vmem:[%s358 + $0x68] sm:$0xf]
        %v412 = vld [vmem:[%s358 + $0x6c] sm:$0xf]
        %v413 = vld [vmem:[%s358 + $0x70] sm:$0xf]
        %v414 = vld [vmem:[%s358 + $0x74] sm:$0xf]
        %v415 = vld [vmem:[%s358 + $0x78] sm:$0xf]
        %v416 = vld [vmem:[%s358 + $0x7c] sm:$0xf]
        %v417 = vld [vmem:[%s1] sm:$0xf]
        %v418 = vld [vmem:[%s1 + $0x4] sm:$0xf]
        %v419 = vld [vmem:[%s1 + $0x8] sm:$0xf]
        %v420 = vld [vmem:[%s1 + $0xc] sm:$0x3]
        %v421 = vld [vmem:[%s2] sm:$0x1]
        %v423 = vperm.slane %v421, 0
        %v457 = vunpack.c.l.b16 %v385
        %v458 = vunpack.c.l.b16 %v386
        %v459 = vunpack.c.l.b16 %v387
        %v460 = vunpack.c.l.b16 %v388
        %v461 = vunpack.c.l.b16 %v389
        %v462 = vunpack.c.l.b16 %v390
        %v463 = vunpack.c.l.b16 %v391
        %v464 = vunpack.c.l.b16 %v392
        %v465 = vunpack.c.l.b16 %v393
        %v466 = vunpack.c.l.b16 %v394
        %v467 = vunpack.c.l.b16 %v395
        %v468 = vunpack.c.l.b16 %v396
        %v469 = vunpack.c.l.b16 %v397
        %v470 = vunpack.c.l.b16 %v398
        %v471 = vunpack.c.l.b16 %v399
        %v472 = vunpack.c.l.b16 %v400
        %v473 = vunpack.c.l.b16 %v401
        %v474 = vunpack.c.l.b16 %v402
        %v475 = vunpack.c.l.b16 %v403
        %v476 = vunpack.c.l.b16 %v404
        %v477 = vunpack.c.l.b16 %v405
        %v478 = vunpack.c.l.b16 %v406
        %v479 = vunpack.c.l.b16 %v407
        %v480 = vunpack.c.l.b16 %v408
        %v481 = vunpack.c.l.b16 %v409
        %v482 = vunpack.c.l.b16 %v410
        %v483 = vunpack.c.l.b16 %v411
        %v484 = vunpack.c.l.b16 %v412
        %v485 = vunpack.c.l.b16 %v413
        %v486 = vunpack.c.l.b16 %v414
        %v487 = vunpack.c.l.b16 %v415
        %v488 = vunpack.c.l.b16 %v416
        %v489 = vpack.c.b16 %v458, %v457
        %v490 = vpack.c.b16 %v460, %v459
        %v491 = vpack.c.b16 %v462, %v461
        %v492 = vpack.c.b16 %v464, %v463
        %v493 = vpack.c.b16 %v466, %v465
        %v494 = vpack.c.b16 %v468, %v467
        %v495 = vpack.c.b16 %v470, %v469
        %v496 = vpack.c.b16 %v472, %v471
        %v497 = vpack.c.b16 %v474, %v473
        %v498 = vpack.c.b16 %v476, %v475
        %v499 = vpack.c.b16 %v478, %v477
        %v500 = vpack.c.b16 %v480, %v479
        %v501 = vpack.c.b16 %v482, %v481
        %v502 = vpack.c.b16 %v484, %v483
        %v503 = vpack.c.b16 %v486, %v485
        %v504 = vpack.c.b16 %v488, %v487
        %v509 = vunpack.c.l.b16 %v417
        %v510 = vunpack.c.l.b16 %v418
        %v511 = vunpack.c.l.b16 %v419
        %v512 = vunpack.c.l.b16 %v420
        %v513 = vpack.c.b16 %v510, %v509
        %v514 = vpack.c.b16 %v512, %v511
        %vm516 = vcmask 220160
        %v518 = vsel %vm516, %v489, 0
        %v521 = vsel %vm516, %v490, 0
        %v524 = vsel %vm516, %v491, 0
        %v527 = vsel %vm516, %v492, 0
        %v530 = vsel %vm516, %v493, 0
        %v533 = vsel %vm516, %v494, 0
        %v536 = vsel %vm516, %v495, 0
        %v539 = vsel %vm516, %v496, 0
        %v542 = vsel %vm516, %v497, 0
        %v545 = vsel %vm516, %v498, 0
        %v548 = vsel %vm516, %v499, 0
        %v551 = vsel %vm516, %v500, 0
        %v554 = vsel %vm516, %v501, 0
        %v557 = vsel %vm516, %v502, 0
        %v560 = vsel %vm516, %v503, 0
        %v563 = vsel %vm516, %v504, 0
        %vm565 = vcmask 1044480
        %vm566 = vcmask 1045504
        %v567 = vsel %vm565, 4294967295, 65535
        %v568 = vsel %vm566, %v567, 0
        %v570 = vand.u32 %v514, %v568
        %572 = vmatpush.bf16.msra.mxu0 0
        %573 = vmatpush.bf16.msra.mxu0 0
        %574 = vmatpush.bf16.msra.mxu0 0
        %575 = vmatpush.bf16.msra.mxu0 0
        %576 = vmatpush.bf16.msra.mxu0 0
        %577 = vmatpush.bf16.msra.mxu0 0
        %578 = vmatpush.bf16.msra.mxu0 %v570
        %579 = vmatpush.bf16.msra.mxu0 %v513
        %580 = vmatmul.bf16.gmra.mxu0 %v518
        %v581 = vpop.f32.mrf.mxu0
        %v582 = vadd.f32 %v423, %v581
        %v583 = vpop.f32.mrf.mxu0
        %v584 = vadd.f32 %v423, %v583
        %585 = vmatmul.bf16.gmra.mxu0 %v521
        %v586 = vpop.f32.mrf.mxu0
        %v587 = vadd.f32 %v423, %v586
        %v588 = vpop.f32.mrf.mxu0
        %v589 = vadd.f32 %v423, %v588
        %590 = vmatmul.bf16.gmra.mxu0 %v524
        %v591 = vpop.f32.mrf.mxu0
        %v592 = vadd.f32 %v423, %v591
        %v593 = vpop.f32.mrf.mxu0
        %v594 = vadd.f32 %v423, %v593
        %595 = vmatmul.bf16.gmra.mxu0 %v527
        %v596 = vpop.f32.mrf.mxu0
        %v597 = vadd.f32 %v423, %v596
        %v598 = vpop.f32.mrf.mxu0
        %v599 = vadd.f32 %v423, %v598
        %600 = vmatmul.bf16.gmra.mxu0 %v530
        %v601 = vpop.f32.mrf.mxu0
        %v602 = vadd.f32 %v423, %v601
        %v603 = vpop.f32.mrf.mxu0
        %v604 = vadd.f32 %v423, %v603
        %605 = vmatmul.bf16.gmra.mxu0 %v533
        %v606 = vpop.f32.mrf.mxu0
        %v607 = vadd.f32 %v423, %v606
        %v608 = vpop.f32.mrf.mxu0
        %v609 = vadd.f32 %v423, %v608
        %610 = vmatmul.bf16.gmra.mxu0 %v536
        %v611 = vpop.f32.mrf.mxu0
        %v612 = vadd.f32 %v423, %v611
        %v613 = vpop.f32.mrf.mxu0
        %v614 = vadd.f32 %v423, %v613
        %615 = vmatmul.bf16.gmra.mxu0 %v539
        %v616 = vpop.f32.mrf.mxu0
        %v617 = vadd.f32 %v423, %v616
        %v618 = vpop.f32.mrf.mxu0
        %v619 = vadd.f32 %v423, %v618
        %620 = vmatmul.bf16.gmra.mxu0 %v542
        %v621 = vpop.f32.mrf.mxu0
        %v622 = vadd.f32 %v423, %v621
        %v623 = vpop.f32.mrf.mxu0
        %v624 = vadd.f32 %v423, %v623
        %625 = vmatmul.bf16.gmra.mxu0 %v545
        %v626 = vpop.f32.mrf.mxu0
        %v627 = vadd.f32 %v423, %v626
        %v628 = vpop.f32.mrf.mxu0
        %v629 = vadd.f32 %v423, %v628
        %630 = vmatmul.bf16.gmra.mxu0 %v548
        %v631 = vpop.f32.mrf.mxu0
        %v632 = vadd.f32 %v423, %v631
        %v633 = vpop.f32.mrf.mxu0
        %v634 = vadd.f32 %v423, %v633
        %635 = vmatmul.bf16.gmra.mxu0 %v551
        %v636 = vpop.f32.mrf.mxu0
        %v637 = vadd.f32 %v423, %v636
        %v638 = vpop.f32.mrf.mxu0
        %v639 = vadd.f32 %v423, %v638
        %640 = vmatmul.bf16.gmra.mxu0 %v554
        %v641 = vpop.f32.mrf.mxu0
        %v642 = vadd.f32 %v423, %v641
        %v643 = vpop.f32.mrf.mxu0
        %v644 = vadd.f32 %v423, %v643
        %645 = vmatmul.bf16.gmra.mxu0 %v557
        %v646 = vpop.f32.mrf.mxu0
        %v647 = vadd.f32 %v423, %v646
        %v648 = vpop.f32.mrf.mxu0
        %v649 = vadd.f32 %v423, %v648
        %650 = vmatmul.bf16.gmra.mxu0 %v560
        %v651 = vpop.f32.mrf.mxu0
        %v652 = vadd.f32 %v423, %v651
        %v653 = vpop.f32.mrf.mxu0
        %v654 = vadd.f32 %v423, %v653
        %655 = vmatmul.bf16.gmra.mxu0 %v563
        %v656 = vpop.f32.mrf.mxu0
        %v657 = vadd.f32 %v423, %v656
        %v658 = vpop.f32.mrf.mxu0
        %v659 = vadd.f32 %v423, %v658
        %660 = vdwg.mxu0
        %v661 = vmax.f32 %v582, 0.0
        %v662 = vmax.f32 %v584, 0.0
        %v663 = vmax.f32 %v587, 0.0
        %v664 = vmax.f32 %v589, 0.0
        %v665 = vmax.f32 %v592, 0.0
        %v666 = vmax.f32 %v594, 0.0
        %v667 = vmax.f32 %v597, 0.0
        %v668 = vmax.f32 %v599, 0.0
        %v669 = vmax.f32 %v602, 0.0
        %v670 = vmax.f32 %v604, 0.0
        %v671 = vmax.f32 %v607, 0.0
        %v672 = vmax.f32 %v609, 0.0
        %v673 = vmax.f32 %v612, 0.0
        %v674 = vmax.f32 %v614, 0.0
        %v675 = vmax.f32 %v617, 0.0
        %v676 = vmax.f32 %v619, 0.0
        %v677 = vmax.f32 %v622, 0.0
        %v678 = vmax.f32 %v624, 0.0
        %v679 = vmax.f32 %v627, 0.0
        %v680 = vmax.f32 %v629, 0.0
        %v681 = vmax.f32 %v632, 0.0
        %v682 = vmax.f32 %v634, 0.0
        %v683 = vmax.f32 %v637, 0.0
        %v684 = vmax.f32 %v639, 0.0
        %v685 = vmax.f32 %v642, 0.0
        %v686 = vmax.f32 %v644, 0.0
        %v687 = vmax.f32 %v647, 0.0
        %v688 = vmax.f32 %v649, 0.0
        %v689 = vmax.f32 %v652, 0.0
        %v690 = vmax.f32 %v654, 0.0
        %v691 = vmax.f32 %v657, 0.0
        %v692 = vmax.f32 %v659, 0.0
        %v693 = vld [vmem:[#allocation2] sm:$0x3]
        %v694 = vadd.f32 %v661, %v662
        %v695 = vadd.f32 %v694, %v663
        %v696 = vadd.f32 %v695, %v664
        %v697 = vadd.f32 %v696, %v665
        %v698 = vadd.f32 %v697, %v666
        %v699 = vadd.f32 %v698, %v667
        %v700 = vadd.f32 %v699, %v668
        %v701 = vadd.f32 %v700, %v669
        %v702 = vadd.f32 %v701, %v670
        %v703 = vadd.f32 %v702, %v671
        %v704 = vadd.f32 %v703, %v672
        %v705 = vadd.f32 %v704, %v673
        %v706 = vadd.f32 %v705, %v674
        %v707 = vadd.f32 %v706, %v675
        %v708 = vadd.f32 %v707, %v676
        %v709 = vrot.slane %v708, 4
        %v710 = vadd.f32 %v708, %v709
        %v711 = vrot.slane %v710, 2
        %v712 = vadd.f32 %v710, %v711
        %v713 = vrot.slane %v712, 1
        %v714 = vadd.f32 %v712, %v713
        %v715 = vadd.f32 %v677, %v678
        %v716 = vadd.f32 %v715, %v679
        %v717 = vadd.f32 %v716, %v680
        %v718 = vadd.f32 %v717, %v681
        %v719 = vadd.f32 %v718, %v682
        %v720 = vadd.f32 %v719, %v683
        %v721 = vadd.f32 %v720, %v684
        %v722 = vadd.f32 %v721, %v685
        %v723 = vadd.f32 %v722, %v686
        %v724 = vadd.f32 %v723, %v687
        %v725 = vadd.f32 %v724, %v688
        %v726 = vadd.f32 %v725, %v689
        %v727 = vadd.f32 %v726, %v690
        %v728 = vadd.f32 %v727, %v691
        %v729 = vadd.f32 %v728, %v692
        %v730 = vrot.slane %v729, 4
        %v731 = vadd.f32 %v729, %v730
        %v732 = vrot.slane %v731, 2
        %v733 = vadd.f32 %v731, %v732
        %v734 = vrot.slane %v733, 1
        %v735 = vadd.f32 %v733, %v734
        %vm738 = vcmask 1041409
        %v739 = vsel %vm738, %v735, %v714
        %v741 = vadd.f32 %v693, %v739
        %742 = vst [vmem:[#allocation2] sm:$0x3] %v741
        %p743 = scmp.eq.s32.totalorder %s16, 1
        // Predicated region
        $region86: #{captioning_forward.4} parent=76 // pred_check
          %p744 = pneg %p743
        $region87: #{captioning_forward.4} parent=76 // pred_check_branch
          %746 = sbr.rel (%p744) target = $region89
        $region88: #{captioning_forward.4} parent=76 // pred_region
          %v747 = vld [vmem:[#allocation2] sm:$0x3]
          %v748 = vmul.f32 %v747, 0.00390625
          %v749 = vpack.c.bf16 %v748, %v748
          %v750 = vld [vmem:[%s3] sm:$0xf]
          %v751 = vld [vmem:[%s3 + $0x4] sm:$0xf]
          %v752 = vld [vmem:[%s3 + $0x8] sm:$0xf]
          %v753 = vld [vmem:[%s3 + $0xc] sm:$0xf]
          %v754 = vld [vmem:[%s3 + $0x10] sm:$0xf]
          %v755 = vld [vmem:[%s3 + $0x14] sm:$0xf]
          %v756 = vld [vmem:[%s3 + $0x18] sm:$0xf]
          %v757 = vld [vmem:[%s3 + $0x1c] sm:$0xf]
          %v758 = vld [vmem:[%s3 + $0x20] sm:$0xf]
          %v759 = vld [vmem:[%s3 + $0x24] sm:$0xf]
          %v760 = vld [vmem:[%s3 + $0x28] sm:$0xf]
          %v761 = vld [vmem:[%s3 + $0x2c] sm:$0xf]
          %v762 = vld [vmem:[%s3 + $0x30] sm:$0xf]
          %v763 = vld [vmem:[%s3 + $0x34] sm:$0xf]
          %v764 = vld [vmem:[%s3 + $0x38] sm:$0xf]
          %v765 = vld [vmem:[%s3 + $0x3c] sm:$0xf]
          %v766 = vld [vmem:[%s4] sm:$0x1]
          %v768 = vperm.slane %v766, 0
          %v786 = vunpack.c.l.b16 %v750
          %v787 = vunpack.c.l.b16 %v751
          %v788 = vunpack.c.l.b16 %v752
          %v789 = vunpack.c.l.b16 %v753
          %v790 = vunpack.c.l.b16 %v754
          %v791 = vunpack.c.l.b16 %v755
          %v792 = vunpack.c.l.b16 %v756
          %v793 = vunpack.c.l.b16 %v757
          %v794 = vunpack.c.l.b16 %v758
          %v795 = vunpack.c.l.b16 %v759
          %v796 = vunpack.c.l.b16 %v760
          %v797 = vunpack.c.l.b16 %v761
          %v798 = vunpack.c.l.b16 %v762
          %v799 = vunpack.c.l.b16 %v763
          %v800 = vunpack.c.l.b16 %v764
          %v801 = vunpack.c.l.b16 %v765
          %v802 = vpack.c.b16 %v787, %v786
          %v803 = vpack.c.b16 %v789, %v788
          %v804 = vpack.c.b16 %v791, %v790
          %v805 = vpack.c.b16 %v793, %v792
          %v806 = vpack.c.b16 %v795, %v794
          %v807 = vpack.c.b16 %v797, %v796
          %v808 = vpack.c.b16 %v799, %v798
          %v809 = vpack.c.b16 %v801, %v800
          %818 = vmatpush.bf16.msra.mxu0 %v809
          %819 = vmatpush.bf16.msra.mxu0 %v808
          %820 = vmatpush.bf16.msra.mxu0 %v807
          %821 = vmatpush.bf16.msra.mxu0 %v806
          %822 = vmatpush.bf16.msra.mxu0 %v805
          %823 = vmatpush.bf16.msra.mxu0 %v804
          %824 = vmatpush.bf16.msra.mxu0 %v803
          %825 = vmatpush.bf16.msra.mxu0 %v802
          %826 = vmatmul.bf16.gmra.mxu0 %v749
          %v827 = vpop.f32.mrf.mxu0
          %v828 = vadd.f32 %v768, %v827
          %v829 = vpop.f32.mrf.mxu0
          %830 = vdwg.mxu0
          %831 = vst [vmem:[%s5] sm:$0x3] %v828
        $region89: #{captioning_forward.4} parent=76 // pred_fallthru
          _
        // Predicated region
        $region90: #{captioning_forward.4} parent=76 // pred_check
          %p832 = pneg %p139
        $region91: #{captioning_forward.4} parent=76 // pred_check_branch
          %834 = sbr.rel (%p832) target = $region93
        $region92: #{captioning_forward.4} parent=76 // pred_region
          _
        $region93: #{captioning_forward.4} parent=76 // pred_fallthru
          _
        // Predicated region
        $region94: #{captioning_forward.4} parent=76 // pred_check
          %p835 = pneg %p139
        $region95: #{captioning_forward.4} parent=76 // pred_check_branch
          %837 = sbr.rel (%p835) target = $region97
        $region96: #{captioning_forward.4} parent=76 // pred_region
          _
        $region97: #{captioning_forward.4} parent=76 // pred_fallthru
          _
      $region77: #{captioning_forward.4} parent=5 // pred_fallthru
        _
      %p838 = scmp.le.s32.totalorder 2, %s11
      // Predicated region
      $region98: #{captioning_forward.4} parent=5 // pred_check
        %p839 = pneg %p838
      $region99: #{captioning_forward.4} parent=5 // pred_check_branch
        %841 = sbr.rel (%p839) target = $region101
      $region100: #{captioning_forward.4} parent=5 // pred_region
        %s842 = ssub.s32 %s11, 2
      $region101: #{captioning_forward.4} parent=5 // pred_fallthru
        _
    $region6: #{captioning_forward.4} parent=1 // loop_footer
      %s15 = sadd.s32 1, %s11
    $region7: #{captioning_forward.4} parent=1 // loop_footer_branch
      %10 = sbr.rel target = $region3
    $region8: #{captioning_forward.4} parent=1 // loop_exit
      _

// kernel: captioning_forward.5
$region0: #{captioning_forward.5}
  #allocation0 [shape = 'u32[]', space=smem, size = 0x4, offset = 0x4, fixed_abs, tag = 'smem constant byte address 0x4 - core index']
  #allocation1 [shape = 'u32[72,128]{1,0:T(1,128)}', space=vmem, size = 0x9000, scoped, tag = 'internal scratch']
  #allocation2 [shape = 'f32[64,512]{1,0:T(8,128)}', space=vmem, size = 0x20000, scoped, tag = 'scratch operand']
  %s0 = inlined_call_operand.vmem [shape: bf16[64,128], index: 0, kind: input, shape index: {}]
  %s1 = inlined_call_operand.vmem [shape: bf16[128,512], index: 1, kind: input, shape index: {}]
  %s2 = inlined_call_operand.vmem [shape: f32[1,512], index: 2, kind: input, shape index: {}]
  %s3 = inlined_call_operand.vmem [shape: f32[64,512], index: 3, kind: output, shape index: {}]
  %s4 = sld [smem:[#allocation0]]
  $region30: #{captioning_forward.5} parent=0
    _
  %s6 = ssub.s32 1, %s4
  %s7 = scalar_select 0, %s6, %s4
  // Predicated region
  $region2: #{captioning_forward.5} parent=0 // pred_check
    _
  $region3: #{captioning_forward.5} parent=0 // pred_check_branch
    %9 = sbr.rel (0) target = $region5
  $region4: #{captioning_forward.5} parent=0 // pred_region
    _
  $region5: #{captioning_forward.5} parent=0 // pred_fallthru
    _
  // Predicated region
  $region6: #{captioning_forward.5} parent=0 // pred_check
    _
  $region7: #{captioning_forward.5} parent=0 // pred_check_branch
    %11 = sbr.rel (0) target = $region9
  $region8: #{captioning_forward.5} parent=0 // pred_region
    _
  $region9: #{captioning_forward.5} parent=0 // pred_fallthru
    _
  // Predicated region
  $region10: #{captioning_forward.5} parent=0 // pred_check
    _
  $region11: #{captioning_forward.5} parent=0 // pred_check_branch
    %13 = sbr.rel (0) target = $region13
  $region12: #{captioning_forward.5} parent=0 // pred_region
    _
  $region13: #{captioning_forward.5} parent=0 // pred_fallthru
    _
  %p14 = scmp.eq.s32.totalorder 0, 0
  // Predicated region
  $region14: #{captioning_forward.5} parent=0 // pred_check
    %p15 = pneg %p14
  $region15: #{captioning_forward.5} parent=0 // pred_check_branch
    %17 = sbr.rel (%p15) target = $region17
  $region16: #{captioning_forward.5} parent=0 // pred_region
    %18 = vst [vmem:[#allocation2] sm:$0xff] 0.0
    %19 = vst [vmem:[#allocation2 + $0x8] sm:$0xff] 0.0
    %20 = vst [vmem:[#allocation2 + $0x10] sm:$0xff] 0.0
    %21 = vst [vmem:[#allocation2 + $0x18] sm:$0xff] 0.0
    %22 = vst [vmem:[#allocation2 + $0x20] sm:$0xff] 0.0
    %23 = vst [vmem:[#allocation2 + $0x28] sm:$0xff] 0.0
    %24 = vst [vmem:[#allocation2 + $0x30] sm:$0xff] 0.0
    %25 = vst [vmem:[#allocation2 + $0x38] sm:$0xff] 0.0
    %26 = vst [vmem:[#allocation2 + $0x40] sm:$0xff] 0.0
    %27 = vst [vmem:[#allocation2 + $0x48] sm:$0xff] 0.0
    %28 = vst [vmem:[#allocation2 + $0x50] sm:$0xff] 0.0
    %29 = vst [vmem:[#allocation2 + $0x58] sm:$0xff] 0.0
    %30 = vst [vmem:[#allocation2 + $0x60] sm:$0xff] 0.0
    %31 = vst [vmem:[#allocation2 + $0x68] sm:$0xff] 0.0
    %32 = vst [vmem:[#allocation2 + $0x70] sm:$0xff] 0.0
    %33 = vst [vmem:[#allocation2 + $0x78] sm:$0xff] 0.0
    %34 = vst [vmem:[#allocation2 + $0x80] sm:$0xff] 0.0
    %35 = vst [vmem:[#allocation2 + $0x88] sm:$0xff] 0.0
    %36 = vst [vmem:[#allocation2 + $0x90] sm:$0xff] 0.0
    %37 = vst [vmem:[#allocation2 + $0x98] sm:$0xff] 0.0
    %38 = vst [vmem:[#allocation2 + $0xa0] sm:$0xff] 0.0
    %39 = vst [vmem:[#allocation2 + $0xa8] sm:$0xff] 0.0
    %40 = vst [vmem:[#allocation2 + $0xb0] sm:$0xff] 0.0
    %41 = vst [vmem:[#allocation2 + $0xb8] sm:$0xff] 0.0
    %42 = vst [vmem:[#allocation2 + $0xc0] sm:$0xff] 0.0
    %43 = vst [vmem:[#allocation2 + $0xc8] sm:$0xff] 0.0
    %44 = vst [vmem:[#allocation2 + $0xd0] sm:$0xff] 0.0
    %45 = vst [vmem:[#allocation2 + $0xd8] sm:$0xff] 0.0
    %46 = vst [vmem:[#allocation2 + $0xe0] sm:$0xff] 0.0
    %47 = vst [vmem:[#allocation2 + $0xe8] sm:$0xff] 0.0
    %48 = vst [vmem:[#allocation2 + $0xf0] sm:$0xff] 0.0
    %49 = vst [vmem:[#allocation2 + $0xf8] sm:$0xff] 0.0
  $region17: #{captioning_forward.5} parent=0 // pred_fallthru
    _
  %v50 = vld [vmem:[#allocation2] sm:$0xff]
  %v51 = vld [vmem:[#allocation2 + $0x8] sm:$0xff]
  %v52 = vld [vmem:[#allocation2 + $0x10] sm:$0xff]
  %v53 = vld [vmem:[#allocation2 + $0x18] sm:$0xff]
  %v54 = vld [vmem:[#allocation2 + $0x20] sm:$0xff]
  %v55 = vld [vmem:[#allocation2 + $0x28] sm:$0xff]
  %v56 = vld [vmem:[#allocation2 + $0x30] sm:$0xff]
  %v57 = vld [vmem:[#allocation2 + $0x38] sm:$0xff]
  %v58 = vld [vmem:[#allocation2 + $0x40] sm:$0xff]
  %v59 = vld [vmem:[#allocation2 + $0x48] sm:$0xff]
  %v60 = vld [vmem:[#allocation2 + $0x50] sm:$0xff]
  %v61 = vld [vmem:[#allocation2 + $0x58] sm:$0xff]
  %v62 = vld [vmem:[#allocation2 + $0x60] sm:$0xff]
  %v63 = vld [vmem:[#allocation2 + $0x68] sm:$0xff]
  %v64 = vld [vmem:[#allocation2 + $0x70] sm:$0xff]
  %v65 = vld [vmem:[#allocation2 + $0x78] sm:$0xff]
  %v66 = vld [vmem:[#allocation2 + $0x80] sm:$0xff]
  %v67 = vld [vmem:[#allocation2 + $0x88] sm:$0xff]
  %v68 = vld [vmem:[#allocation2 + $0x90] sm:$0xff]
  %v69 = vld [vmem:[#allocation2 + $0x98] sm:$0xff]
  %v70 = vld [vmem:[#allocation2 + $0xa0] sm:$0xff]
  %v71 = vld [vmem:[#allocation2 + $0xa8] sm:$0xff]
  %v72 = vld [vmem:[#allocation2 + $0xb0] sm:$0xff]
  %v73 = vld [vmem:[#allocation2 + $0xb8] sm:$0xff]
  %v74 = vld [vmem:[#allocation2 + $0xc0] sm:$0xff]
  %v75 = vld [vmem:[#allocation2 + $0xc8] sm:$0xff]
  %v76 = vld [vmem:[#allocation2 + $0xd0] sm:$0xff]
  %v77 = vld [vmem:[#allocation2 + $0xd8] sm:$0xff]
  %v78 = vld [vmem:[#allocation2 + $0xe0] sm:$0xff]
  %v79 = vld [vmem:[#allocation2 + $0xe8] sm:$0xff]
  %v80 = vld [vmem:[#allocation2 + $0xf0] sm:$0xff]
  %v81 = vld [vmem:[#allocation2 + $0xf8] sm:$0xff]
  %v82 = vld [vmem:[%s0] sm:$0xf]
  %v83 = vld [vmem:[%s0 + $0x4] sm:$0xf]
  %v84 = vld [vmem:[%s0 + $0x8] sm:$0xf]
  %v85 = vld [vmem:[%s0 + $0xc] sm:$0xf]
  %v86 = vld [vmem:[%s0 + $0x10] sm:$0xf]
  %v87 = vld [vmem:[%s0 + $0x14] sm:$0xf]
  %v88 = vld [vmem:[%s0 + $0x18] sm:$0xf]
  %v89 = vld [vmem:[%s0 + $0x1c] sm:$0xf]
  %v90 = vld [vmem:[%s1] sm:$0xff]
  %v91 = vld [vmem:[%s1 + $0x8] sm:$0xff]
  %v92 = vld [vmem:[%s1 + $0x10] sm:$0xff]
  %v93 = vld [vmem:[%s1 + $0x18] sm:$0xff]
  %v94 = vld [vmem:[%s1 + $0x20] sm:$0xff]
  %v95 = vld [vmem:[%s1 + $0x28] sm:$0xff]
  %v96 = vld [vmem:[%s1 + $0x30] sm:$0xff]
  %v97 = vld [vmem:[%s1 + $0x38] sm:$0xff]
  %v98 = vld [vmem:[%s1 + $0x40] sm:$0xff]
  %v99 = vld [vmem:[%s1 + $0x48] sm:$0xff]
  %v100 = vld [vmem:[%s1 + $0x50] sm:$0xff]
  %v101 = vld [vmem:[%s1 + $0x58] sm:$0xff]
  %v102 = vld [vmem:[%s1 + $0x60] sm:$0xff]
  %v103 = vld [vmem:[%s1 + $0x68] sm:$0xff]
  %v104 = vld [vmem:[%s1 + $0x70] sm:$0xff]
  %v105 = vld [vmem:[%s1 + $0x78] sm:$0xff]
  %v106 = vld [vmem:[%s1 + $0x80] sm:$0xff]
  %v107 = vld [vmem:[%s1 + $0x88] sm:$0xff]
  %v108 = vld [vmem:[%s1 + $0x90] sm:$0xff]
  %v109 = vld [vmem:[%s1 + $0x98] sm:$0xff]
  %v110 = vld [vmem:[%s1 + $0xa0] sm:$0xff]
  %v111 = vld [vmem:[%s1 + $0xa8] sm:$0xff]
  %v112 = vld [vmem:[%s1 + $0xb0] sm:$0xff]
  %v113 = vld [vmem:[%s1 + $0xb8] sm:$0xff]
  %v114 = vld [vmem:[%s1 + $0xc0] sm:$0xff]
  %v115 = vld [vmem:[%s1 + $0xc8] sm:$0xff]
  %v116 = vld [vmem:[%s1 + $0xd0] sm:$0xff]
  %v117 = vld [vmem:[%s1 + $0xd8] sm:$0xff]
  %v118 = vld [vmem:[%s1 + $0xe0] sm:$0xff]
  %v119 = vld [vmem:[%s1 + $0xe8] sm:$0xff]
  %v120 = vld [vmem:[%s1 + $0xf0] sm:$0xff]
  %v121 = vld [vmem:[%s1 + $0xf8] sm:$0xff]
  %v130 = vunpack.c.l.b16 %v82
  %v131 = vunpack.c.l.b16 %v83
  %v132 = vunpack.c.l.b16 %v84
  %v133 = vunpack.c.l.b16 %v85
  %v134 = vunpack.c.l.b16 %v86
  %v135 = vunpack.c.l.b16 %v87
  %v136 = vunpack.c.l.b16 %v88
  %v137 = vunpack.c.l.b16 %v89
  %v138 = vpack.c.b16 %v131, %v130
  %v139 = vpack.c.b16 %v133, %v132
  %v140 = vpack.c.b16 %v135, %v134
  %v141 = vpack.c.b16 %v137, %v136
  %v178 = vunpack.c.l.b16 %v90
  %v179 = vunpack.c.h.b16 %v90
  %v180 = vunpack.c.l.b16 %v91
  %v181 = vunpack.c.h.b16 %v91
  %v182 = vunpack.c.l.b16 %v92
  %v183 = vunpack.c.h.b16 %v92
  %v184 = vunpack.c.l.b16 %v93
  %v185 = vunpack.c.h.b16 %v93
  %v186 = vunpack.c.l.b16 %v94
  %v187 = vunpack.c.h.b16 %v94
  %v188 = vunpack.c.l.b16 %v95
  %v189 = vunpack.c.h.b16 %v95
  %v190 = vunpack.c.l.b16 %v96
  %v191 = vunpack.c.h.b16 %v96
  %v192 = vunpack.c.l.b16 %v97
  %v193 = vunpack.c.h.b16 %v97
  %v194 = vunpack.c.l.b16 %v98
  %v195 = vunpack.c.h.b16 %v98
  %v196 = vunpack.c.l.b16 %v99
  %v197 = vunpack.c.h.b16 %v99
  %v198 = vunpack.c.l.b16 %v100
  %v199 = vunpack.c.h.b16 %v100
  %v200 = vunpack.c.l.b16 %v101
  %v201 = vunpack.c.h.b16 %v101
  %v202 = vunpack.c.l.b16 %v102
  %v203 = vunpack.c.h.b16 %v102
  %v204 = vunpack.c.l.b16 %v103
  %v205 = vunpack.c.h.b16 %v103
  %v206 = vunpack.c.l.b16 %v104
  %v207 = vunpack.c.h.b16 %v104
  %v208 = vunpack.c.l.b16 %v105
  %v209 = vunpack.c.h.b16 %v105
  %v210 = vunpack.c.l.b16 %v106
  %v211 = vunpack.c.h.b16 %v106
  %v212 = vunpack.c.l.b16 %v107
  %v213 = vunpack.c.h.b16 %v107
  %v214 = vunpack.c.l.b16 %v108
  %v215 = vunpack.c.h.b16 %v108
  %v216 = vunpack.c.l.b16 %v109
  %v217 = vunpack.c.h.b16 %v109
  %v218 = vunpack.c.l.b16 %v110
  %v219 = vunpack.c.h.b16 %v110
  %v220 = vunpack.c.l.b16 %v111
  %v221 = vunpack.c.h.b16 %v111
  %v222 = vunpack.c.l.b16 %v112
  %v223 = vunpack.c.h.b16 %v112
  %v224 = vunpack.c.l.b16 %v113
  %v225 = vunpack.c.h.b16 %v113
  %v226 = vunpack.c.l.b16 %v114
  %v227 = vunpack.c.h.b16 %v114
  %v228 = vunpack.c.l.b16 %v115
  %v229 = vunpack.c.h.b16 %v115
  %v230 = vunpack.c.l.b16 %v116
  %v231 = vunpack.c.h.b16 %v116
  %v232 = vunpack.c.l.b16 %v117
  %v233 = vunpack.c.h.b16 %v117
  %v234 = vunpack.c.l.b16 %v118
  %v235 = vunpack.c.h.b16 %v118
  %v236 = vunpack.c.l.b16 %v119
  %v237 = vunpack.c.h.b16 %v119
  %v238 = vunpack.c.l.b16 %v120
  %v239 = vunpack.c.h.b16 %v120
  %v240 = vunpack.c.l.b16 %v121
  %v241 = vunpack.c.h.b16 %v121
  %v242 = vpack.c.b16 %v182, %v178
  %v243 = vpack.c.b16 %v183, %v179
  %v244 = vpack.c.b16 %v184, %v180
  %v245 = vpack.c.b16 %v185, %v181
  %v246 = vpack.c.b16 %v190, %v186
  %v247 = vpack.c.b16 %v191, %v187
  %v248 = vpack.c.b16 %v192, %v188
  %v249 = vpack.c.b16 %v193, %v189
  %v250 = vpack.c.b16 %v198, %v194
  %v251 = vpack.c.b16 %v199, %v195
  %v252 = vpack.c.b16 %v200, %v196
  %v253 = vpack.c.b16 %v201, %v197
  %v254 = vpack.c.b16 %v206, %v202
  %v255 = vpack.c.b16 %v207, %v203
  %v256 = vpack.c.b16 %v208, %v204
  %v257 = vpack.c.b16 %v209, %v205
  %v258 = vpack.c.b16 %v214, %v210
  %v259 = vpack.c.b16 %v215, %v211
  %v260 = vpack.c.b16 %v216, %v212
  %v261 = vpack.c.b16 %v217, %v213
  %v262 = vpack.c.b16 %v222, %v218
  %v263 = vpack.c.b16 %v223, %v219
  %v264 = vpack.c.b16 %v224, %v220
  %v265 = vpack.c.b16 %v225, %v221
  %v266 = vpack.c.b16 %v230, %v226
  %v267 = vpack.c.b16 %v231, %v227
  %v268 = vpack.c.b16 %v232, %v228
  %v269 = vpack.c.b16 %v233, %v229
  %v270 = vpack.c.b16 %v238, %v234
  %v271 = vpack.c.b16 %v239, %v235
  %v272 = vpack.c.b16 %v240, %v236
  %v273 = vpack.c.b16 %v241, %v237
  %306 = vmatpush.bf16.msra.mxu0 %v270
  %307 = vmatpush.bf16.msra.mxu0 %v266
  %308 = vmatpush.bf16.msra.mxu0 %v262
  %309 = vmatpush.bf16.msra.mxu0 %v258
  %310 = vmatpush.bf16.msra.mxu0 %v254
  %311 = vmatpush.bf16.msra.mxu0 %v250
  %312 = vmatpush.bf16.msra.mxu0 %v246
  %313 = vmatpush.bf16.msra.mxu0 %v242
  %314 = vmatmul.bf16.gmra.mxu0 %v138
  %v315 = vpop.f32.mrf.mxu0
  %v316 = vadd.f32 0.0, %v315
  %v317 = vpop.f32.mrf.mxu0
  %v318 = vadd.f32 0.0, %v317
  %319 = vmatmul.bf16.gmra.mxu0 %v139
  %v320 = vpop.f32.mrf.mxu0
  %v321 = vadd.f32 0.0, %v320
  %v322 = vpop.f32.mrf.mxu0
  %v323 = vadd.f32 0.0, %v322
  %324 = vmatmul.bf16.gmra.mxu0 %v140
  %v325 = vpop.f32.mrf.mxu0
  %v326 = vadd.f32 0.0, %v325
  %v327 = vpop.f32.mrf.mxu0
  %v328 = vadd.f32 0.0, %v327
  %329 = vmatmul.bf16.gmra.mxu0 %v141
  %v330 = vpop.f32.mrf.mxu0
  %v331 = vadd.f32 0.0, %v330
  %v332 = vpop.f32.mrf.mxu0
  %v333 = vadd.f32 0.0, %v332
  %334 = vdwg.mxu0
  %335 = vmatpush.bf16.msra.mxu0 %v271
  %336 = vmatpush.bf16.msra.mxu0 %v267
  %337 = vmatpush.bf16.msra.mxu0 %v263
  %338 = vmatpush.bf16.msra.mxu0 %v259
  %339 = vmatpush.bf16.msra.mxu0 %v255
  %340 = vmatpush.bf16.msra.mxu0 %v251
  %341 = vmatpush.bf16.msra.mxu0 %v247
  %342 = vmatpush.bf16.msra.mxu0 %v243
  %343 = vmatmul.bf16.gmra.mxu0 %v138
  %v344 = vpop.f32.mrf.mxu0
  %v345 = vadd.f32 0.0, %v344
  %v346 = vpop.f32.mrf.mxu0
  %v347 = vadd.f32 0.0, %v346
  %348 = vmatmul.bf16.gmra.mxu0 %v139
  %v349 = vpop.f32.mrf.mxu0
  %v350 = vadd.f32 0.0, %v349
  %v351 = vpop.f32.mrf.mxu0
  %v352 = vadd.f32 0.0, %v351
  %353 = vmatmul.bf16.gmra.mxu0 %v140
  %v354 = vpop.f32.mrf.mxu0
  %v355 = vadd.f32 0.0, %v354
  %v356 = vpop.f32.mrf.mxu0
  %v357 = vadd.f32 0.0, %v356
  %358 = vmatmul.bf16.gmra.mxu0 %v141
  %v359 = vpop.f32.mrf.mxu0
  %v360 = vadd.f32 0.0, %v359
  %v361 = vpop.f32.mrf.mxu0
  %v362 = vadd.f32 0.0, %v361
  %363 = vdwg.mxu0
  %364 = vmatpush.bf16.msra.mxu0 %v272
  %365 = vmatpush.bf16.msra.mxu0 %v268
  %366 = vmatpush.bf16.msra.mxu0 %v264
  %367 = vmatpush.bf16.msra.mxu0 %v260
  %368 = vmatpush.bf16.msra.mxu0 %v256
  %369 = vmatpush.bf16.msra.mxu0 %v252
  %370 = vmatpush.bf16.msra.mxu0 %v248
  %371 = vmatpush.bf16.msra.mxu0 %v244
  %372 = vmatmul.bf16.gmra.mxu0 %v138
  %v373 = vpop.f32.mrf.mxu0
  %v374 = vadd.f32 0.0, %v373
  %v375 = vpop.f32.mrf.mxu0
  %v376 = vadd.f32 0.0, %v375
  %377 = vmatmul.bf16.gmra.mxu0 %v139
  %v378 = vpop.f32.mrf.mxu0
  %v379 = vadd.f32 0.0, %v378
  %v380 = vpop.f32.mrf.mxu0
  %v381 = vadd.f32 0.0, %v380
  %382 = vmatmul.bf16.gmra.mxu0 %v140
  %v383 = vpop.f32.mrf.mxu0
  %v384 = vadd.f32 0.0, %v383
  %v385 = vpop.f32.mrf.mxu0
  %v386 = vadd.f32 0.0, %v385
  %387 = vmatmul.bf16.gmra.mxu0 %v141
  %v388 = vpop.f32.mrf.mxu0
  %v389 = vadd.f32 0.0, %v388
  %v390 = vpop.f32.mrf.mxu0
  %v391 = vadd.f32 0.0, %v390
  %392 = vdwg.mxu0
  %393 = vmatpush.bf16.msra.mxu0 %v273
  %394 = vmatpush.bf16.msra.mxu0 %v269
  %395 = vmatpush.bf16.msra.mxu0 %v265
  %396 = vmatpush.bf16.msra.mxu0 %v261
  %397 = vmatpush.bf16.msra.mxu0 %v257
  %398 = vmatpush.bf16.msra.mxu0 %v253
  %399 = vmatpush.bf16.msra.mxu0 %v249
  %400 = vmatpush.bf16.msra.mxu0 %v245
  %401 = vmatmul.bf16.gmra.mxu0 %v138
  %v402 = vpop.f32.mrf.mxu0
  %v403 = vadd.f32 0.0, %v402
  %v404 = vpop.f32.mrf.mxu0
  %v405 = vadd.f32 0.0, %v404
  %406 = vmatmul.bf16.gmra.mxu0 %v139
  %v407 = vpop.f32.mrf.mxu0
  %v408 = vadd.f32 0.0, %v407
  %v409 = vpop.f32.mrf.mxu0
  %v410 = vadd.f32 0.0, %v409
  %411 = vmatmul.bf16.gmra.mxu0 %v140
  %v412 = vpop.f32.mrf.mxu0
  %v413 = vadd.f32 0.0, %v412
  %v414 = vpop.f32.mrf.mxu0
  %v415 = vadd.f32 0.0, %v414
  %416 = vmatmul.bf16.gmra.mxu0 %v141
  %v417 = vpop.f32.mrf.mxu0
  %v418 = vadd.f32 0.0, %v417
  %v419 = vpop.f32.mrf.mxu0
  %v420 = vadd.f32 0.0, %v419
  %421 = vdwg.mxu0
  %v422 = vadd.f32 %v50, %v316
  %v423 = vadd.f32 %v51, %v345
  %v424 = vadd.f32 %v52, %v374
  %v425 = vadd.f32 %v53, %v403
  %v426 = vadd.f32 %v54, %v318
  %v427 = vadd.f32 %v55, %v347
  %v428 = vadd.f32 %v56, %v376
  %v429 = vadd.f32 %v57, %v405
  %v430 = vadd.f32 %v58, %v321
  %v431 = vadd.f32 %v59, %v350
  %v432 = vadd.f32 %v60, %v379
  %v433 = vadd.f32 %v61, %v408
  %v434 = vadd.f32 %v62, %v323
  %v435 = vadd.f32 %v63, %v352
  %v436 = vadd.f32 %v64, %v381
  %v437 = vadd.f32 %v65, %v410
  %v438 = vadd.f32 %v66, %v326
  %v439 = vadd.f32 %v67, %v355
  %v440 = vadd.f32 %v68, %v384
  %v441 = vadd.f32 %v69, %v413
  %v442 = vadd.f32 %v70, %v328
  %v443 = vadd.f32 %v71, %v357
  %v444 = vadd.f32 %v72, %v386
  %v445 = vadd.f32 %v73, %v415
  %v446 = vadd.f32 %v74, %v331
  %v447 = vadd.f32 %v75, %v360
  %v448 = vadd.f32 %v76, %v389
  %v449 = vadd.f32 %v77, %v418
  %v450 = vadd.f32 %v78, %v333
  %v451 = vadd.f32 %v79, %v362
  %v452 = vadd.f32 %v80, %v391
  %v453 = vadd.f32 %v81, %v420
  %454 = vst [vmem:[#allocation2] sm:$0xff] %v422
  %455 = vst [vmem:[#allocation2 + $0x8] sm:$0xff] %v423
  %456 = vst [vmem:[#allocation2 + $0x10] sm:$0xff] %v424
  %457 = vst [vmem:[#allocation2 + $0x18] sm:$0xff] %v425
  %458 = vst [vmem:[#allocation2 + $0x20] sm:$0xff] %v426
  %459 = vst [vmem:[#allocation2 + $0x28] sm:$0xff] %v427
  %460 = vst [vmem:[#allocation2 + $0x30] sm:$0xff] %v428
  %461 = vst [vmem:[#allocation2 + $0x38] sm:$0xff] %v429
  %462 = vst [vmem:[#allocation2 + $0x40] sm:$0xff] %v430
  %463 = vst [vmem:[#allocation2 + $0x48] sm:$0xff] %v431
  %464 = vst [vmem:[#allocation2 + $0x50] sm:$0xff] %v432
  %465 = vst [vmem:[#allocation2 + $0x58] sm:$0xff] %v433
  %466 = vst [vmem:[#allocation2 + $0x60] sm:$0xff] %v434
  %467 = vst [vmem:[#allocation2 + $0x68] sm:$0xff] %v435
  %468 = vst [vmem:[#allocation2 + $0x70] sm:$0xff] %v436
  %469 = vst [vmem:[#allocation2 + $0x78] sm:$0xff] %v437
  %470 = vst [vmem:[#allocation2 + $0x80] sm:$0xff] %v438
  %471 = vst [vmem:[#allocation2 + $0x88] sm:$0xff] %v439
  %472 = vst [vmem:[#allocation2 + $0x90] sm:$0xff] %v440
  %473 = vst [vmem:[#allocation2 + $0x98] sm:$0xff] %v441
  %474 = vst [vmem:[#allocation2 + $0xa0] sm:$0xff] %v442
  %475 = vst [vmem:[#allocation2 + $0xa8] sm:$0xff] %v443
  %476 = vst [vmem:[#allocation2 + $0xb0] sm:$0xff] %v444
  %477 = vst [vmem:[#allocation2 + $0xb8] sm:$0xff] %v445
  %478 = vst [vmem:[#allocation2 + $0xc0] sm:$0xff] %v446
  %479 = vst [vmem:[#allocation2 + $0xc8] sm:$0xff] %v447
  %480 = vst [vmem:[#allocation2 + $0xd0] sm:$0xff] %v448
  %481 = vst [vmem:[#allocation2 + $0xd8] sm:$0xff] %v449
  %482 = vst [vmem:[#allocation2 + $0xe0] sm:$0xff] %v450
  %483 = vst [vmem:[#allocation2 + $0xe8] sm:$0xff] %v451
  %484 = vst [vmem:[#allocation2 + $0xf0] sm:$0xff] %v452
  %485 = vst [vmem:[#allocation2 + $0xf8] sm:$0xff] %v453
  // Predicated region
  $region18: #{captioning_forward.5} parent=0 // pred_check
    %p486 = pneg %p14
  $region19: #{captioning_forward.5} parent=0 // pred_check_branch
    %488 = sbr.rel (%p486) target = $region21
  $region20: #{captioning_forward.5} parent=0 // pred_region
    %v489 = vld [vmem:[#allocation2] sm:$0xff]
    %v490 = vld [vmem:[#allocation2 + $0x8] sm:$0xff]
    %v491 = vld [vmem:[#allocation2 + $0x10] sm:$0xff]
    %v492 = vld [vmem:[#allocation2 + $0x18] sm:$0xff]
    %v493 = vld [vmem:[#allocation2 + $0x20] sm:$0xff]
    %v494 = vld [vmem:[#allocation2 + $0x28] sm:$0xff]
    %v495 = vld [vmem:[#allocation2 + $0x30] sm:$0xff]
    %v496 = vld [vmem:[#allocation2 + $0x38] sm:$0xff]
    %v497 = vld [vmem:[#allocation2 + $0x40] sm:$0xff]
    %v498 = vld [vmem:[#allocation2 + $0x48] sm:$0xff]
    %v499 = vld [vmem:[#allocation2 + $0x50] sm:$0xff]
    %v500 = vld [vmem:[#allocation2 + $0x58] sm:$0xff]
    %v501 = vld [vmem:[#allocation2 + $0x60] sm:$0xff]
    %v502 = vld [vmem:[#allocation2 + $0x68] sm:$0xff]
    %v503 = vld [vmem:[#allocation2 + $0x70] sm:$0xff]
    %v504 = vld [vmem:[#allocation2 + $0x78] sm:$0xff]
    %v505 = vld [vmem:[#allocation2 + $0x80] sm:$0xff]
    %v506 = vld [vmem:[#allocation2 + $0x88] sm:$0xff]
    %v507 = vld [vmem:[#allocation2 + $0x90] sm:$0xff]
    %v508 = vld [vmem:[#allocation2 + $0x98] sm:$0xff]
    %v509 = vld [vmem:[#allocation2 + $0xa0] sm:$0xff]
    %v510 = vld [vmem:[#allocation2 + $0xa8] sm:$0xff]
    %v511 = vld [vmem:[#allocation2 + $0xb0] sm:$0xff]
    %v512 = vld [vmem:[#allocation2 + $0xb8] sm:$0xff]
    %v513 = vld [vmem:[#allocation2 + $0xc0] sm:$0xff]
    %v514 = vld [vmem:[#allocation2 + $0xc8] sm:$0xff]
    %v515 = vld [vmem:[#allocation2 + $0xd0] sm:$0xff]
    %v516 = vld [vmem:[#allocation2 + $0xd8] sm:$0xff]
    %v517 = vld [vmem:[#allocation2 + $0xe0] sm:$0xff]
    %v518 = vld [vmem:[#allocation2 + $0xe8] sm:$0xff]
    %v519 = vld [vmem:[#allocation2 + $0xf0] sm:$0xff]
    %v520 = vld [vmem:[#allocation2 + $0xf8] sm:$0xff]
    %v521 = vld [vmem:[%s2] sm:$0xf]
    %v523 = vperm.slane %v521, 0
    %v524 = vperm.slane %v521, 1
    %v525 = vperm.slane %v521, 2
    %v526 = vperm.slane %v521, 3
    %v531 = vadd.f32 %v489, %v523
    %v532 = vadd.f32 %v490, %v524
    %v533 = vadd.f32 %v491, %v525
    %v534 = vadd.f32 %v492, %v526
    %v535 = vadd.f32 %v493, %v523
    %v536 = vadd.f32 %v494, %v524
    %v537 = vadd.f32 %v495, %v525
    %v538 = vadd.f32 %v496, %v526
    %v539 = vadd.f32 %v497, %v523
    %v540 = vadd.f32 %v498, %v524
    %v541 = vadd.f32 %v499, %v525
    %v542 = vadd.f32 %v500, %v526
    %v543 = vadd.f32 %v501, %v523
    %v544 = vadd.f32 %v502, %v524
    %v545 = vadd.f32 %v503, %v525
    %v546 = vadd.f32 %v504, %v526
    %v547 = vadd.f32 %v505, %v523
    %v548 = vadd.f32 %v506, %v524
    %v549 = vadd.f32 %v507, %v525
    %v550 = vadd.f32 %v508, %v526
    %v551 = vadd.f32 %v509, %v523
    %v552 = vadd.f32 %v510, %v524
    %v553 = vadd.f32 %v511, %v525
    %v554 = vadd.f32 %v512, %v526
    %v555 = vadd.f32 %v513, %v523
    %v556 = vadd.f32 %v514, %v524
    %v557 = vadd.f32 %v515, %v525
    %v558 = vadd.f32 %v516, %v526
    %v559 = vadd.f32 %v517, %v523
    %v560 = vadd.f32 %v518, %v524
    %v561 = vadd.f32 %v519, %v525
    %v562 = vadd.f32 %v520, %v526
    %563 = vst [vmem:[%s3] sm:$0xff] %v531
    %564 = vst [vmem:[%s3 + $0x8] sm:$0xff] %v532
    %565 = vst [vmem:[%s3 + $0x10] sm:$0xff] %v533
    %566 = vst [vmem:[%s3 + $0x18] sm:$0xff] %v534
    %567 = vst [vmem:[%s3 + $0x20] sm:$0xff] %v535
    %568 = vst [vmem:[%s3 + $0x28] sm:$0xff] %v536
    %569 = vst [vmem:[%s3 + $0x30] sm:$0xff] %v537
    %570 = vst [vmem:[%s3 + $0x38] sm:$0xff] %v538
    %571 = vst [vmem:[%s3 + $0x40] sm:$0xff] %v539
    %572 = vst [vmem:[%s3 + $0x48] sm:$0xff] %v540
    %573 = vst [vmem:[%s3 + $0x50] sm:$0xff] %v541
    %574 = vst [vmem:[%s3 + $0x58] sm:$0xff] %v542
    %575 = vst [vmem:[%s3 + $0x60] sm:$0xff] %v543
    %576 = vst [vmem:[%s3 + $0x68] sm:$0xff] %v544
    %577 = vst [vmem:[%s3 + $0x70] sm:$0xff] %v545
    %578 = vst [vmem:[%s3 + $0x78] sm:$0xff] %v546
    %579 = vst [vmem:[%s3 + $0x80] sm:$0xff] %v547
    %580 = vst [vmem:[%s3 + $0x88] sm:$0xff] %v548
    %581 = vst [vmem:[%s3 + $0x90] sm:$0xff] %v549
    %582 = vst [vmem:[%s3 + $0x98] sm:$0xff] %v550
    %583 = vst [vmem:[%s3 + $0xa0] sm:$0xff] %v551
    %584 = vst [vmem:[%s3 + $0xa8] sm:$0xff] %v552
    %585 = vst [vmem:[%s3 + $0xb0] sm:$0xff] %v553
    %586 = vst [vmem:[%s3 + $0xb8] sm:$0xff] %v554
    %587 = vst [vmem:[%s3 + $0xc0] sm:$0xff] %v555
    %588 = vst [vmem:[%s3 + $0xc8] sm:$0xff] %v556
    %589 = vst [vmem:[%s3 + $0xd0] sm:$0xff] %v557
    %590 = vst [vmem:[%s3 + $0xd8] sm:$0xff] %v558
    %591 = vst [vmem:[%s3 + $0xe0] sm:$0xff] %v559
    %592 = vst [vmem:[%s3 + $0xe8] sm:$0xff] %v560
    %593 = vst [vmem:[%s3 + $0xf0] sm:$0xff] %v561
    %594 = vst [vmem:[%s3 + $0xf8] sm:$0xff] %v562
  $region21: #{captioning_forward.5} parent=0 // pred_fallthru
    _
  // Predicated region
  $region22: #{captioning_forward.5} parent=0 // pred_check
    _
  $region23: #{captioning_forward.5} parent=0 // pred_check_branch
    %596 = sbr.rel (0) target = $region25
  $region24: #{captioning_forward.5} parent=0 // pred_region
    _
  $region25: #{captioning_forward.5} parent=0 // pred_fallthru
    _
  // Predicated region
  $region26: #{captioning_forward.5} parent=0 // pred_check
    _
  $region27: #{captioning_forward.5} parent=0 // pred_check_branch
    %598 = sbr.rel (0) target = $region29
  $region28: #{captioning_forward.5} parent=0 // pred_region
    _
  $region29: #{captioning_forward.5} parent=0 // pred_fallthru
    _

// kernel: captioning_forward.6
$region0: #{captioning_forward.6}
  #allocation0 [shape = 'u32[]', space=smem, size = 0x4, offset = 0x4, fixed_abs, tag = 'smem constant byte address 0x4 - core index']
  #allocation1 [shape = 'u32[72,128]{1,0:T(1,128)}', space=vmem, size = 0x9000, scoped, tag = 'internal scratch']
  #allocation2 [shape = 'f32[8,128]{1,0:T(8,128)}', space=vmem, size = 0x1000, scoped, tag = 'scratch operand']
  #allocation3 [shape = 'f32[8,128]{1,0:T(8,128)}', space=vmem, size = 0x1000, scoped, tag = 'scratch operand']
  %s0 = inlined_call_operand.vmem [shape: f32[8,8,512], index: 0, kind: input, shape index: {}]
  %s1 = inlined_call_operand.vmem [shape: bf16[128,512], index: 1, kind: input, shape index: {}]
  %s2 = inlined_call_operand.vmem [shape: f32[8,8,128], index: 2, kind: output, shape index: {}]
  %s3 = sld [smem:[#allocation0]]
  $region22: #{captioning_forward.6} parent=0
    _
  %s5 = ssub.s32 1, %s3
  %s6 = scalar_select 0, %s5, %s3
  // Predicated region
  $region2: #{captioning_forward.6} parent=0 // pred_check
    _
  $region3: #{captioning_forward.6} parent=0 // pred_check_branch
    %8 = sbr.rel (0) target = $region5
  $region4: #{captioning_forward.6} parent=0 // pred_region
    _
  $region5: #{captioning_forward.6} parent=0 // pred_fallthru
    _
  // Predicated region
  $region6: #{captioning_forward.6} parent=0 // pred_check
    _
  $region7: #{captioning_forward.6} parent=0 // pred_check_branch
    %10 = sbr.rel (0) target = $region9
  $region8: #{captioning_forward.6} parent=0 // pred_region
    _
  $region9: #{captioning_forward.6} parent=0 // pred_fallthru
    _
  %p11 = scmp.eq.s32.totalorder 0, 0
  // Predicated region
  $region10: #{captioning_forward.6} parent=0 // pred_check
    %p12 = pneg %p11
  $region11: #{captioning_forward.6} parent=0 // pred_check_branch
    %14 = sbr.rel (%p12) target = $region13
  $region12: #{captioning_forward.6} parent=0 // pred_region
    %15 = vst [vmem:[#allocation2] sm:$0xff] 0.0
    %16 = vst [vmem:[#allocation3] sm:$0xff] 0.0
  $region13: #{captioning_forward.6} parent=0 // pred_fallthru
    _
  %v17 = vld [vmem:[%s1] sm:$0xff]
  %v18 = vld [vmem:[%s1 + $0x8] sm:$0xff]
  %v19 = vld [vmem:[%s1 + $0x10] sm:$0xff]
  %v20 = vld [vmem:[%s1 + $0x18] sm:$0xff]
  %v21 = vld [vmem:[%s1 + $0x20] sm:$0xff]
  %v22 = vld [vmem:[%s1 + $0x28] sm:$0xff]
  %v23 = vld [vmem:[%s1 + $0x30] sm:$0xff]
  %v24 = vld [vmem:[%s1 + $0x38] sm:$0xff]
  %v25 = vld [vmem:[%s1 + $0x40] sm:$0xff]
  %v26 = vld [vmem:[%s1 + $0x48] sm:$0xff]
  %v27 = vld [vmem:[%s1 + $0x50] sm:$0xff]
  %v28 = vld [vmem:[%s1 + $0x58] sm:$0xff]
  %v29 = vld [vmem:[%s1 + $0x60] sm:$0xff]
  %v30 = vld [vmem:[%s1 + $0x68] sm:$0xff]
  %v31 = vld [vmem:[%s1 + $0x70] sm:$0xff]
  %v32 = vld [vmem:[%s1 + $0x78] sm:$0xff]
  %v33 = vld [vmem:[%s1 + $0x80] sm:$0xff]
  %v34 = vld [vmem:[%s1 + $0x88] sm:$0xff]
  %v35 = vld [vmem:[%s1 + $0x90] sm:$0xff]
  %v36 = vld [vmem:[%s1 + $0x98] sm:$0xff]
  %v37 = vld [vmem:[%s1 + $0xa0] sm:$0xff]
  %v38 = vld [vmem:[%s1 + $0xa8] sm:$0xff]
  %v39 = vld [vmem:[%s1 + $0xb0] sm:$0xff]
  %v40 = vld [vmem:[%s1 + $0xb8] sm:$0xff]
  %v41 = vld [vmem:[%s1 + $0xc0] sm:$0xff]
  %v42 = vld [vmem:[%s1 + $0xc8] sm:$0xff]
  %v43 = vld [vmem:[%s1 + $0xd0] sm:$0xff]
  %v44 = vld [vmem:[%s1 + $0xd8] sm:$0xff]
  %v45 = vld [vmem:[%s1 + $0xe0] sm:$0xff]
  %v46 = vld [vmem:[%s1 + $0xe8] sm:$0xff]
  %v47 = vld [vmem:[%s1 + $0xf0] sm:$0xff]
  %v48 = vld [vmem:[%s1 + $0xf8] sm:$0xff]
  %v49 = vld [vmem:[#allocation2] sm:$0xff]
  %v50 = vld [vmem:[#allocation3] sm:$0xff]
  %v51 = vld [vmem:[%s0] sm:$0xff]
  %v52 = vld [vmem:[%s0 + $0x8] sm:$0xff]
  %v53 = vld [vmem:[%s0 + $0x10] sm:$0xff]
  %v54 = vld [vmem:[%s0 + $0x18] sm:$0xff]
  %v55 = vpack.c.bf16 %v49, %v49
  %v88 = vunpack.c.l.b16 %v17
  %v89 = vunpack.c.h.b16 %v17
  %v90 = vunpack.c.l.b16 %v18
  %v91 = vunpack.c.h.b16 %v18
  %v92 = vunpack.c.l.b16 %v19
  %v93 = vunpack.c.h.b16 %v19
  %v94 = vunpack.c.l.b16 %v20
  %v95 = vunpack.c.h.b16 %v20
  %v96 = vunpack.c.l.b16 %v21
  %v97 = vunpack.c.h.b16 %v21
  %v98 = vunpack.c.l.b16 %v22
  %v99 = vunpack.c.h.b16 %v22
  %v100 = vunpack.c.l.b16 %v23
  %v101 = vunpack.c.h.b16 %v23
  %v102 = vunpack.c.l.b16 %v24
  %v103 = vunpack.c.h.b16 %v24
  %v104 = vunpack.c.l.b16 %v25
  %v105 = vunpack.c.h.b16 %v25
  %v106 = vunpack.c.l.b16 %v26
  %v107 = vunpack.c.h.b16 %v26
  %v108 = vunpack.c.l.b16 %v27
  %v109 = vunpack.c.h.b16 %v27
  %v110 = vunpack.c.l.b16 %v28
  %v111 = vunpack.c.h.b16 %v28
  %v112 = vunpack.c.l.b16 %v29
  %v113 = vunpack.c.h.b16 %v29
  %v114 = vunpack.c.l.b16 %v30
  %v115 = vunpack.c.h.b16 %v30
  %v116 = vunpack.c.l.b16 %v31
  %v117 = vunpack.c.h.b16 %v31
  %v118 = vunpack.c.l.b16 %v32
  %v119 = vunpack.c.h.b16 %v32
  %v120 = vunpack.c.l.b16 %v33
  %v121 = vunpack.c.h.b16 %v33
  %v122 = vunpack.c.l.b16 %v34
  %v123 = vunpack.c.h.b16 %v34
  %v124 = vunpack.c.l.b16 %v35
  %v125 = vunpack.c.h.b16 %v35
  %v126 = vunpack.c.l.b16 %v36
  %v127 = vunpack.c.h.b16 %v36
  %v128 = vunpack.c.l.b16 %v37
  %v129 = vunpack.c.h.b16 %v37
  %v130 = vunpack.c.l.b16 %v38
  %v131 = vunpack.c.h.b16 %v38
  %v132 = vunpack.c.l.b16 %v39
  %v133 = vunpack.c.h.b16 %v39
  %v134 = vunpack.c.l.b16 %v40
  %v135 = vunpack.c.h.b16 %v40
  %v136 = vunpack.c.l.b16 %v41
  %v137 = vunpack.c.h.b16 %v41
  %v138 = vunpack.c.l.b16 %v42
  %v139 = vunpack.c.h.b16 %v42
  %v140 = vunpack.c.l.b16 %v43
  %v141 = vunpack.c.h.b16 %v43
  %v142 = vunpack.c.l.b16 %v44
  %v143 = vunpack.c.h.b16 %v44
  %v144 = vunpack.c.l.b16 %v45
  %v145 = vunpack.c.h.b16 %v45
  %v146 = vunpack.c.l.b16 %v46
  %v147 = vunpack.c.h.b16 %v46
  %v148 = vunpack.c.l.b16 %v47
  %v149 = vunpack.c.h.b16 %v47
  %v150 = vunpack.c.l.b16 %v48
  %v151 = vunpack.c.h.b16 %v48
  %v152 = vpack.c.b16 %v92, %v88
  %v153 = vpack.c.b16 %v93, %v89
  %v154 = vpack.c.b16 %v94, %v90
  %v155 = vpack.c.b16 %v95, %v91
  %v156 = vpack.c.b16 %v100, %v96
  %v157 = vpack.c.b16 %v101, %v97
  %v158 = vpack.c.b16 %v102, %v98
  %v159 = vpack.c.b16 %v103, %v99
  %v160 = vpack.c.b16 %v108, %v104
  %v161 = vpack.c.b16 %v109, %v105
  %v162 = vpack.c.b16 %v110, %v106
  %v163 = vpack.c.b16 %v111, %v107
  %v164 = vpack.c.b16 %v116, %v112
  %v165 = vpack.c.b16 %v117, %v113
  %v166 = vpack.c.b16 %v118, %v114
  %v167 = vpack.c.b16 %v119, %v115
  %v168 = vpack.c.b16 %v124, %v120
  %v169 = vpack.c.b16 %v125, %v121
  %v170 = vpack.c.b16 %v126, %v122
  %v171 = vpack.c.b16 %v127, %v123
  %v172 = vpack.c.b16 %v132, %v128
  %v173 = vpack.c.b16 %v133, %v129
  %v174 = vpack.c.b16 %v134, %v130
  %v175 = vpack.c.b16 %v135, %v131
  %v176 = vpack.c.b16 %v140, %v136
  %v177 = vpack.c.b16 %v141, %v137
  %v178 = vpack.c.b16 %v142, %v138
  %v179 = vpack.c.b16 %v143, %v139
  %v180 = vpack.c.b16 %v148, %v144
  %v181 = vpack.c.b16 %v149, %v145
  %v182 = vpack.c.b16 %v150, %v146
  %v183 = vpack.c.b16 %v151, %v147
  %216 = vmatpush.bf16.msra.mxu0 %v180
  %217 = vmatpush.bf16.msra.mxu0 %v176
  %218 = vmatpush.bf16.msra.mxu0 %v172
  %219 = vmatpush.bf16.msra.mxu0 %v168
  %220 = vmatpush.bf16.msra.mxu0 %v164
  %221 = vmatpush.bf16.msra.mxu0 %v160
  %222 = vmatpush.bf16.msra.mxu0 %v156
  %223 = vmatpush.bf16.msra.mxu0 %v152
  %224 = vmatmul.bf16.gmra.mxu0 %v55
  %v225 = vpop.f32.mrf.mxu0
  %v226 = vadd.f32 0.0, %v225
  %v227 = vpop.f32.mrf.mxu0
  %228 = vdwg.mxu0
  %229 = vmatpush.bf16.msra.mxu0 %v181
  %230 = vmatpush.bf16.msra.mxu0 %v177
  %231 = vmatpush.bf16.msra.mxu0 %v173
  %232 = vmatpush.bf16.msra.mxu0 %v169
  %233 = vmatpush.bf16.msra.mxu0 %v165
  %234 = vmatpush.bf16.msra.mxu0 %v161
  %235 = vmatpush.bf16.msra.mxu0 %v157
  %236 = vmatpush.bf16.msra.mxu0 %v153
  %237 = vmatmul.bf16.gmra.mxu0 %v55
  %v238 = vpop.f32.mrf.mxu0
  %v239 = vadd.f32 0.0, %v238
  %v240 = vpop.f32.mrf.mxu0
  %241 = vdwg.mxu0
  %242 = vmatpush.bf16.msra.mxu0 %v182
  %243 = vmatpush.bf16.msra.mxu0 %v178
  %244 = vmatpush.bf16.msra.mxu0 %v174
  %245 = vmatpush.bf16.msra.mxu0 %v170
  %246 = vmatpush.bf16.msra.mxu0 %v166
  %247 = vmatpush.bf16.msra.mxu0 %v162
  %248 = vmatpush.bf16.msra.mxu0 %v158
  %249 = vmatpush.bf16.msra.mxu0 %v154
  %250 = vmatmul.bf16.gmra.mxu0 %v55
  %v251 = vpop.f32.mrf.mxu0
  %v252 = vadd.f32 0.0, %v251
  %v253 = vpop.f32.mrf.mxu0
  %254 = vdwg.mxu0
  %255 = vmatpush.bf16.msra.mxu0 %v183
  %256 = vmatpush.bf16.msra.mxu0 %v179
  %257 = vmatpush.bf16.msra.mxu0 %v175
  %258 = vmatpush.bf16.msra.mxu0 %v171
  %259 = vmatpush.bf16.msra.mxu0 %v167
  %260 = vmatpush.bf16.msra.mxu0 %v163
  %261 = vmatpush.bf16.msra.mxu0 %v159
  %262 = vmatpush.bf16.msra.mxu0 %v155
  %263 = vmatmul.bf16.gmra.mxu0 %v55
  %v264 = vpop.f32.mrf.mxu0
  %v265 = vadd.f32 0.0, %v264
  %v266 = vpop.f32.mrf.mxu0
  %267 = vdwg.mxu0
  %v268 = vadd.f32 %v51, %v226
  %v269 = vadd.f32 %v52, %v239
  %v270 = vadd.f32 %v53, %v252
  %v271 = vadd.f32 %v54, %v265
  %v272 = vxor.u32 %v268, 2147483648
  %v273 = vmul.f32 %v272, 1.442695
  %v274 = vpow.pop %v273
  %v275 = vadd.f32 %v274, 1.0
  %v276 = vrcp.pop %v275
  %v277 = vmul.f32 %v275, %v276
  %v278 = vsub.f32 1.0, %v277
  %v279 = vmul.f32 %v276, %v278
  %v280 = vadd.f32 %v276, %v279
  %vm281 = vweird.f32 %v275
  %vm282 = vweird.f32 %v276
  %vm283 = vmor %vm281, %vm282
  %v284 = vsel %vm283, %v276, %v280
  %v285 = vand.u32 2147483647, %v275
  %vm286 = vcmp.eq.f32.partialorder %v285, 8.507059e+37
  %v287 = vand.u32 %v275, 2147483648
  %v288 = vor.u32 1.1754944e-38, %v287
  %v289 = vsel %vm286, %v288, %v284
  %v290 = vmul.f32 1.0, %v289
  %v291 = vxor.u32 %v269, 2147483648
  %v292 = vmul.f32 %v291, 1.442695
  %v293 = vpow.pop %v292
  %v294 = vadd.f32 %v293, 1.0
  %v295 = vrcp.pop %v294
  %v296 = vmul.f32 %v294, %v295
  %v297 = vsub.f32 1.0, %v296
  %v298 = vmul.f32 %v295, %v297
  %v299 = vadd.f32 %v295, %v298
  %vm300 = vweird.f32 %v294
  %vm301 = vweird.f32 %v295
  %vm302 = vmor %vm300, %vm301
  %v303 = vsel %vm302, %v295, %v299
  %v304 = vand.u32 2147483647, %v294
  %vm305 = vcmp.eq.f32.partialorder %v304, 8.507059e+37
  %v306 = vand.u32 %v294, 2147483648
  %v307 = vor.u32 1.1754944e-38, %v306
  %v308 = vsel %vm305, %v307, %v303
  %v309 = vmul.f32 1.0, %v308
  %v310 = vtanh.pop %v270
  %v311 = vxor.u32 %v271, 2147483648
  %v312 = vmul.f32 %v311, 1.442695
  %v313 = vpow.pop %v312
  %v314 = vadd.f32 %v313, 1.0
  %v315 = vrcp.pop %v314
  %v316 = vmul.f32 %v314, %v315
  %v317 = vsub.f32 1.0, %v316
  %v318 = vmul.f32 %v315, %v317
  %v319 = vadd.f32 %v315, %v318
  %vm320 = vweird.f32 %v314
  %vm321 = vweird.f32 %v315
  %vm322 = vmor %vm320, %vm321
  %v323 = vsel %vm322, %v315, %v319
  %v324 = vand.u32 2147483647, %v314
  %vm325 = vcmp.eq.f32.partialorder %v324, 8.507059e+37
  %v326 = vand.u32 %v314, 2147483648
  %v327 = vor.u32 1.1754944e-38, %v326
  %v328 = vsel %vm325, %v327, %v323
  %v329 = vmul.f32 1.0, %v328
  %v330 = vmul.f32 %v309, %v50
  %v331 = vmul.f32 %v290, %v310
  %v332 = vadd.f32 %v330, %v331
  %v333 = vtanh.pop %v332
  %v334 = vmul.f32 %v329, %v333
  %335 = vst [vmem:[%s2] sm:$0xff] %v334
  %s336 = scalar_lea.vmem %s0, 32
  %v337 = vld [vmem:[%s336] sm:$0xff]
  %v338 = vld [vmem:[%s336 + $0x8] sm:$0xff]
  %v339 = vld [vmem:[%s336 + $0x10] sm:$0xff]
  %v340 = vld [vmem:[%s336 + $0x18] sm:$0xff]
  %v341 = vpack.c.bf16 %v334, %v334
  %342 = vmatpush.bf16.msra.mxu0 %v180
  %343 = vmatpush.bf16.msra.mxu0 %v176
  %344 = vmatpush.bf16.msra.mxu0 %v172
  %345 = vmatpush.bf16.msra.mxu0 %v168
  %346 = vmatpush.bf16.msra.mxu0 %v164
  %347 = vmatpush.bf16.msra.mxu0 %v160
  %348 = vmatpush.bf16.msra.mxu0 %v156
  %349 = vmatpush.bf16.msra.mxu0 %v152
  %350 = vmatmul.bf16.gmra.mxu0 %v341
  %v351 = vpop.f32.mrf.mxu0
  %v352 = vadd.f32 0.0, %v351
  %v353 = vpop.f32.mrf.mxu0
  %354 = vdwg.mxu0
  %355 = vmatpush.bf16.msra.mxu0 %v181
  %356 = vmatpush.bf16.msra.mxu0 %v177
  %357 = vmatpush.bf16.msra.mxu0 %v173
  %358 = vmatpush.bf16.msra.mxu0 %v169
  %359 = vmatpush.bf16.msra.mxu0 %v165
  %360 = vmatpush.bf16.msra.mxu0 %v161
  %361 = vmatpush.bf16.msra.mxu0 %v157
  %362 = vmatpush.bf16.msra.mxu0 %v153
  %363 = vmatmul.bf16.gmra.mxu0 %v341
  %v364 = vpop.f32.mrf.mxu0
  %v365 = vadd.f32 0.0, %v364
  %v366 = vpop.f32.mrf.mxu0
  %367 = vdwg.mxu0
  %368 = vmatpush.bf16.msra.mxu0 %v182
  %369 = vmatpush.bf16.msra.mxu0 %v178
  %370 = vmatpush.bf16.msra.mxu0 %v174
  %371 = vmatpush.bf16.msra.mxu0 %v170
  %372 = vmatpush.bf16.msra.mxu0 %v166
  %373 = vmatpush.bf16.msra.mxu0 %v162
  %374 = vmatpush.bf16.msra.mxu0 %v158
  %375 = vmatpush.bf16.msra.mxu0 %v154
  %376 = vmatmul.bf16.gmra.mxu0 %v341
  %v377 = vpop.f32.mrf.mxu0
  %v378 = vadd.f32 0.0, %v377
  %v379 = vpop.f32.mrf.mxu0
  %380 = vdwg.mxu0
  %381 = vmatpush.bf16.msra.mxu0 %v183
  %382 = vmatpush.bf16.msra.mxu0 %v179
  %383 = vmatpush.bf16.msra.mxu0 %v175
  %384 = vmatpush.bf16.msra.mxu0 %v171
  %385 = vmatpush.bf16.msra.mxu0 %v167
  %386 = vmatpush.bf16.msra.mxu0 %v163
  %387 = vmatpush.bf16.msra.mxu0 %v159
  %388 = vmatpush.bf16.msra.mxu0 %v155
  %389 = vmatmul.bf16.gmra.mxu0 %v341
  %v390 = vpop.f32.mrf.mxu0
  %v391 = vadd.f32 0.0, %v390
  %v392 = vpop.f32.mrf.mxu0
  %393 = vdwg.mxu0
  %v394 = vadd.f32 %v337, %v352
  %v395 = vadd.f32 %v338, %v365
  %v396 = vadd.f32 %v339, %v378
  %v397 = vadd.f32 %v340, %v391
  %v398 = vxor.u32 %v394, 2147483648
  %v399 = vmul.f32 %v398, 1.442695
  %v400 = vpow.pop %v399
  %v401 = vadd.f32 %v400, 1.0
  %v402 = vrcp.pop %v401
  %v403 = vmul.f32 %v401, %v402
  %v404 = vsub.f32 1.0, %v403
  %v405 = vmul.f32 %v402, %v404
  %v406 = vadd.f32 %v402, %v405
  %vm407 = vweird.f32 %v401
  %vm408 = vweird.f32 %v402
  %vm409 = vmor %vm407, %vm408
  %v410 = vsel %vm409, %v402, %v406
  %v411 = vand.u32 2147483647, %v401
  %vm412 = vcmp.eq.f32.partialorder %v411, 8.507059e+37
  %v413 = vand.u32 %v401, 2147483648
  %v414 = vor.u32 1.1754944e-38, %v413
  %v415 = vsel %vm412, %v414, %v410
  %v416 = vmul.f32 1.0, %v415
  %v417 = vxor.u32 %v395, 2147483648
  %v418 = vmul.f32 %v417, 1.442695
  %v419 = vpow.pop %v418
  %v420 = vadd.f32 %v419, 1.0
  %v421 = vrcp.pop %v420
  %v422 = vmul.f32 %v420, %v421
  %v423 = vsub.f32 1.0, %v422
  %v424 = vmul.f32 %v421, %v423
  %v425 = vadd.f32 %v421, %v424
  %vm426 = vweird.f32 %v420
  %vm427 = vweird.f32 %v421
  %vm428 = vmor %vm426, %vm427
  %v429 = vsel %vm428, %v421, %v425
  %v430 = vand.u32 2147483647, %v420
  %vm431 = vcmp.eq.f32.partialorder %v430, 8.507059e+37
  %v432 = vand.u32 %v420, 2147483648
  %v433 = vor.u32 1.1754944e-38, %v432
  %v434 = vsel %vm431, %v433, %v429
  %v435 = vmul.f32 1.0, %v434
  %v436 = vtanh.pop %v396
  %v437 = vxor.u32 %v397, 2147483648
  %v438 = vmul.f32 %v437, 1.442695
  %v439 = vpow.pop %v438
  %v440 = vadd.f32 %v439, 1.0
  %v441 = vrcp.pop %v440
  %v442 = vmul.f32 %v440, %v441
  %v443 = vsub.f32 1.0, %v442
  %v444 = vmul.f32 %v441, %v443
  %v445 = vadd.f32 %v441, %v444
  %vm446 = vweird.f32 %v440
  %vm447 = vweird.f32 %v441
  %vm448 = vmor %vm446, %vm447
  %v449 = vsel %vm448, %v441, %v445
  %v450 = vand.u32 2147483647, %v440
  %vm451 = vcmp.eq.f32.partialorder %v450, 8.507059e+37
  %v452 = vand.u32 %v440, 2147483648
  %v453 = vor.u32 1.1754944e-38, %v452
  %v454 = vsel %vm451, %v453, %v449
  %v455 = vmul.f32 1.0, %v454
  %v456 = vmul.f32 %v435, %v332
  %v457 = vmul.f32 %v416, %v436
  %v458 = vadd.f32 %v456, %v457
  %v459 = vtanh.pop %v458
  %v460 = vmul.f32 %v455, %v459
  %s461 = scalar_lea.vmem %s2, 8
  %462 = vst [vmem:[%s461] sm:$0xff] %v460
  %s463 = scalar_lea.vmem %s0, 64
  %v464 = vld [vmem:[%s463] sm:$0xff]
  %v465 = vld [vmem:[%s463 + $0x8] sm:$0xff]
  %v466 = vld [vmem:[%s463 + $0x10] sm:$0xff]
  %v467 = vld [vmem:[%s463 + $0x18] sm:$0xff]
  %v468 = vpack.c.bf16 %v460, %v460
  %469 = vmatpush.bf16.msra.mxu0 %v180
  %470 = vmatpush.bf16.msra.mxu0 %v176
  %471 = vmatpush.bf16.msra.mxu0 %v172
  %472 = vmatpush.bf16.msra.mxu0 %v168
  %473 = vmatpush.bf16.msra.mxu0 %v164
  %474 = vmatpush.bf16.msra.mxu0 %v160
  %475 = vmatpush.bf16.msra.mxu0 %v156
  %476 = vmatpush.bf16.msra.mxu0 %v152
  %477 = vmatmul.bf16.gmra.mxu0 %v468
  %v478 = vpop.f32.mrf.mxu0
  %v479 = vadd.f32 0.0, %v478
  %v480 = vpop.f32.mrf.mxu0
  %481 = vdwg.mxu0
  %482 = vmatpush.bf16.msra.mxu0 %v181
  %483 = vmatpush.bf16.msra.mxu0 %v177
  %484 = vmatpush.bf16.msra.mxu0 %v173
  %485 = vmatpush.bf16.msra.mxu0 %v169
  %486 = vmatpush.bf16.msra.mxu0 %v165
  %487 = vmatpush.bf16.msra.mxu0 %v161
  %488 = vmatpush.bf16.msra.mxu0 %v157
  %489 = vmatpush.bf16.msra.mxu0 %v153
  %490 = vmatmul.bf16.gmra.mxu0 %v468
  %v491 = vpop.f32.mrf.mxu0
  %v492 = vadd.f32 0.0, %v491
  %v493 = vpop.f32.mrf.mxu0
  %494 = vdwg.mxu0
  %495 = vmatpush.bf16.msra.mxu0 %v182
  %496 = vmatpush.bf16.msra.mxu0 %v178
  %497 = vmatpush.bf16.msra.mxu0 %v174
  %498 = vmatpush.bf16.msra.mxu0 %v170
  %499 = vmatpush.bf16.msra.mxu0 %v166
  %500 = vmatpush.bf16.msra.mxu0 %v162
  %501 = vmatpush.bf16.msra.mxu0 %v158
  %502 = vmatpush.bf16.msra.mxu0 %v154
  %503 = vmatmul.bf16.gmra.mxu0 %v468
  %v504 = vpop.f32.mrf.mxu0
  %v505 = vadd.f32 0.0, %v504
  %v506 = vpop.f32.mrf.mxu0
  %507 = vdwg.mxu0
  %508 = vmatpush.bf16.msra.mxu0 %v183
  %509 = vmatpush.bf16.msra.mxu0 %v179
  %510 = vmatpush.bf16.msra.mxu0 %v175
  %511 = vmatpush.bf16.msra.mxu0 %v171
  %512 = vmatpush.bf16.msra.mxu0 %v167
  %513 = vmatpush.bf16.msra.mxu0 %v163
  %514 = vmatpush.bf16.msra.mxu0 %v159
  %515 = vmatpush.bf16.msra.mxu0 %v155
  %516 = vmatmul.bf16.gmra.mxu0 %v468
  %v517 = vpop.f32.mrf.mxu0
  %v518 = vadd.f32 0.0, %v517
  %v519 = vpop.f32.mrf.mxu0
  %520 = vdwg.mxu0
  %v521 = vadd.f32 %v464, %v479
  %v522 = vadd.f32 %v465, %v492
  %v523 = vadd.f32 %v466, %v505
  %v524 = vadd.f32 %v467, %v518
  %v525 = vxor.u32 %v521, 2147483648
  %v526 = vmul.f32 %v525, 1.442695
  %v527 = vpow.pop %v526
  %v528 = vadd.f32 %v527, 1.0
  %v529 = vrcp.pop %v528
  %v530 = vmul.f32 %v528, %v529
  %v531 = vsub.f32 1.0, %v530
  %v532 = vmul.f32 %v529, %v531
  %v533 = vadd.f32 %v529, %v532
  %vm534 = vweird.f32 %v528
  %vm535 = vweird.f32 %v529
  %vm536 = vmor %vm534, %vm535
  %v537 = vsel %vm536, %v529, %v533
  %v538 = vand.u32 2147483647, %v528
  %vm539 = vcmp.eq.f32.partialorder %v538, 8.507059e+37
  %v540 = vand.u32 %v528, 2147483648
  %v541 = vor.u32 1.1754944e-38, %v540
  %v542 = vsel %vm539, %v541, %v537
  %v543 = vmul.f32 1.0, %v542
  %v544 = vxor.u32 %v522, 2147483648
  %v545 = vmul.f32 %v544, 1.442695
  %v546 = vpow.pop %v545
  %v547 = vadd.f32 %v546, 1.0
  %v548 = vrcp.pop %v547
  %v549 = vmul.f32 %v547, %v548
  %v550 = vsub.f32 1.0, %v549
  %v551 = vmul.f32 %v548, %v550
  %v552 = vadd.f32 %v548, %v551
  %vm553 = vweird.f32 %v547
  %vm554 = vweird.f32 %v548
  %vm555 = vmor %vm553, %vm554
  %v556 = vsel %vm555, %v548, %v552
  %v557 = vand.u32 2147483647, %v547
  %vm558 = vcmp.eq.f32.partialorder %v557, 8.507059e+37
  %v559 = vand.u32 %v547, 2147483648
  %v560 = vor.u32 1.1754944e-38, %v559
  %v561 = vsel %vm558, %v560, %v556
  %v562 = vmul.f32 1.0, %v561
  %v563 = vtanh.pop %v523
  %v564 = vxor.u32 %v524, 2147483648
  %v565 = vmul.f32 %v564, 1.442695
  %v566 = vpow.pop %v565
  %v567 = vadd.f32 %v566, 1.0
  %v568 = vrcp.pop %v567
  %v569 = vmul.f32 %v567, %v568
  %v570 = vsub.f32 1.0, %v569
  %v571 = vmul.f32 %v568, %v570
  %v572 = vadd.f32 %v568, %v571
  %vm573 = vweird.f32 %v567
  %vm574 = vweird.f32 %v568
  %vm575 = vmor %vm573, %vm574
  %v576 = vsel %vm575, %v568, %v572
  %v577 = vand.u32 2147483647, %v567
  %vm578 = vcmp.eq.f32.partialorder %v577, 8.507059e+37
  %v579 = vand.u32 %v567, 2147483648
  %v580 = vor.u32 1.1754944e-38, %v579
  %v581 = vsel %vm578, %v580, %v576
  %v582 = vmul.f32 1.0, %v581
  %v583 = vmul.f32 %v562, %v458
  %v584 = vmul.f32 %v543, %v563
  %v585 = vadd.f32 %v583, %v584
  %v586 = vtanh.pop %v585
  %v587 = vmul.f32 %v582, %v586
  %s588 = scalar_lea.vmem %s2, 16
  %589 = vst [vmem:[%s588] sm:$0xff] %v587
  %s590 = scalar_lea.vmem %s0, 96
  %v591 = vld [vmem:[%s590] sm:$0xff]
  %v592 = vld [vmem:[%s590 + $0x8] sm:$0xff]
  %v593 = vld [vmem:[%s590 + $0x10] sm:$0xff]
  %v594 = vld [vmem:[%s590 + $0x18] sm:$0xff]
  %v595 = vpack.c.bf16 %v587, %v587
  %596 = vmatpush.bf16.msra.mxu0 %v180
  %597 = vmatpush.bf16.msra.mxu0 %v176
  %598 = vmatpush.bf16.msra.mxu0 %v172
  %599 = vmatpush.bf16.msra.mxu0 %v168
  %600 = vmatpush.bf16.msra.mxu0 %v164
  %601 = vmatpush.bf16.msra.mxu0 %v160
  %602 = vmatpush.bf16.msra.mxu0 %v156
  %603 = vmatpush.bf16.msra.mxu0 %v152
  %604 = vmatmul.bf16.gmra.mxu0 %v595
  %v605 = vpop.f32.mrf.mxu0
  %v606 = vadd.f32 0.0, %v605
  %v607 = vpop.f32.mrf.mxu0
  %608 = vdwg.mxu0
  %609 = vmatpush.bf16.msra.mxu0 %v181
  %610 = vmatpush.bf16.msra.mxu0 %v177
  %611 = vmatpush.bf16.msra.mxu0 %v173
  %612 = vmatpush.bf16.msra.mxu0 %v169
  %613 = vmatpush.bf16.msra.mxu0 %v165
  %614 = vmatpush.bf16.msra.mxu0 %v161
  %615 = vmatpush.bf16.msra.mxu0 %v157
  %616 = vmatpush.bf16.msra.mxu0 %v153
  %617 = vmatmul.bf16.gmra.mxu0 %v595
  %v618 = vpop.f32.mrf.mxu0
  %v619 = vadd.f32 0.0, %v618
  %v620 = vpop.f32.mrf.mxu0
  %621 = vdwg.mxu0
  %622 = vmatpush.bf16.msra.mxu0 %v182
  %623 = vmatpush.bf16.msra.mxu0 %v178
  %624 = vmatpush.bf16.msra.mxu0 %v174
  %625 = vmatpush.bf16.msra.mxu0 %v170
  %626 = vmatpush.bf16.msra.mxu0 %v166
  %627 = vmatpush.bf16.msra.mxu0 %v162
  %628 = vmatpush.bf16.msra.mxu0 %v158
  %629 = vmatpush.bf16.msra.mxu0 %v154
  %630 = vmatmul.bf16.gmra.mxu0 %v595
  %v631 = vpop.f32.mrf.mxu0
  %v632 = vadd.f32 0.0, %v631
  %v633 = vpop.f32.mrf.mxu0
  %634 = vdwg.mxu0
  %635 = vmatpush.bf16.msra.mxu0 %v183
  %636 = vmatpush.bf16.msra.mxu0 %v179
  %637 = vmatpush.bf16.msra.mxu0 %v175
  %638 = vmatpush.bf16.msra.mxu0 %v171
  %639 = vmatpush.bf16.msra.mxu0 %v167
  %640 = vmatpush.bf16.msra.mxu0 %v163
  %641 = vmatpush.bf16.msra.mxu0 %v159
  %642 = vmatpush.bf16.msra.mxu0 %v155
  %643 = vmatmul.bf16.gmra.mxu0 %v595
  %v644 = vpop.f32.mrf.mxu0
  %v645 = vadd.f32 0.0, %v644
  %v646 = vpop.f32.mrf.mxu0
  %647 = vdwg.mxu0
  %v648 = vadd.f32 %v591, %v606
  %v649 = vadd.f32 %v592, %v619
  %v650 = vadd.f32 %v593, %v632
  %v651 = vadd.f32 %v594, %v645
  %v652 = vxor.u32 %v648, 2147483648
  %v653 = vmul.f32 %v652, 1.442695
  %v654 = vpow.pop %v653
  %v655 = vadd.f32 %v654, 1.0
  %v656 = vrcp.pop %v655
  %v657 = vmul.f32 %v655, %v656
  %v658 = vsub.f32 1.0, %v657
  %v659 = vmul.f32 %v656, %v658
  %v660 = vadd.f32 %v656, %v659
  %vm661 = vweird.f32 %v655
  %vm662 = vweird.f32 %v656
  %vm663 = vmor %vm661, %vm662
  %v664 = vsel %vm663, %v656, %v660
  %v665 = vand.u32 2147483647, %v655
  %vm666 = vcmp.eq.f32.partialorder %v665, 8.507059e+37
  %v667 = vand.u32 %v655, 2147483648
  %v668 = vor.u32 1.1754944e-38, %v667
  %v669 = vsel %vm666, %v668, %v664
  %v670 = vmul.f32 1.0, %v669
  %v671 = vxor.u32 %v649, 2147483648
  %v672 = vmul.f32 %v671, 1.442695
  %v673 = vpow.pop %v672
  %v674 = vadd.f32 %v673, 1.0
  %v675 = vrcp.pop %v674
  %v676 = vmul.f32 %v674, %v675
  %v677 = vsub.f32 1.0, %v676
  %v678 = vmul.f32 %v675, %v677
  %v679 = vadd.f32 %v675, %v678
  %vm680 = vweird.f32 %v674
  %vm681 = vweird.f32 %v675
  %vm682 = vmor %vm680, %vm681
  %v683 = vsel %vm682, %v675, %v679
  %v684 = vand.u32 2147483647, %v674
  %vm685 = vcmp.eq.f32.partialorder %v684, 8.507059e+37
  %v686 = vand.u32 %v674, 2147483648
  %v687 = vor.u32 1.1754944e-38, %v686
  %v688 = vsel %vm685, %v687, %v683
  %v689 = vmul.f32 1.0, %v688
  %v690 = vtanh.pop %v650
  %v691 = vxor.u32 %v651, 2147483648
  %v692 = vmul.f32 %v691, 1.442695
  %v693 = vpow.pop %v692
  %v694 = vadd.f32 %v693, 1.0
  %v695 = vrcp.pop %v694
  %v696 = vmul.f32 %v694, %v695
  %v697 = vsub.f32 1.0, %v696
  %v698 = vmul.f32 %v695, %v697
  %v699 = vadd.f32 %v695, %v698
  %vm700 = vweird.f32 %v694
  %vm701 = vweird.f32 %v695
  %vm702 = vmor %vm700, %vm701
  %v703 = vsel %vm702, %v695, %v699
  %v704 = vand.u32 2147483647, %v694
  %vm705 = vcmp.eq.f32.partialorder %v704, 8.507059e+37
  %v706 = vand.u32 %v694, 2147483648
  %v707 = vor.u32 1.1754944e-38, %v706
  %v708 = vsel %vm705, %v707, %v703
  %v709 = vmul.f32 1.0, %v708
  %v710 = vmul.f32 %v689, %v585
  %v711 = vmul.f32 %v670, %v690
  %v712 = vadd.f32 %v710, %v711
  %v713 = vtanh.pop %v712
  %v714 = vmul.f32 %v709, %v713
  %s715 = scalar_lea.vmem %s2, 24
  %716 = vst [vmem:[%s715] sm:$0xff] %v714
  %s717 = scalar_lea.vmem %s0, 128
  %v718 = vld [vmem:[%s717] sm:$0xff]
  %v719 = vld [vmem:[%s717 + $0x8] sm:$0xff]
  %v720 = vld [vmem:[%s717 + $0x10] sm:$0xff]
  %v721 = vld [vmem:[%s717 + $0x18] sm:$0xff]
  %v722 = vpack.c.bf16 %v714, %v714
  %723 = vmatpush.bf16.msra.mxu0 %v180
  %724 = vmatpush.bf16.msra.mxu0 %v176
  %725 = vmatpush.bf16.msra.mxu0 %v172
  %726 = vmatpush.bf16.msra.mxu0 %v168
  %727 = vmatpush.bf16.msra.mxu0 %v164
  %728 = vmatpush.bf16.msra.mxu0 %v160
  %729 = vmatpush.bf16.msra.mxu0 %v156
  %730 = vmatpush.bf16.msra.mxu0 %v152
  %731 = vmatmul.bf16.gmra.mxu0 %v722
  %v732 = vpop.f32.mrf.mxu0
  %v733 = vadd.f32 0.0, %v732
  %v734 = vpop.f32.mrf.mxu0
  %735 = vdwg.mxu0
  %736 = vmatpush.bf16.msra.mxu0 %v181
  %737 = vmatpush.bf16.msra.mxu0 %v177
  %738 = vmatpush.bf16.msra.mxu0 %v173
  %739 = vmatpush.bf16.msra.mxu0 %v169
  %740 = vmatpush.bf16.msra.mxu0 %v165
  %741 = vmatpush.bf16.msra.mxu0 %v161
  %742 = vmatpush.bf16.msra.mxu0 %v157
  %743 = vmatpush.bf16.msra.mxu0 %v153
  %744 = vmatmul.bf16.gmra.mxu0 %v722
  %v745 = vpop.f32.mrf.mxu0
  %v746 = vadd.f32 0.0, %v745
  %v747 = vpop.f32.mrf.mxu0
  %748 = vdwg.mxu0
  %749 = vmatpush.bf16.msra.mxu0 %v182
  %750 = vmatpush.bf16.msra.mxu0 %v178
  %751 = vmatpush.bf16.msra.mxu0 %v174
  %752 = vmatpush.bf16.msra.mxu0 %v170
  %753 = vmatpush.bf16.msra.mxu0 %v166
  %754 = vmatpush.bf16.msra.mxu0 %v162
  %755 = vmatpush.bf16.msra.mxu0 %v158
  %756 = vmatpush.bf16.msra.mxu0 %v154
  %757 = vmatmul.bf16.gmra.mxu0 %v722
  %v758 = vpop.f32.mrf.mxu0
  %v759 = vadd.f32 0.0, %v758
  %v760 = vpop.f32.mrf.mxu0
  %761 = vdwg.mxu0
  %762 = vmatpush.bf16.msra.mxu0 %v183
  %763 = vmatpush.bf16.msra.mxu0 %v179
  %764 = vmatpush.bf16.msra.mxu0 %v175
  %765 = vmatpush.bf16.msra.mxu0 %v171
  %766 = vmatpush.bf16.msra.mxu0 %v167
  %767 = vmatpush.bf16.msra.mxu0 %v163
  %768 = vmatpush.bf16.msra.mxu0 %v159
  %769 = vmatpush.bf16.msra.mxu0 %v155
  %770 = vmatmul.bf16.gmra.mxu0 %v722
  %v771 = vpop.f32.mrf.mxu0
  %v772 = vadd.f32 0.0, %v771
  %v773 = vpop.f32.mrf.mxu0
  %774 = vdwg.mxu0
  %v775 = vadd.f32 %v718, %v733
  %v776 = vadd.f32 %v719, %v746
  %v777 = vadd.f32 %v720, %v759
  %v778 = vadd.f32 %v721, %v772
  %v779 = vxor.u32 %v775, 2147483648
  %v780 = vmul.f32 %v779, 1.442695
  %v781 = vpow.pop %v780
  %v782 = vadd.f32 %v781, 1.0
  %v783 = vrcp.pop %v782
  %v784 = vmul.f32 %v782, %v783
  %v785 = vsub.f32 1.0, %v784
  %v786 = vmul.f32 %v783, %v785
  %v787 = vadd.f32 %v783, %v786
  %vm788 = vweird.f32 %v782
  %vm789 = vweird.f32 %v783
  %vm790 = vmor %vm788, %vm789
  %v791 = vsel %vm790, %v783, %v787
  %v792 = vand.u32 2147483647, %v782
  %vm793 = vcmp.eq.f32.partialorder %v792, 8.507059e+37
  %v794 = vand.u32 %v782, 2147483648
  %v795 = vor.u32 1.1754944e-38, %v794
  %v796 = vsel %vm793, %v795, %v791
  %v797 = vmul.f32 1.0, %v796
  %v798 = vxor.u32 %v776, 2147483648
  %v799 = vmul.f32 %v798, 1.442695
  %v800 = vpow.pop %v799
  %v801 = vadd.f32 %v800, 1.0
  %v802 = vrcp.pop %v801
  %v803 = vmul.f32 %v801, %v802
  %v804 = vsub.f32 1.0, %v803
  %v805 = vmul.f32 %v802, %v804
  %v806 = vadd.f32 %v802, %v805
  %vm807 = vweird.f32 %v801
  %vm808 = vweird.f32 %v802
  %vm809 = vmor %vm807, %vm808
  %v810 = vsel %vm809, %v802, %v806
  %v811 = vand.u32 2147483647, %v801
  %vm812 = vcmp.eq.f32.partialorder %v811, 8.507059e+37
  %v813 = vand.u32 %v801, 2147483648
  %v814 = vor.u32 1.1754944e-38, %v813
  %v815 = vsel %vm812, %v814, %v810
  %v816 = vmul.f32 1.0, %v815
  %v817 = vtanh.pop %v777
  %v818 = vxor.u32 %v778, 2147483648
  %v819 = vmul.f32 %v818, 1.442695
  %v820 = vpow.pop %v819
  %v821 = vadd.f32 %v820, 1.0
  %v822 = vrcp.pop %v821
  %v823 = vmul.f32 %v821, %v822
  %v824 = vsub.f32 1.0, %v823
  %v825 = vmul.f32 %v822, %v824
  %v826 = vadd.f32 %v822, %v825
  %vm827 = vweird.f32 %v821
  %vm828 = vweird.f32 %v822
  %vm829 = vmor %vm827, %vm828
  %v830 = vsel %vm829, %v822, %v826
  %v831 = vand.u32 2147483647, %v821
  %vm832 = vcmp.eq.f32.partialorder %v831, 8.507059e+37
  %v833 = vand.u32 %v821, 2147483648
  %v834 = vor.u32 1.1754944e-38, %v833
  %v835 = vsel %vm832, %v834, %v830
  %v836 = vmul.f32 1.0, %v835
  %v837 = vmul.f32 %v816, %v712
  %v838 = vmul.f32 %v797, %v817
  %v839 = vadd.f32 %v837, %v838
  %v840 = vtanh.pop %v839
  %v841 = vmul.f32 %v836, %v840
  %s842 = scalar_lea.vmem %s2, 32
  %843 = vst [vmem:[%s842] sm:$0xff] %v841
  %s844 = scalar_lea.vmem %s0, 160
  %v845 = vld [vmem:[%s844] sm:$0xff]
  %v846 = vld [vmem:[%s844 + $0x8] sm:$0xff]
  %v847 = vld [vmem:[%s844 + $0x10] sm:$0xff]
  %v848 = vld [vmem:[%s844 + $0x18] sm:$0xff]
  %v849 = vpack.c.bf16 %v841, %v841
  %850 = vmatpush.bf16.msra.mxu0 %v180
  %851 = vmatpush.bf16.msra.mxu0 %v176
  %852 = vmatpush.bf16.msra.mxu0 %v172
  %853 = vmatpush.bf16.msra.mxu0 %v168
  %854 = vmatpush.bf16.msra.mxu0 %v164
  %855 = vmatpush.bf16.msra.mxu0 %v160
  %856 = vmatpush.bf16.msra.mxu0 %v156
  %857 = vmatpush.bf16.msra.mxu0 %v152
  %858 = vmatmul.bf16.gmra.mxu0 %v849
  %v859 = vpop.f32.mrf.mxu0
  %v860 = vadd.f32 0.0, %v859
  %v861 = vpop.f32.mrf.mxu0
  %862 = vdwg.mxu0
  %863 = vmatpush.bf16.msra.mxu0 %v181
  %864 = vmatpush.bf16.msra.mxu0 %v177
  %865 = vmatpush.bf16.msra.mxu0 %v173
  %866 = vmatpush.bf16.msra.mxu0 %v169
  %867 = vmatpush.bf16.msra.mxu0 %v165
  %868 = vmatpush.bf16.msra.mxu0 %v161
  %869 = vmatpush.bf16.msra.mxu0 %v157
  %870 = vmatpush.bf16.msra.mxu0 %v153
  %871 = vmatmul.bf16.gmra.mxu0 %v849
  %v872 = vpop.f32.mrf.mxu0
  %v873 = vadd.f32 0.0, %v872
  %v874 = vpop.f32.mrf.mxu0
  %875 = vdwg.mxu0
  %876 = vmatpush.bf16.msra.mxu0 %v182
  %877 = vmatpush.bf16.msra.mxu0 %v178
  %878 = vmatpush.bf16.msra.mxu0 %v174
  %879 = vmatpush.bf16.msra.mxu0 %v170
  %880 = vmatpush.bf16.msra.mxu0 %v166
  %881 = vmatpush.bf16.msra.mxu0 %v162
  %882 = vmatpush.bf16.msra.mxu0 %v158
  %883 = vmatpush.bf16.msra.mxu0 %v154
  %884 = vmatmul.bf16.gmra.mxu0 %v849
  %v885 = vpop.f32.mrf.mxu0
  %v886 = vadd.f32 0.0, %v885
  %v887 = vpop.f32.mrf.mxu0
  %888 = vdwg.mxu0
  %889 = vmatpush.bf16.msra.mxu0 %v183
  %890 = vmatpush.bf16.msra.mxu0 %v179
  %891 = vmatpush.bf16.msra.mxu0 %v175
  %892 = vmatpush.bf16.msra.mxu0 %v171
  %893 = vmatpush.bf16.msra.mxu0 %v167
  %894 = vmatpush.bf16.msra.mxu0 %v163
  %895 = vmatpush.bf16.msra.mxu0 %v159
  %896 = vmatpush.bf16.msra.mxu0 %v155
  %897 = vmatmul.bf16.gmra.mxu0 %v849
  %v898 = vpop.f32.mrf.mxu0
  %v899 = vadd.f32 0.0, %v898
  %v900 = vpop.f32.mrf.mxu0
  %901 = vdwg.mxu0
  %v902 = vadd.f32 %v845, %v860
  %v903 = vadd.f32 %v846, %v873
  %v904 = vadd.f32 %v847, %v886
  %v905 = vadd.f32 %v848, %v899
  %v906 = vxor.u32 %v902, 2147483648
  %v907 = vmul.f32 %v906, 1.442695
  %v908 = vpow.pop %v907
  %v909 = vadd.f32 %v908, 1.0
  %v910 = vrcp.pop %v909
  %v911 = vmul.f32 %v909, %v910
  %v912 = vsub.f32 1.0, %v911
  %v913 = vmul.f32 %v910, %v912
  %v914 = vadd.f32 %v910, %v913
  %vm915 = vweird.f32 %v909
  %vm916 = vweird.f32 %v910
  %vm917 = vmor %vm915, %vm916
  %v918 = vsel %vm917, %v910, %v914
  %v919 = vand.u32 2147483647, %v909
  %vm920 = vcmp.eq.f32.partialorder %v919, 8.507059e+37
  %v921 = vand.u32 %v909, 2147483648
  %v922 = vor.u32 1.1754944e-38, %v921
  %v923 = vsel %vm920, %v922, %v918
  %v924 = vmul.f32 1.0, %v923
  %v925 = vxor.u32 %v903, 2147483648
  %v926 = vmul.f32 %v925, 1.442695
  %v927 = vpow.pop %v926
  %v928 = vadd.f32 %v927, 1.0
  %v929 = vrcp.pop %v928
  %v930 = vmul.f32 %v928, %v929
  %v931 = vsub.f32 1.0, %v930
  %v932 = vmul.f32 %v929, %v931
  %v933 = vadd.f32 %v929, %v932
  %vm934 = vweird.f32 %v928
  %vm935 = vweird.f32 %v929
  %vm936 = vmor %vm934, %vm935
  %v937 = vsel %vm936, %v929, %v933
  %v938 = vand.u32 2147483647, %v928
  %vm939 = vcmp.eq.f32.partialorder %v938, 8.507059e+37
  %v940 = vand.u32 %v928, 2147483648
  %v941 = vor.u32 1.1754944e-38, %v940
  %v942 = vsel %vm939, %v941, %v937
  %v943 = vmul.f32 1.0, %v942
  %v944 = vtanh.pop %v904
  %v945 = vxor.u32 %v905, 2147483648
  %v946 = vmul.f32 %v945, 1.442695
  %v947 = vpow.pop %v946
  %v948 = vadd.f32 %v947, 1.0
  %v949 = vrcp.pop %v948
  %v950 = vmul.f32 %v948, %v949
  %v951 = vsub.f32 1.0, %v950
  %v952 = vmul.f32 %v949, %v951
  %v953 = vadd.f32 %v949, %v952
  %vm954 = vweird.f32 %v948
  %vm955 = vweird.f32 %v949
  %vm956 = vmor %vm954, %vm955
  %v957 = vsel %vm956, %v949, %v953
  %v958 = vand.u32 2147483647, %v948
  %vm959 = vcmp.eq.f32.partialorder %v958, 8.507059e+37
  %v960 = vand.u32 %v948, 2147483648
  %v961 = vor.u32 1.1754944e-38, %v960
  %v962 = vsel %vm959, %v961, %v957
  %v963 = vmul.f32 1.0, %v962
  %v964 = vmul.f32 %v943, %v839
  %v965 = vmul.f32 %v924, %v944
  %v966 = vadd.f32 %v964, %v965
  %v967 = vtanh.pop %v966
  %v968 = vmul.f32 %v963, %v967
  %s969 = scalar_lea.vmem %s2, 40
  %970 = vst [vmem:[%s969] sm:$0xff] %v968
  %s971 = scalar_lea.vmem %s0, 192
  %v972 = vld [vmem:[%s971] sm:$0xff]
  %v973 = vld [vmem:[%s971 + $0x8] sm:$0xff]
  %v974 = vld [vmem:[%s971 + $0x10] sm:$0xff]
  %v975 = vld [vmem:[%s971 + $0x18] sm:$0xff]
  %v976 = vpack.c.bf16 %v968, %v968
  %977 = vmatpush.bf16.msra.mxu0 %v180
  %978 = vmatpush.bf16.msra.mxu0 %v176
  %979 = vmatpush.bf16.msra.mxu0 %v172
  %980 = vmatpush.bf16.msra.mxu0 %v168
  %981 = vmatpush.bf16.msra.mxu0 %v164
  %982 = vmatpush.bf16.msra.mxu0 %v160
  %983 = vmatpush.bf16.msra.mxu0 %v156
  %984 = vmatpush.bf16.msra.mxu0 %v152
  %985 = vmatmul.bf16.gmra.mxu0 %v976
  %v986 = vpop.f32.mrf.mxu0
  %v987 = vadd.f32 0.0, %v986
  %v988 = vpop.f32.mrf.mxu0
  %989 = vdwg.mxu0
  %990 = vmatpush.bf16.msra.mxu0 %v181
  %991 = vmatpush.bf16.msra.mxu0 %v177
  %992 = vmatpush.bf16.msra.mxu0 %v173
  %993 = vmatpush.bf16.msra.mxu0 %v169
  %994 = vmatpush.bf16.msra.mxu0 %v165
  %995 = vmatpush.bf16.msra.mxu0 %v161
  %996 = vmatpush.bf16.msra.mxu0 %v157
  %997 = vmatpush.bf16.msra.mxu0 %v153
  %998 = vmatmul.bf16.gmra.mxu0 %v976
  %v999 = vpop.f32.mrf.mxu0
  %v1000 = vadd.f32 0.0, %v999
  %v1001 = vpop.f32.mrf.mxu0
  %1002 = vdwg.mxu0
  %1003 = vmatpush.bf16.msra.mxu0 %v182
  %1004 = vmatpush.bf16.msra.mxu0 %v178
  %1005 = vmatpush.bf16.msra.mxu0 %v174
  %1006 = vmatpush.bf16.msra.mxu0 %v170
  %1007 = vmatpush.bf16.msra.mxu0 %v166
  %1008 = vmatpush.bf16.msra.mxu0 %v162
  %1009 = vmatpush.bf16.msra.mxu0 %v158
  %1010 = vmatpush.bf16.msra.mxu0 %v154
  %1011 = vmatmul.bf16.gmra.mxu0 %v976
  %v1012 = vpop.f32.mrf.mxu0
  %v1013 = vadd.f32 0.0, %v1012
  %v1014 = vpop.f32.mrf.mxu0
  %1015 = vdwg.mxu0
  %1016 = vmatpush.bf16.msra.mxu0 %v183
  %1017 = vmatpush.bf16.msra.mxu0 %v179
  %1018 = vmatpush.bf16.msra.mxu0 %v175
  %1019 = vmatpush.bf16.msra.mxu0 %v171
  %1020 = vmatpush.bf16.msra.mxu0 %v167
  %1021 = vmatpush.bf16.msra.mxu0 %v163
  %1022 = vmatpush.bf16.msra.mxu0 %v159
  %1023 = vmatpush.bf16.msra.mxu0 %v155
  %1024 = vmatmul.bf16.gmra.mxu0 %v976
  %v1025 = vpop.f32.mrf.mxu0
  %v1026 = vadd.f32 0.0, %v1025
  %v1027 = vpop.f32.mrf.mxu0
  %1028 = vdwg.mxu0
  %v1029 = vadd.f32 %v972, %v987
  %v1030 = vadd.f32 %v973, %v1000
  %v1031 = vadd.f32 %v974, %v1013
  %v1032 = vadd.f32 %v975, %v1026
  %v1033 = vxor.u32 %v1029, 2147483648
  %v1034 = vmul.f32 %v1033, 1.442695
  %v1035 = vpow.pop %v1034
  %v1036 = vadd.f32 %v1035, 1.0
  %v1037 = vrcp.pop %v1036
  %v1038 = vmul.f32 %v1036, %v1037
  %v1039 = vsub.f32 1.0, %v1038
  %v1040 = vmul.f32 %v1037, %v1039
  %v1041 = vadd.f32 %v1037, %v1040
  %vm1042 = vweird.f32 %v1036
  %vm1043 = vweird.f32 %v1037
  %vm1044 = vmor %vm1042, %vm1043
  %v1045 = vsel %vm1044, %v1037, %v1041
  %v1046 = vand.u32 2147483647, %v1036
  %vm1047 = vcmp.eq.f32.partialorder %v1046, 8.507059e+37
  %v1048 = vand.u32 %v1036, 2147483648
  %v1049 = vor.u32 1.1754944e-38, %v1048
  %v1050 = vsel %vm1047, %v1049, %v1045
  %v1051 = vmul.f32 1.0, %v1050
  %v1052 = vxor.u32 %v1030, 2147483648
  %v1053 = vmul.f32 %v1052, 1.442695
  %v1054 = vpow.pop %v1053
  %v1055 = vadd.f32 %v1054, 1.0
  %v1056 = vrcp.pop %v1055
  %v1057 = vmul.f32 %v1055, %v1056
  %v1058 = vsub.f32 1.0, %v1057
  %v1059 = vmul.f32 %v1056, %v1058
  %v1060 = vadd.f32 %v1056, %v1059
  %vm1061 = vweird.f32 %v1055
  %vm1062 = vweird.f32 %v1056
  %vm1063 = vmor %vm1061, %vm1062
  %v1064 = vsel %vm1063, %v1056, %v1060
  %v1065 = vand.u32 2147483647, %v1055
  %vm1066 = vcmp.eq.f32.partialorder %v1065, 8.507059e+37
  %v1067 = vand.u32 %v1055, 2147483648
  %v1068 = vor.u32 1.1754944e-38, %v1067
  %v1069 = vsel %vm1066, %v1068, %v1064
  %v1070 = vmul.f32 1.0, %v1069
  %v1071 = vtanh.pop %v1031
  %v1072 = vxor.u32 %v1032, 2147483648
  %v1073 = vmul.f32 %v1072, 1.442695
  %v1074 = vpow.pop %v1073
  %v1075 = vadd.f32 %v1074, 1.0
  %v1076 = vrcp.pop %v1075
  %v1077 = vmul.f32 %v1075, %v1076
  %v1078 = vsub.f32 1.0, %v1077
  %v1079 = vmul.f32 %v1076, %v1078
  %v1080 = vadd.f32 %v1076, %v1079
  %vm1081 = vweird.f32 %v1075
  %vm1082 = vweird.f32 %v1076
  %vm1083 = vmor %vm1081, %vm1082
  %v1084 = vsel %vm1083, %v1076, %v1080
  %v1085 = vand.u32 2147483647, %v1075
  %vm1086 = vcmp.eq.f32.partialorder %v1085, 8.507059e+37
  %v1087 = vand.u32 %v1075, 2147483648
  %v1088 = vor.u32 1.1754944e-38, %v1087
  %v1089 = vsel %vm1086, %v1088, %v1084
  %v1090 = vmul.f32 1.0, %v1089
  %v1091 = vmul.f32 %v1070, %v966
  %v1092 = vmul.f32 %v1051, %v1071
  %v1093 = vadd.f32 %v1091, %v1092
  %v1094 = vtanh.pop %v1093
  %v1095 = vmul.f32 %v1090, %v1094
  %s1096 = scalar_lea.vmem %s2, 48
  %1097 = vst [vmem:[%s1096] sm:$0xff] %v1095
  %s1098 = scalar_lea.vmem %s0, 224
  %v1099 = vld [vmem:[%s1098] sm:$0xff]
  %v1100 = vld [vmem:[%s1098 + $0x8] sm:$0xff]
  %v1101 = vld [vmem:[%s1098 + $0x10] sm:$0xff]
  %v1102 = vld [vmem:[%s1098 + $0x18] sm:$0xff]
  %v1103 = vpack.c.bf16 %v1095, %v1095
  %1104 = vmatpush.bf16.msra.mxu0 %v180
  %1105 = vmatpush.bf16.msra.mxu0 %v176
  %1106 = vmatpush.bf16.msra.mxu0 %v172
  %1107 = vmatpush.bf16.msra.mxu0 %v168
  %1108 = vmatpush.bf16.msra.mxu0 %v164
  %1109 = vmatpush.bf16.msra.mxu0 %v160
  %1110 = vmatpush.bf16.msra.mxu0 %v156
  %1111 = vmatpush.bf16.msra.mxu0 %v152
  %1112 = vmatmul.bf16.gmra.mxu0 %v1103
  %v1113 = vpop.f32.mrf.mxu0
  %v1114 = vadd.f32 0.0, %v1113
  %v1115 = vpop.f32.mrf.mxu0
  %1116 = vdwg.mxu0
  %1117 = vmatpush.bf16.msra.mxu0 %v181
  %1118 = vmatpush.bf16.msra.mxu0 %v177
  %1119 = vmatpush.bf16.msra.mxu0 %v173
  %1120 = vmatpush.bf16.msra.mxu0 %v169
  %1121 = vmatpush.bf16.msra.mxu0 %v165
  %1122 = vmatpush.bf16.msra.mxu0 %v161
  %1123 = vmatpush.bf16.msra.mxu0 %v157
  %1124 = vmatpush.bf16.msra.mxu0 %v153
  %1125 = vmatmul.bf16.gmra.mxu0 %v1103
  %v1126 = vpop.f32.mrf.mxu0
  %v1127 = vadd.f32 0.0, %v1126
  %v1128 = vpop.f32.mrf.mxu0
  %1129 = vdwg.mxu0
  %1130 = vmatpush.bf16.msra.mxu0 %v182
  %1131 = vmatpush.bf16.msra.mxu0 %v178
  %1132 = vmatpush.bf16.msra.mxu0 %v174
  %1133 = vmatpush.bf16.msra.mxu0 %v170
  %1134 = vmatpush.bf16.msra.mxu0 %v166
  %1135 = vmatpush.bf16.msra.mxu0 %v162
  %1136 = vmatpush.bf16.msra.mxu0 %v158
  %1137 = vmatpush.bf16.msra.mxu0 %v154
  %1138 = vmatmul.bf16.gmra.mxu0 %v1103
  %v1139 = vpop.f32.mrf.mxu0
  %v1140 = vadd.f32 0.0, %v1139
  %v1141 = vpop.f32.mrf.mxu0
  %1142 = vdwg.mxu0
  %1143 = vmatpush.bf16.msra.mxu0 %v183
  %1144 = vmatpush.bf16.msra.mxu0 %v179
  %1145 = vmatpush.bf16.msra.mxu0 %v175
  %1146 = vmatpush.bf16.msra.mxu0 %v171
  %1147 = vmatpush.bf16.msra.mxu0 %v167
  %1148 = vmatpush.bf16.msra.mxu0 %v163
  %1149 = vmatpush.bf16.msra.mxu0 %v159
  %1150 = vmatpush.bf16.msra.mxu0 %v155
  %1151 = vmatmul.bf16.gmra.mxu0 %v1103
  %v1152 = vpop.f32.mrf.mxu0
  %v1153 = vadd.f32 0.0, %v1152
  %v1154 = vpop.f32.mrf.mxu0
  %1155 = vdwg.mxu0
  %v1156 = vadd.f32 %v1099, %v1114
  %v1157 = vadd.f32 %v1100, %v1127
  %v1158 = vadd.f32 %v1101, %v1140
  %v1159 = vadd.f32 %v1102, %v1153
  %v1160 = vxor.u32 %v1156, 2147483648
  %v1161 = vmul.f32 %v1160, 1.442695
  %v1162 = vpow.pop %v1161
  %v1163 = vadd.f32 %v1162, 1.0
  %v1164 = vrcp.pop %v1163
  %v1165 = vmul.f32 %v1163, %v1164
  %v1166 = vsub.f32 1.0, %v1165
  %v1167 = vmul.f32 %v1164, %v1166
  %v1168 = vadd.f32 %v1164, %v1167
  %vm1169 = vweird.f32 %v1163
  %vm1170 = vweird.f32 %v1164
  %vm1171 = vmor %vm1169, %vm1170
  %v1172 = vsel %vm1171, %v1164, %v1168
  %v1173 = vand.u32 2147483647, %v1163
  %vm1174 = vcmp.eq.f32.partialorder %v1173, 8.507059e+37
  %v1175 = vand.u32 %v1163, 2147483648
  %v1176 = vor.u32 1.1754944e-38, %v1175
  %v1177 = vsel %vm1174, %v1176, %v1172
  %v1178 = vmul.f32 1.0, %v1177
  %v1179 = vxor.u32 %v1157, 2147483648
  %v1180 = vmul.f32 %v1179, 1.442695
  %v1181 = vpow.pop %v1180
  %v1182 = vadd.f32 %v1181, 1.0
  %v1183 = vrcp.pop %v1182
  %v1184 = vmul.f32 %v1182, %v1183
  %v1185 = vsub.f32 1.0, %v1184
  %v1186 = vmul.f32 %v1183, %v1185
  %v1187 = vadd.f32 %v1183, %v1186
  %vm1188 = vweird.f32 %v1182
  %vm1189 = vweird.f32 %v1183
  %vm1190 = vmor %vm1188, %vm1189
  %v1191 = vsel %vm1190, %v1183, %v1187
  %v1192 = vand.u32 2147483647, %v1182
  %vm1193 = vcmp.eq.f32.partialorder %v1192, 8.507059e+37
  %v1194 = vand.u32 %v1182, 2147483648
  %v1195 = vor.u32 1.1754944e-38, %v1194
  %v1196 = vsel %vm1193, %v1195, %v1191
  %v1197 = vmul.f32 1.0, %v1196
  %v1198 = vtanh.pop %v1158
  %v1199 = vxor.u32 %v1159, 2147483648
  %v1200 = vmul.f32 %v1199, 1.442695
  %v1201 = vpow.pop %v1200
  %v1202 = vadd.f32 %v1201, 1.0
  %v1203 = vrcp.pop %v1202
  %v1204 = vmul.f32 %v1202, %v1203
  %v1205 = vsub.f32 1.0, %v1204
  %v1206 = vmul.f32 %v1203, %v1205
  %v1207 = vadd.f32 %v1203, %v1206
  %vm1208 = vweird.f32 %v1202
  %vm1209 = vweird.f32 %v1203
  %vm1210 = vmor %vm1208, %vm1209
  %v1211 = vsel %vm1210, %v1203, %v1207
  %v1212 = vand.u32 2147483647, %v1202
  %vm1213 = vcmp.eq.f32.partialorder %v1212, 8.507059e+37
  %v1214 = vand.u32 %v1202, 2147483648
  %v1215 = vor.u32 1.1754944e-38, %v1214
  %v1216 = vsel %vm1213, %v1215, %v1211
  %v1217 = vmul.f32 1.0, %v1216
  %v1218 = vmul.f32 %v1197, %v1093
  %v1219 = vmul.f32 %v1178, %v1198
  %v1220 = vadd.f32 %v1218, %v1219
  %v1221 = vtanh.pop %v1220
  %v1222 = vmul.f32 %v1217, %v1221
  %s1223 = scalar_lea.vmem %s2, 56
  %1224 = vst [vmem:[%s1223] sm:$0xff] %v1222
  %1225 = vst [vmem:[#allocation2] sm:$0xff] %v1222
  %1226 = vst [vmem:[#allocation3] sm:$0xff] %v1220
  // Predicated region
  $region14: #{captioning_forward.6} parent=0 // pred_check
    _
  $region15: #{captioning_forward.6} parent=0 // pred_check_branch
    %1228 = sbr.rel (0) target = $region17
  $region16: #{captioning_forward.6} parent=0 // pred_region
    _
  $region17: #{captioning_forward.6} parent=0 // pred_fallthru
    _
  // Predicated region
  $region18: #{captioning_forward.6} parent=0 // pred_check
    _
  $region19: #{captioning_forward.6} parent=0 // pred_check_branch
    %1230 = sbr.rel (0) target = $region21
  $region20: #{captioning_forward.6} parent=0 // pred_region
    _
  $region21: #{captioning_forward.6} parent=0 // pred_fallthru
    _

// kernel: captioning_forward.7
$region0: #{captioning_forward.7}
  #allocation0 [shape = 'u32[]', space=smem, size = 0x4, offset = 0x4, fixed_abs, tag = 'smem constant byte address 0x4 - core index']
  #allocation1 [shape = 'u32[72,128]{1,0:T(1,128)}', space=vmem, size = 0x9000, scoped, tag = 'internal scratch']
  #allocation2 [shape = 'f32[16,256]{1,0:T(8,128)}', space=vmem, size = 0x4000, scoped, tag = 'scratch operand']
  %s0 = inlined_call_operand.vmem [shape: bf16[16,128], index: 0, kind: input, shape index: {}]
  %s1 = inlined_call_operand.vmem [shape: bf16[128,256], index: 1, kind: input, shape index: {}]
  %s2 = inlined_call_operand.vmem [shape: f32[1,256], index: 2, kind: input, shape index: {}]
  %s3 = inlined_call_operand.hbm [shape: f32[16,256], index: 3, kind: output, shape index: {}]
  %s4 = sld [smem:[#allocation0]]
  $region30: #{captioning_forward.7} parent=0
    _
  %s6 = ssub.s32 1, %s4
  %s7 = scalar_select 0, %s6, %s4
  $region1: #{captioning_forward.7} parent=0
    #allocation3 [shape = 'u8[16384]{0}', space=vmem, size = 0x4000, scoped, tag = 'output window, operand 0, single buffered']
    #allocation4 [shape = 's32[1]{0}', space=sflag, size = 0x4, scoped, tag = 'scoped memory for captioning_forward.7']
    %8 = vsyncpa [#allocation4], 0
    // Predicated region
    $region2: #{captioning_forward.7} parent=1 // pred_check
      _
    $region3: #{captioning_forward.7} parent=1 // pred_check_branch
      %10 = sbr.rel (0) target = $region5
    $region4: #{captioning_forward.7} parent=1 // pred_region
      _
    $region5: #{captioning_forward.7} parent=1 // pred_fallthru
      _
    // Predicated region
    $region6: #{captioning_forward.7} parent=1 // pred_check
      _
    $region7: #{captioning_forward.7} parent=1 // pred_check_branch
      %12 = sbr.rel (0) target = $region9
    $region8: #{captioning_forward.7} parent=1 // pred_region
      _
    $region9: #{captioning_forward.7} parent=1 // pred_fallthru
      _
    // Predicated region
    $region10: #{captioning_forward.7} parent=1 // pred_check
      _
    $region11: #{captioning_forward.7} parent=1 // pred_check_branch
      %14 = sbr.rel (0) target = $region13
    $region12: #{captioning_forward.7} parent=1 // pred_region
      _
    $region13: #{captioning_forward.7} parent=1 // pred_fallthru
      _
    %p15 = scmp.eq.s32.totalorder 0, 0
    // Predicated region
    $region14: #{captioning_forward.7} parent=1 // pred_check
      %p16 = pneg %p15
    $region15: #{captioning_forward.7} parent=1 // pred_check_branch
      %18 = sbr.rel (%p16) target = $region17
    $region16: #{captioning_forward.7} parent=1 // pred_region
      %19 = vst [vmem:[#allocation2] sm:$0xff] 0.0
      %20 = vst [vmem:[#allocation2 + $0x8] sm:$0xff] 0.0
      %21 = vst [vmem:[#allocation2 + $0x10] sm:$0xff] 0.0
      %22 = vst [vmem:[#allocation2 + $0x18] sm:$0xff] 0.0
    $region17: #{captioning_forward.7} parent=1 // pred_fallthru
      _
    %v23 = vld [vmem:[#allocation2] sm:$0xff]
    %v24 = vld [vmem:[#allocation2 + $0x8] sm:$0xff]
    %v25 = vld [vmem:[#allocation2 + $0x10] sm:$0xff]
    %v26 = vld [vmem:[#allocation2 + $0x18] sm:$0xff]
    %v27 = vld [vmem:[%s0] sm:$0xf]
    %v28 = vld [vmem:[%s0 + $0x4] sm:$0xf]
    %v29 = vld [vmem:[%s1] sm:$0xff]
    %v30 = vld [vmem:[%s1 + $0x8] sm:$0xff]
    %v31 = vld [vmem:[%s1 + $0x10] sm:$0xff]
    %v32 = vld [vmem:[%s1 + $0x18] sm:$0xff]
    %v33 = vld [vmem:[%s1 + $0x20] sm:$0xff]
    %v34 = vld [vmem:[%s1 + $0x28] sm:$0xff]
    %v35 = vld [vmem:[%s1 + $0x30] sm:$0xff]
    %v36 = vld [vmem:[%s1 + $0x38] sm:$0xff]
    %v37 = vld [vmem:[%s1 + $0x40] sm:$0xff]
    %v38 = vld [vmem:[%s1 + $0x48] sm:$0xff]
    %v39 = vld [vmem:[%s1 + $0x50] sm:$0xff]
    %v40 = vld [vmem:[%s1 + $0x58] sm:$0xff]
    %v41 = vld [vmem:[%s1 + $0x60] sm:$0xff]
    %v42 = vld [vmem:[%s1 + $0x68] sm:$0xff]
    %v43 = vld [vmem:[%s1 + $0x70] sm:$0xff]
    %v44 = vld [vmem:[%s1 + $0x78] sm:$0xff]
    %v47 = vunpack.c.l.b16 %v27
    %v48 = vunpack.c.l.b16 %v28
    %v49 = vpack.c.b16 %v48, %v47
    %v67 = vunpack.c.l.b16 %v29
    %v68 = vunpack.c.h.b16 %v29
    %v69 = vunpack.c.l.b16 %v30
    %v70 = vunpack.c.h.b16 %v30
    %v71 = vunpack.c.l.b16 %v31
    %v72 = vunpack.c.h.b16 %v31
    %v73 = vunpack.c.l.b16 %v32
    %v74 = vunpack.c.h.b16 %v32
    %v75 = vunpack.c.l.b16 %v33
    %v76 = vunpack.c.h.b16 %v33
    %v77 = vunpack.c.l.b16 %v34
    %v78 = vunpack.c.h.b16 %v34
    %v79 = vunpack.c.l.b16 %v35
    %v80 = vunpack.c.h.b16 %v35
    %v81 = vunpack.c.l.b16 %v36
    %v82 = vunpack.c.h.b16 %v36
    %v83 = vunpack.c.l.b16 %v37
    %v84 = vunpack.c.h.b16 %v37
    %v85 = vunpack.c.l.b16 %v38
    %v86 = vunpack.c.h.b16 %v38
    %v87 = vunpack.c.l.b16 %v39
    %v88 = vunpack.c.h.b16 %v39
    %v89 = vunpack.c.l.b16 %v40
    %v90 = vunpack.c.h.b16 %v40
    %v91 = vunpack.c.l.b16 %v41
    %v92 = vunpack.c.h.b16 %v41
    %v93 = vunpack.c.l.b16 %v42
    %v94 = vunpack.c.h.b16 %v42
    %v95 = vunpack.c.l.b16 %v43
    %v96 = vunpack.c.h.b16 %v43
    %v97 = vunpack.c.l.b16 %v44
    %v98 = vunpack.c.h.b16 %v44
    %v99 = vpack.c.b16 %v69, %v67
    %v100 = vpack.c.b16 %v70, %v68
    %v101 = vpack.c.b16 %v73, %v71
    %v102 = vpack.c.b16 %v74, %v72
    %v103 = vpack.c.b16 %v77, %v75
    %v104 = vpack.c.b16 %v78, %v76
    %v105 = vpack.c.b16 %v81, %v79
    %v106 = vpack.c.b16 %v82, %v80
    %v107 = vpack.c.b16 %v85, %v83
    %v108 = vpack.c.b16 %v86, %v84
    %v109 = vpack.c.b16 %v89, %v87
    %v110 = vpack.c.b16 %v90, %v88
    %v111 = vpack.c.b16 %v93, %v91
    %v112 = vpack.c.b16 %v94, %v92
    %v113 = vpack.c.b16 %v97, %v95
    %v114 = vpack.c.b16 %v98, %v96
    %131 = vmatpush.bf16.msra.mxu0 %v113
    %132 = vmatpush.bf16.msra.mxu0 %v111
    %133 = vmatpush.bf16.msra.mxu0 %v109
    %134 = vmatpush.bf16.msra.mxu0 %v107
    %135 = vmatpush.bf16.msra.mxu0 %v105
    %136 = vmatpush.bf16.msra.mxu0 %v103
    %137 = vmatpush.bf16.msra.mxu0 %v101
    %138 = vmatpush.bf16.msra.mxu0 %v99
    %139 = vmatmul.bf16.gmra.mxu0 %v49
    %v140 = vpop.f32.mrf.mxu0
    %v141 = vadd.f32 0.0, %v140
    %v142 = vpop.f32.mrf.mxu0
    %v143 = vadd.f32 0.0, %v142
    %144 = vdwg.mxu0
    %145 = vmatpush.bf16.msra.mxu0 %v114
    %146 = vmatpush.bf16.msra.mxu0 %v112
    %147 = vmatpush.bf16.msra.mxu0 %v110
    %148 = vmatpush.bf16.msra.mxu0 %v108
    %149 = vmatpush.bf16.msra.mxu0 %v106
    %150 = vmatpush.bf16.msra.mxu0 %v104
    %151 = vmatpush.bf16.msra.mxu0 %v102
    %152 = vmatpush.bf16.msra.mxu0 %v100
    %153 = vmatmul.bf16.gmra.mxu0 %v49
    %v154 = vpop.f32.mrf.mxu0
    %v155 = vadd.f32 0.0, %v154
    %v156 = vpop.f32.mrf.mxu0
    %v157 = vadd.f32 0.0, %v156
    %158 = vdwg.mxu0
    %v159 = vadd.f32 %v23, %v141
    %v160 = vadd.f32 %v24, %v155
    %v161 = vadd.f32 %v25, %v143
    %v162 = vadd.f32 %v26, %v157
    %163 = vst [vmem:[#allocation2] sm:$0xff] %v159
    %164 = vst [vmem:[#allocation2 + $0x8] sm:$0xff] %v160
    %165 = vst [vmem:[#allocation2 + $0x10] sm:$0xff] %v161
    %166 = vst [vmem:[#allocation2 + $0x18] sm:$0xff] %v162
    // Predicated region
    $region18: #{captioning_forward.7} parent=1 // pred_check
      %p167 = pneg %p15
    $region19: #{captioning_forward.7} parent=1 // pred_check_branch
      %169 = sbr.rel (%p167) target = $region21
    $region20: #{captioning_forward.7} parent=1 // pred_region
      %v170 = vld [vmem:[#allocation2] sm:$0xff]
      %v171 = vld [vmem:[#allocation2 + $0x8] sm:$0xff]
      %v172 = vld [vmem:[#allocation2 + $0x10] sm:$0xff]
      %v173 = vld [vmem:[#allocation2 + $0x18] sm:$0xff]
      %v174 = vld [vmem:[%s2] sm:$0x3]
      %v176 = vperm.slane %v174, 0
      %v177 = vperm.slane %v174, 1
      %v180 = vadd.f32 %v170, %v176
      %v181 = vadd.f32 %v171, %v177
      %v182 = vadd.f32 %v172, %v176
      %v183 = vadd.f32 %v173, %v177
      %184 = vst [vmem:[#allocation3] sm:$0xff] %v180
      %185 = vst [vmem:[#allocation3 + $0x8] sm:$0xff] %v181
      %186 = vst [vmem:[#allocation3 + $0x10] sm:$0xff] %v182
      %187 = vst [vmem:[#allocation3 + $0x18] sm:$0xff] %v183
    $region21: #{captioning_forward.7} parent=1 // pred_fallthru
      _
    // Predicated region
    $region22: #{captioning_forward.7} parent=1 // pred_check
      _
    $region23: #{captioning_forward.7} parent=1 // pred_check_branch
      %189 = sbr.rel (0) target = $region25
    $region24: #{captioning_forward.7} parent=1 // pred_region
      %191 = vsyncadd [#allocation4], 0
      %s192 = sshll.u32 [#allocation3], 4
      %s193 = int_to_ptr.vmem [resolvable:$true] %s192
      %s194 = sshll.u32 %s3, 4
      %s195 = int_to_ptr.hbm [resolvable:$true] %s194
      %200 = dma.vmem_to_hbm [thread:$0]  %s193, 512, %s195, [#allocation4], 256, 256, 16
    $region25: #{captioning_forward.7} parent=1 // pred_fallthru
      _
    // Predicated region
    $region26: #{captioning_forward.7} parent=1 // pred_check
      _
    $region27: #{captioning_forward.7} parent=1 // pred_check_branch
      %202 = sbr.rel (0) target = $region29
    $region28: #{captioning_forward.7} parent=1 // pred_region
      %204 = dma.done [#allocation4], 512
    $region29: #{captioning_forward.7} parent=1 // pred_fallthru
      _
    %205 = vsyncpa [#allocation4], 1

</llo_original>
